<compile_context>
chip_gen: v5e
topology: v5e:2x2
jax: 0.10.0
libtpu: 0.0.40
codegen_flags: <defaults>
</compile_context>

<pallas_src>
import functools

import numpy as np
import jax
import jax.numpy as jnp
from jax.experimental import pallas as pl
from jax.experimental.pallas import tpu as pltpu


# ----------------------------------------------------------------------------
# Fused Pallas kernel (one batch element per grid step)
# ----------------------------------------------------------------------------
def _fused_kernel(x_ref, vmask_ref, c1w_ref, c1b_ref, dw_ref, bgw_ref, bgb_ref,
                  c2w_ref, c2b_ref, o_ref, acta_ref, actb_ref, cat_ref,
                  *, H, W, k):
    R = W + 2                      # padded row length
    S = (H + 2) * R                # flattened padded image length
    L = H * R - 2                  # interior slab length (first..last valid pixel)
    Hb = H // k
    C1P = acta_ref.shape[0]        # sublane-padded dim//4 channel count (8)
    Ccat = cat_ref.shape[0]
    base = R + 1                   # flat index of pixel (0, 0)

    # Zero only the never-computed pad ring of each scratch, every step (cheap,
    # and safe when the batch axis is split across TensorCores).  Interiors are
    # fully overwritten below.
    zr = jnp.zeros((C1P, R + 1), jnp.float32)
    for r in (acta_ref, actb_ref):
        r[:, :R + 1] = zr
        r[:, base + L:] = zr
    zc = jnp.zeros((Ccat, R), jnp.float32)
    cat_ref[:, :R] = zc
    cat_ref[:, S - R:] = zc

    vmask = vmask_ref[...]         # (1, L): 1 at real pixels, 0 at row-pad junk

    def conv3x3(src, w, bias):
        """3x3 / stride-1 / pad-1 conv as ONE im2col matmul in flat layout.
        src: (Cin, S) ref/array with zero pad ring.  w: (Cout, 9*Cin) bf16.
        Returns (Cout, L) f32 over the interior slab, pad-column junk zeroed."""
        taps = [src[:, p * R + q: p * R + q + L]
                for p in range(3) for q in range(3)]
        patches = jnp.concatenate(taps, axis=0).astype(jnp.bfloat16)
        out = jnp.dot(w, patches, preferred_element_type=jnp.float32)
        if bias is not None:
            out = out + bias
        return out * vmask

    def dconv_relu(src_ref, w, dst_ref):
        """DeformConv(3x3, zero offsets) + ReLU == mask * conv3x3(src); the
        modulation mask is tap/channel independent so it multiplies once."""
        conv = conv3x3(src_ref, w, None)                       # (C1P, L) f32
        xs = src_ref[:, base:base + L]
        mod = jax.nn.sigmoid(0.5 * jnp.sum(xs, axis=0, keepdims=True))
        dst_ref[:, base:base + L] = jnp.maximum(conv * mod, 0.0)

    def bgu(src_ref, idx):
        """BlockGatingUnit: one matmul against a block-row-diagonal weight; the
        gated result (shortcut * y, f32) is written straight into the conv2
        concat scratch with Hb wide, 8-row-aligned stores."""
        slabs = [src_ref[:, (1 + by * k) * R:(1 + by * k + k) * R]
                 for by in range(Hb)]
        a = jnp.concatenate(slabs, axis=0)                     # (Hb*C1P, k*R) f32
        y = jnp.dot(a.astype(jnp.bfloat16), bgw_ref[idx],
                    preferred_element_type=jnp.float32) + bgb_ref[idx]
        g = a * y                                              # gating in f32
        for by in range(Hb):
            cat_ref[idx * C1P:(idx + 1) * C1P,
                    (1 + by * k) * R:(1 + by * k + k) * R] = (
                g[by * C1P:(by + 1) * C1P, :])

    xin = x_ref[0]                                             # (dim, S)
    acta_ref[:, base:base + L] = conv3x3(xin, c1w_ref[...], c1b_ref[...])  # x0
    bgu(acta_ref, 0)
    dconv_relu(acta_ref, dw_ref[0], actb_ref)                  # x1
    bgu(actb_ref, 1)
    dconv_relu(actb_ref, dw_ref[1], acta_ref)                  # x2
    bgu(acta_ref, 2)
    dconv_relu(acta_ref, dw_ref[2], actb_ref)                  # x3
    bgu(actb_ref, 3)
    out = conv3x3(cat_ref, c2w_ref[...], c2b_ref[...])         # (dim, L)
    o_ref[0] = out.astype(o_ref.dtype)


# ----------------------------------------------------------------------------
# Wrapper
# ----------------------------------------------------------------------------
def deform_sppf_block_gating_unit(packed, x, block_size):
    """x: (N, dim, H, W) NCHW float32 -> (N, dim, H, W)."""
    N, dim, H, W = x.shape
    k = block_size
    assert H % k == 0 and W % k == 0, "H and W must be multiples of block_size"
    assert dim % 4 == 0
    R = W + 2
    S = (H + 2) * R
    L = H * R - 2
    C1P = packed["c1w"].shape[0]

    # Lane-dense padded-flat input (free layout plumbing wrapper-side).
    xp = jnp.pad(x, ((0, 0), (0, 0), (1, 1), (1, 1))).reshape(N, dim, S)

    kernel = pl.pallas_call(
        functools.partial(_fused_kernel, H=H, W=W, k=k),
        out_shape=jax.ShapeDtypeStruct((N, dim, L), jnp.float32),
        grid=(N,),
        in_specs=[
            pl.BlockSpec((1, dim, S), lambda i: (i, 0, 0)),        # x (padded, flat)
            pl.BlockSpec((1, L), lambda i: (0, 0)),                # valid-pixel mask
            pl.BlockSpec((C1P, 9 * dim), lambda i: (0, 0)),        # conv1 w
            pl.BlockSpec((C1P, 1), lambda i: (0, 0)),              # conv1 b
            pl.BlockSpec((3, C1P, 9 * C1P), lambda i: (0, 0, 0)),  # dconv w (x3)
            pl.BlockSpec((4, k * R, k * R), lambda i: (0, 0, 0)),  # BGU block-diag W
            pl.BlockSpec((4, 1, k * R), lambda i: (0, 0, 0)),      # BGU bias rows
            pl.BlockSpec((dim, 9 * 4 * C1P), lambda i: (0, 0)),    # conv2 w
            pl.BlockSpec((dim, 1), lambda i: (0, 0)),              # conv2 b
        ],
        out_specs=pl.BlockSpec((1, dim, L), lambda i: (i, 0, 0)),
        scratch_shapes=[
            pltpu.VMEM((C1P, S), jnp.float32),        # activation ping
            pltpu.VMEM((C1P, S), jnp.float32),        # activation pong
            pltpu.VMEM((4 * C1P, S), jnp.float32),    # concat(out1..4) -> conv2
        ],
        compiler_params=pltpu.CompilerParams(
            dimension_semantics=("parallel",),        # batch split across cores
            vmem_limit_bytes=32 * 1024 * 1024),
    )
    out = kernel(xp, packed["vmask"], packed["c1w"], packed["c1b"], packed["dw"],
                 packed["bgw"], packed["bgb"], packed["c2w"], packed["c2b"])
    # Un-flatten: slab index = i*(W+2) + j  ->  pixel (i, j).
    out = jnp.pad(out, ((0, 0), (0, 0), (0, 2))).reshape(N, dim, H, R)
    return out[..., :W]


# ----------------------------------------------------------------------------
# Parameters (PyTorch-native layouts) and kernel repacking
# ----------------------------------------------------------------------------
def init_params(key, dim, block_size):
    """Random parameters in PyTorch-native layouts (see pack_params mapping)."""
    dim4 = dim // 4
    n = block_size * block_size
    keys = jax.random.split(key, 16)

    def norm(kk, shape, scale=0.1):
        return scale * jax.random.normal(kk, shape, jnp.float32)

    params = {
        "conv1_w": norm(keys[0], (dim4, dim, 3, 3)),   # nn.Conv2d(dim, dim//4, 3,1,1)
        "conv1_b": norm(keys[1], (dim4,)),
        "conv2_w": norm(keys[2], (dim, dim, 3, 3)),    # nn.Conv2d(dim, dim, 3,1,1)
        "conv2_b": norm(keys[3], (dim,)),
    }
    for i in range(4):
        # BlockGatingUnit.conv = nn.Conv2d(1, k*k, k, stride=k): weight (k*k,1,k,k)
        params[f"bgu{i}_w"] = norm(keys[4 + i], (n, 1, block_size, block_size))
        params[f"bgu{i}_b"] = norm(keys[8 + i], (n,))
    for i in range(1, 4):
        # DeformConv.conv weight; its bias is unused (deform_conv2d has no bias).
        params[f"dconv{i}_w"] = norm(keys[11 + i], (dim4, dim4, 3, 3))
    return params


def pack_params(params, dim, block_size, H, W):
    """Repack PyTorch-layout weights into the fused kernel's matmul layouts."""
    dim4 = dim // 4
    C1P = max(8, ((dim4 + 7) // 8) * 8)      # sublane-pad dim//4 channels
    k = block_size
    n = k * k
    R = W + 2
    L = H * R - 2
    Wb = W // k
    bf16 = jnp.bfloat16

    def conv_w2d(w, cin_pad, cout_pad):
        # (Cout, Cin, 3, 3) -> (cout_pad, 9*cin_pad); col = (p*3+q)*cin_pad + ci,
        # matching the kernel's tap-major / channel-minor im2col patch order.
        cout, cin = w.shape[0], w.shape[1]
        wt = jnp.transpose(w, (0, 2, 3, 1))                       # (co, p, q, ci)
        wt = jnp.pad(wt, ((0, cout_pad - cout), (0, 0), (0, 0), (0, cin_pad - cin)))
        return wt.reshape(cout_pad, 9 * cin_pad)

    # conv2 input channels = concat(out1..out4); each out_i occupies the
    # aligned 8-row group [i*C1P, i*C1P + dim4) of the concat scratch.
    w2 = jnp.transpose(params["conv2_w"], (0, 2, 3, 1))           # (dim,3,3,dim)
    w2 = w2.reshape(dim, 3, 3, 4, dim4)
    w2 = jnp.pad(w2, ((0, 0), (0, 0), (0, 0), (0, 0), (0, C1P - dim4)))
    c2w = w2.reshape(dim, 9 * 4 * C1P)

    # BGU block-row-diagonal matrices:
    #   M2[p'*R+1+bx*k+q', p*R+1+bx*k+q] = Wmat[p*k+q, p'*k+q'],
    #   Wmat[m, m'] = conv.weight[m, 0, m'//k, m'%k]   (PixelShuffle ordering).
    base_idx = (np.arange(k)[:, None] * R + 1 + np.arange(k)[None, :]).reshape(-1)
    bgw, bgb = [], []
    for i in range(4):
        wmat = np.asarray(params[f"bgu{i}_w"], np.float32).reshape(n, n)
        bias = np.asarray(params[f"bgu{i}_b"], np.float32)
        m2 = np.zeros((k * R, k * R), np.float32)
        bvec = np.zeros((1, k * R), np.float32)
        for bx in range(Wb):
            idxs = base_idx + bx * k
            m2[np.ix_(idxs, idxs)] = wmat.T
            bvec[0, idxs] = bias
        bgw.append(m2)
        bgb.append(bvec)

    # Valid-pixel mask over the interior slab (zeroes inter-row pad junk).
    rel = np.arange(L)
    col = (rel + R + 1) % R
    vmask = ((col >= 1) & (col <= W)).astype(np.float32)[None, :]

    return {
        "c1w": conv_w2d(params["conv1_w"], dim, C1P).astype(bf16),
        "c1b": jnp.pad(params["conv1_b"], (0, C1P - dim4)).reshape(C1P, 1),
        "dw": jnp.stack([conv_w2d(params[f"dconv{i}_w"], C1P, C1P)
                         for i in (1, 2, 3)]).astype(bf16),
        "bgw": jnp.asarray(np.stack(bgw)).astype(bf16),
        "bgb": jnp.asarray(np.stack(bgb)),
        "c2w": c2w.astype(bf16),
        "c2b": params["conv2_b"].reshape(dim, 1),
        "vmask": jnp.asarray(vmask),
    }


if __name__ == "__main__":
    dim, block_size = 16, 8
    N, H, W = 2, 16, 16

    key = jax.random.PRNGKey(0)
    kx, kp = jax.random.split(key)

    # PyTorch-style NCHW input (the kernel is channels-first internally).
    x = jax.random.normal(kx, (N, dim, H, W), jnp.float32)

    params = init_params(kp, dim, block_size)
    packed = pack_params(params, dim, block_size, H, W)

    fwd = jax.jit(functools.partial(deform_sppf_block_gating_unit,
                                    block_size=block_size))
    out = fwd(packed, x)
    out = jax.block_until_ready(out)

    assert out.shape == (N, dim, H, W), out.shape
    assert bool(jnp.all(jnp.isfinite(out)))
    print("KERNEL_OK")
</pallas_src>

<mosaic_0001>
module attributes {stable_mosaic.version = 11 : i64} {
  func.func @_fused_kernel(%arg0: i32, %arg1: memref<1x16x324xf32, #tpu.memory_space<vmem>>, %arg2: memref<1x286xf32, #tpu.memory_space<vmem>>, %arg3: memref<8x144xbf16, #tpu.memory_space<vmem>>, %arg4: memref<8x1xf32, #tpu.memory_space<vmem>>, %arg5: memref<3x8x72xbf16, #tpu.memory_space<vmem>>, %arg6: memref<4x144x144xbf16, #tpu.memory_space<vmem>>, %arg7: memref<4x1x144xf32, #tpu.memory_space<vmem>>, %arg8: memref<16x288xbf16, #tpu.memory_space<vmem>>, %arg9: memref<16x1xf32, #tpu.memory_space<vmem>>, %arg10: memref<1x16x286xf32, #tpu.memory_space<vmem>>, %arg11: memref<8x324xf32, #tpu.memory_space<vmem>>, %arg12: memref<8x324xf32, #tpu.memory_space<vmem>>, %arg13: memref<32x324xf32, #tpu.memory_space<vmem>>) attributes {dimension_semantics = [#tpu.dimension_semantics<parallel>], iteration_bounds = array<i64: 2>, scalar_prefetch = 0 : i64, scratch_operands = 3 : i64, tpu.core_type = #tpu.core_type<tc>, window_params = [{transform_indices = @transform_0, window_bounds = array<i64: 1, 16, 324>}, {pipeline_mode = #tpu.pipeline_mode<synchronous>, transform_indices = @transform_1, window_bounds = array<i64: 1, 286>}, {pipeline_mode = #tpu.pipeline_mode<synchronous>, transform_indices = @transform_2, window_bounds = array<i64: 8, 144>}, {pipeline_mode = #tpu.pipeline_mode<synchronous>, transform_indices = @transform_3, window_bounds = array<i64: 8, 1>}, {pipeline_mode = #tpu.pipeline_mode<synchronous>, transform_indices = @transform_4, window_bounds = array<i64: 3, 8, 72>}, {pipeline_mode = #tpu.pipeline_mode<synchronous>, transform_indices = @transform_5, window_bounds = array<i64: 4, 144, 144>}, {pipeline_mode = #tpu.pipeline_mode<synchronous>, transform_indices = @transform_6, window_bounds = array<i64: 4, 1, 144>}, {pipeline_mode = #tpu.pipeline_mode<synchronous>, transform_indices = @transform_7, window_bounds = array<i64: 16, 288>}, {pipeline_mode = #tpu.pipeline_mode<synchronous>, transform_indices = @transform_8, window_bounds = array<i64: 16, 1>}, {transform_indices = @transform_9, window_bounds = array<i64: 1, 16, 286>}]} {
    %cst = arith.constant 0.000000e+00 : f32
    %0 = vector.broadcast %cst : f32 to vector<8x19xf32>
    %c0 = arith.constant 0 : index
    %c0_0 = arith.constant 0 : index
    %1 = vector.load %arg11[%c0, %c0_0] : memref<8x324xf32, #tpu.memory_space<vmem>>, vector<8x19xf32>
    tpu.vector_store %arg11[%c0, %c0_0], %0 {strides = array<i32>} : memref<8x324xf32, #tpu.memory_space<vmem>>, vector<8x19xf32>,
    %c0_1 = arith.constant 0 : index
    %c305 = arith.constant 305 : index
    %2 = vector.load %arg11[%c0_1, %c305] : memref<8x324xf32, #tpu.memory_space<vmem>>, vector<8x19xf32>
    tpu.vector_store %arg11[%c0_1, %c305], %0 {strides = array<i32>} : memref<8x324xf32, #tpu.memory_space<vmem>>, vector<8x19xf32>,
    %c0_2 = arith.constant 0 : index
    %c0_3 = arith.constant 0 : index
    %3 = vector.load %arg12[%c0_2, %c0_3] : memref<8x324xf32, #tpu.memory_space<vmem>>, vector<8x19xf32>
    tpu.vector_store %arg12[%c0_2, %c0_3], %0 {strides = array<i32>} : memref<8x324xf32, #tpu.memory_space<vmem>>, vector<8x19xf32>,
    %c0_4 = arith.constant 0 : index
    %c305_5 = arith.constant 305 : index
    %4 = vector.load %arg12[%c0_4, %c305_5] : memref<8x324xf32, #tpu.memory_space<vmem>>, vector<8x19xf32>
    tpu.vector_store %arg12[%c0_4, %c305_5], %0 {strides = array<i32>} : memref<8x324xf32, #tpu.memory_space<vmem>>, vector<8x19xf32>,
    %cst_6 = arith.constant 0.000000e+00 : f32
    %5 = vector.broadcast %cst_6 : f32 to vector<32x18xf32>
    %c0_7 = arith.constant 0 : index
    %c0_8 = arith.constant 0 : index
    %6 = vector.load %arg13[%c0_7, %c0_8] : memref<32x324xf32, #tpu.memory_space<vmem>>, vector<32x18xf32>
    tpu.vector_store %arg13[%c0_7, %c0_8], %5 {strides = array<i32>} : memref<32x324xf32, #tpu.memory_space<vmem>>, vector<32x18xf32>,
    %c0_9 = arith.constant 0 : index
    %c306 = arith.constant 306 : index
    %7 = vector.load %arg13[%c0_9, %c306] : memref<32x324xf32, #tpu.memory_space<vmem>>, vector<32x18xf32>
    tpu.vector_store %arg13[%c0_9, %c306], %5 {strides = array<i32>} : memref<32x324xf32, #tpu.memory_space<vmem>>, vector<32x18xf32>,
    %c0_10 = arith.constant 0 : index
    %c0_11 = arith.constant 0 : index
    %8 = vector.load %arg2[%c0_10, %c0_11] : memref<1x286xf32, #tpu.memory_space<vmem>>, vector<1x286xf32>
    %c0_12 = arith.constant 0 : index
    %c0_13 = arith.constant 0 : index
    %c0_14 = arith.constant 0 : index
    %9 = vector.load %arg1[%c0_12, %c0_13, %c0_14] : memref<1x16x324xf32, #tpu.memory_space<vmem>>, vector<1x16x324xf32>
    %10 = vector.shape_cast %9 : vector<1x16x324xf32> to vector<16x324xf32>
    %c0_15 = arith.constant 0 : index
    %c0_16 = arith.constant 0 : index
    %11 = vector.load %arg3[%c0_15, %c0_16] : memref<8x144xbf16, #tpu.memory_space<vmem>>, vector<8x144xbf16>
    %c0_17 = arith.constant 0 : index
    %c0_18 = arith.constant 0 : index
    %12 = vector.load %arg4[%c0_17, %c0_18] : memref<8x1xf32, #tpu.memory_space<vmem>>, vector<8x1xf32>
    %13 = vector.extract_strided_slice %10 {offsets = [0, 0], sizes = [16, 286], strides = [1, 1]} : vector<16x324xf32> to vector<16x286xf32>
    %14 = vector.extract_strided_slice %10 {offsets = [0, 1], sizes = [16, 286], strides = [1, 1]} : vector<16x324xf32> to vector<16x286xf32>
    %15 = vector.extract_strided_slice %10 {offsets = [0, 2], sizes = [16, 286], strides = [1, 1]} : vector<16x324xf32> to vector<16x286xf32>
    %16 = vector.extract_strided_slice %10 {offsets = [0, 18], sizes = [16, 286], strides = [1, 1]} : vector<16x324xf32> to vector<16x286xf32>
    %17 = vector.extract_strided_slice %10 {offsets = [0, 19], sizes = [16, 286], strides = [1, 1]} : vector<16x324xf32> to vector<16x286xf32>
    %18 = vector.extract_strided_slice %10 {offsets = [0, 20], sizes = [16, 286], strides = [1, 1]} : vector<16x324xf32> to vector<16x286xf32>
    %19 = vector.extract_strided_slice %10 {offsets = [0, 36], sizes = [16, 286], strides = [1, 1]} : vector<16x324xf32> to vector<16x286xf32>
    %20 = vector.extract_strided_slice %10 {offsets = [0, 37], sizes = [16, 286], strides = [1, 1]} : vector<16x324xf32> to vector<16x286xf32>
    %21 = vector.extract_strided_slice %10 {offsets = [0, 38], sizes = [16, 286], strides = [1, 1]} : vector<16x324xf32> to vector<16x286xf32>
    %22 = tpu.concatenate %13, %14, %15, %16, %17, %18, %19, %20, %21 in 0 : vector<16x286xf32>, vector<16x286xf32>, vector<16x286xf32>, vector<16x286xf32>, vector<16x286xf32>, vector<16x286xf32>, vector<16x286xf32>, vector<16x286xf32>, vector<16x286xf32> -> vector<144x286xf32>
    %23 = arith.truncf %22 : vector<144x286xf32> to vector<144x286xbf16>
    %cst_19 = arith.constant dense<0.000000e+00> : vector<8x286xf32>
    %24 = tpu.matmul %11, %23, %cst_19 {dimension_numbers = #tpu.dot_dimension_numbers<[1], [0], [0], [1], [0, 0, 1, 1], [], []>} : vector<8x144xbf16>, vector<144x286xbf16>, vector<8x286xf32> -> vector<8x286xf32>
    %25 = vector.broadcast %12 : vector<8x1xf32> to vector<8x286xf32>
    %26 = arith.addf %24, %25 : vector<8x286xf32>
    %27 = vector.broadcast %8 : vector<1x286xf32> to vector<8x286xf32>
    %28 = arith.mulf %26, %27 : vector<8x286xf32>
    %c0_20 = arith.constant 0 : index
    %c19 = arith.constant 19 : index
    %29 = vector.load %arg11[%c0_20, %c19] : memref<8x324xf32, #tpu.memory_space<vmem>>, vector<8x286xf32>
    tpu.vector_store %arg11[%c0_20, %c19], %28 {strides = array<i32>} : memref<8x324xf32, #tpu.memory_space<vmem>>, vector<8x286xf32>,
    %c0_21 = arith.constant 0 : index
    %c18 = arith.constant 18 : index
    %30 = vector.load %arg11[%c0_21, %c18] : memref<8x324xf32, #tpu.memory_space<vmem>>, vector<8x144xf32>
    %c0_22 = arith.constant 0 : index
    %c162 = arith.constant 162 : index
    %31 = vector.load %arg11[%c0_22, %c162] : memref<8x324xf32, #tpu.memory_space<vmem>>, vector<8x144xf32>
    %32 = tpu.concatenate %30, %31 in 0 : vector<8x144xf32>, vector<8x144xf32> -> vector<16x144xf32>
    %33 = arith.truncf %32 : vector<16x144xf32> to vector<16x144xbf16>
    %c0_23 = arith.constant 0 : index
    %c0_24 = arith.constant 0 : index
    %c0_25 = arith.constant 0 : index
    %34 = vector.load %arg6[%c0_23, %c0_24, %c0_25] : memref<4x144x144xbf16, #tpu.memory_space<vmem>>, vector<1x144x144xbf16>
    %35 = vector.shape_cast %34 : vector<1x144x144xbf16> to vector<144x144xbf16>
    %cst_26 = arith.constant dense<0.000000e+00> : vector<16x144xf32>
    %36 = tpu.matmul %33, %35, %cst_26 {dimension_numbers = #tpu.dot_dimension_numbers<[1], [0], [0], [1], [0, 0, 1, 1], [], []>} : vector<16x144xbf16>, vector<144x144xbf16>, vector<16x144xf32> -> vector<16x144xf32>
    %c0_27 = arith.constant 0 : index
    %c0_28 = arith.constant 0 : index
    %c0_29 = arith.constant 0 : index
    %37 = vector.load %arg7[%c0_27, %c0_28, %c0_29] : memref<4x1x144xf32, #tpu.memory_space<vmem>>, vector<1x1x144xf32>
    %38 = vector.shape_cast %37 : vector<1x1x144xf32> to vector<1x144xf32>
    %39 = vector.broadcast %38 : vector<1x144xf32> to vector<16x144xf32>
    %40 = arith.addf %36, %39 : vector<16x144xf32>
    %41 = arith.mulf %32, %40 : vector<16x144xf32>
    %42 = vector.extract_strided_slice %41 {offsets = [0, 0], sizes = [8, 144], strides = [1, 1]} : vector<16x144xf32> to vector<8x144xf32>
    %c0_30 = arith.constant 0 : index
    %c18_31 = arith.constant 18 : index
    %43 = vector.load %arg13[%c0_30, %c18_31] : memref<32x324xf32, #tpu.memory_space<vmem>>, vector<8x144xf32>
    tpu.vector_store %arg13[%c0_30, %c18_31], %42 {strides = array<i32>} : memref<32x324xf32, #tpu.memory_space<vmem>>, vector<8x144xf32>,
    %44 = vector.extract_strided_slice %41 {offsets = [8, 0], sizes = [8, 144], strides = [1, 1]} : vector<16x144xf32> to vector<8x144xf32>
    %c0_32 = arith.constant 0 : index
    %c162_33 = arith.constant 162 : index
    %45 = vector.load %arg13[%c0_32, %c162_33] : memref<32x324xf32, #tpu.memory_space<vmem>>, vector<8x144xf32>
    tpu.vector_store %arg13[%c0_32, %c162_33], %44 {strides = array<i32>} : memref<32x324xf32, #tpu.memory_space<vmem>>, vector<8x144xf32>,
    %c0_34 = arith.constant 0 : index
    %c0_35 = arith.constant 0 : index
    %c0_36 = arith.constant 0 : index
    %46 = vector.load %arg5[%c0_34, %c0_35, %c0_36] : memref<3x8x72xbf16, #tpu.memory_space<vmem>>, vector<1x8x72xbf16>
    %47 = vector.shape_cast %46 : vector<1x8x72xbf16> to vector<8x72xbf16>
    %c0_37 = arith.constant 0 : index
    %c0_38 = arith.constant 0 : index
    %48 = vector.load %arg11[%c0_37, %c0_38] : memref<8x324xf32, #tpu.memory_space<vmem>>, vector<8x286xf32>
    %c0_39 = arith.constant 0 : index
    %c1 = arith.constant 1 : index
    %49 = vector.load %arg11[%c0_39, %c1] : memref<8x324xf32, #tpu.memory_space<vmem>>, vector<8x286xf32>
    %c0_40 = arith.constant 0 : index
    %c2 = arith.constant 2 : index
    %50 = vector.load %arg11[%c0_40, %c2] : memref<8x324xf32, #tpu.memory_space<vmem>>, vector<8x286xf32>
    %c0_41 = arith.constant 0 : index
    %c18_42 = arith.constant 18 : index
    %51 = vector.load %arg11[%c0_41, %c18_42] : memref<8x324xf32, #tpu.memory_space<vmem>>, vector<8x286xf32>
    %c0_43 = arith.constant 0 : index
    %c19_44 = arith.constant 19 : index
    %52 = vector.load %arg11[%c0_43, %c19_44] : memref<8x324xf32, #tpu.memory_space<vmem>>, vector<8x286xf32>
    %c0_45 = arith.constant 0 : index
    %c20 = arith.constant 20 : index
    %53 = vector.load %arg11[%c0_45, %c20] : memref<8x324xf32, #tpu.memory_space<vmem>>, vector<8x286xf32>
    %c0_46 = arith.constant 0 : index
    %c36 = arith.constant 36 : index
    %54 = vector.load %arg11[%c0_46, %c36] : memref<8x324xf32, #tpu.memory_space<vmem>>, vector<8x286xf32>
    %c0_47 = arith.constant 0 : index
    %c37 = arith.constant 37 : index
    %55 = vector.load %arg11[%c0_47, %c37] : memref<8x324xf32, #tpu.memory_space<vmem>>, vector<8x286xf32>
    %c0_48 = arith.constant 0 : index
    %c38 = arith.constant 38 : index
    %56 = vector.load %arg11[%c0_48, %c38] : memref<8x324xf32, #tpu.memory_space<vmem>>, vector<8x286xf32>
    %57 = tpu.concatenate %48, %49, %50, %51, %52, %53, %54, %55, %56 in 0 : vector<8x286xf32>, vector<8x286xf32>, vector<8x286xf32>, vector<8x286xf32>, vector<8x286xf32>, vector<8x286xf32>, vector<8x286xf32>, vector<8x286xf32>, vector<8x286xf32> -> vector<72x286xf32>
    %58 = arith.truncf %57 : vector<72x286xf32> to vector<72x286xbf16>
    %cst_49 = arith.constant dense<0.000000e+00> : vector<8x286xf32>
    %59 = tpu.matmul %47, %58, %cst_49 {dimension_numbers = #tpu.dot_dimension_numbers<[1], [0], [0], [1], [0, 0, 1, 1], [], []>} : vector<8x72xbf16>, vector<72x286xbf16>, vector<8x286xf32> -> vector<8x286xf32>
    %60 = vector.broadcast %8 : vector<1x286xf32> to vector<8x286xf32>
    %61 = arith.mulf %59, %60 : vector<8x286xf32>
    %c0_50 = arith.constant 0 : index
    %c19_51 = arith.constant 19 : index
    %62 = vector.load %arg11[%c0_50, %c19_51] : memref<8x324xf32, #tpu.memory_space<vmem>>, vector<8x286xf32>
    %cst_52 = arith.constant dense<0.000000e+00> : vector<286xf32>
    %63 = vector.multi_reduction <add>, %62, %cst_52 [0] : vector<8x286xf32> to vector<286xf32>
    %64 = vector.shape_cast %63 : vector<286xf32> to vector<1x286xf32>
    %cst_53 = arith.constant 5.000000e-01 : f32
    %65 = vector.broadcast %cst_53 : f32 to vector<1x286xf32>
    %66 = arith.mulf %65, %64 : vector<1x286xf32>
    %67 = arith.negf %66 : vector<1x286xf32>
    %68 = math.exp %67 : vector<1x286xf32>
    %cst_54 = arith.constant 1.000000e+00 : f32
    %69 = vector.broadcast %cst_54 : f32 to vector<1x286xf32>
    %70 = arith.addf %69, %68 : vector<1x286xf32>
    %71 = arith.divf %69, %70 : vector<1x286xf32>
    %72 = vector.broadcast %71 : vector<1x286xf32> to vector<8x286xf32>
    %73 = arith.mulf %61, %72 : vector<8x286xf32>
    %cst_55 = arith.constant 0.000000e+00 : f32
    %74 = vector.broadcast %cst_55 : f32 to vector<8x286xf32>
    %75 = arith.maximumf %73, %74 : vector<8x286xf32>
    %c0_56 = arith.constant 0 : index
    %c19_57 = arith.constant 19 : index
    %76 = vector.load %arg12[%c0_56, %c19_57] : memref<8x324xf32, #tpu.memory_space<vmem>>, vector<8x286xf32>
    tpu.vector_store %arg12[%c0_56, %c19_57], %75 {strides = array<i32>} : memref<8x324xf32, #tpu.memory_space<vmem>>, vector<8x286xf32>,
    %c0_58 = arith.constant 0 : index
    %c18_59 = arith.constant 18 : index
    %77 = vector.load %arg12[%c0_58, %c18_59] : memref<8x324xf32, #tpu.memory_space<vmem>>, vector<8x144xf32>
    %c0_60 = arith.constant 0 : index
    %c162_61 = arith.constant 162 : index
    %78 = vector.load %arg12[%c0_60, %c162_61] : memref<8x324xf32, #tpu.memory_space<vmem>>, vector<8x144xf32>
    %79 = tpu.concatenate %77, %78 in 0 : vector<8x144xf32>, vector<8x144xf32> -> vector<16x144xf32>
    %80 = arith.truncf %79 : vector<16x144xf32> to vector<16x144xbf16>
    %c1_62 = arith.constant 1 : index
    %c0_63 = arith.constant 0 : index
    %c0_64 = arith.constant 0 : index
    %81 = vector.load %arg6[%c1_62, %c0_63, %c0_64] : memref<4x144x144xbf16, #tpu.memory_space<vmem>>, vector<1x144x144xbf16>
    %82 = vector.shape_cast %81 : vector<1x144x144xbf16> to vector<144x144xbf16>
    %cst_65 = arith.constant dense<0.000000e+00> : vector<16x144xf32>
    %83 = tpu.matmul %80, %82, %cst_65 {dimension_numbers = #tpu.dot_dimension_numbers<[1], [0], [0], [1], [0, 0, 1, 1], [], []>} : vector<16x144xbf16>, vector<144x144xbf16>, vector<16x144xf32> -> vector<16x144xf32>
    %c1_66 = arith.constant 1 : index
    %c0_67 = arith.constant 0 : index
    %c0_68 = arith.constant 0 : index
    %84 = vector.load %arg7[%c1_66, %c0_67, %c0_68] : memref<4x1x144xf32, #tpu.memory_space<vmem>>, vector<1x1x144xf32>
    %85 = vector.shape_cast %84 : vector<1x1x144xf32> to vector<1x144xf32>
    %86 = vector.broadcast %85 : vector<1x144xf32> to vector<16x144xf32>
    %87 = arith.addf %83, %86 : vector<16x144xf32>
    %88 = arith.mulf %79, %87 : vector<16x144xf32>
    %89 = vector.extract_strided_slice %88 {offsets = [0, 0], sizes = [8, 144], strides = [1, 1]} : vector<16x144xf32> to vector<8x144xf32>
    %c8 = arith.constant 8 : index
    %c18_69 = arith.constant 18 : index
    %90 = vector.load %arg13[%c8, %c18_69] : memref<32x324xf32, #tpu.memory_space<vmem>>, vector<8x144xf32>
    tpu.vector_store %arg13[%c8, %c18_69], %89 {strides = array<i32>} : memref<32x324xf32, #tpu.memory_space<vmem>>, vector<8x144xf32>,
    %91 = vector.extract_strided_slice %88 {offsets = [8, 0], sizes = [8, 144], strides = [1, 1]} : vector<16x144xf32> to vector<8x144xf32>
    %c8_70 = arith.constant 8 : index
    %c162_71 = arith.constant 162 : index
    %92 = vector.load %arg13[%c8_70, %c162_71] : memref<32x324xf32, #tpu.memory_space<vmem>>, vector<8x144xf32>
    tpu.vector_store %arg13[%c8_70, %c162_71], %91 {strides = array<i32>} : memref<32x324xf32, #tpu.memory_space<vmem>>, vector<8x144xf32>,
    %c1_72 = arith.constant 1 : index
    %c0_73 = arith.constant 0 : index
    %c0_74 = arith.constant 0 : index
    %93 = vector.load %arg5[%c1_72, %c0_73, %c0_74] : memref<3x8x72xbf16, #tpu.memory_space<vmem>>, vector<1x8x72xbf16>
    %94 = vector.shape_cast %93 : vector<1x8x72xbf16> to vector<8x72xbf16>
    %c0_75 = arith.constant 0 : index
    %c0_76 = arith.constant 0 : index
    %95 = vector.load %arg12[%c0_75, %c0_76] : memref<8x324xf32, #tpu.memory_space<vmem>>, vector<8x286xf32>
    %c0_77 = arith.constant 0 : index
    %c1_78 = arith.constant 1 : index
    %96 = vector.load %arg12[%c0_77, %c1_78] : memref<8x324xf32, #tpu.memory_space<vmem>>, vector<8x286xf32>
    %c0_79 = arith.constant 0 : index
    %c2_80 = arith.constant 2 : index
    %97 = vector.load %arg12[%c0_79, %c2_80] : memref<8x324xf32, #tpu.memory_space<vmem>>, vector<8x286xf32>
    %c0_81 = arith.constant 0 : index
    %c18_82 = arith.constant 18 : index
    %98 = vector.load %arg12[%c0_81, %c18_82] : memref<8x324xf32, #tpu.memory_space<vmem>>, vector<8x286xf32>
    %c0_83 = arith.constant 0 : index
    %c19_84 = arith.constant 19 : index
    %99 = vector.load %arg12[%c0_83, %c19_84] : memref<8x324xf32, #tpu.memory_space<vmem>>, vector<8x286xf32>
    %c0_85 = arith.constant 0 : index
    %c20_86 = arith.constant 20 : index
    %100 = vector.load %arg12[%c0_85, %c20_86] : memref<8x324xf32, #tpu.memory_space<vmem>>, vector<8x286xf32>
    %c0_87 = arith.constant 0 : index
    %c36_88 = arith.constant 36 : index
    %101 = vector.load %arg12[%c0_87, %c36_88] : memref<8x324xf32, #tpu.memory_space<vmem>>, vector<8x286xf32>
    %c0_89 = arith.constant 0 : index
    %c37_90 = arith.constant 37 : index
    %102 = vector.load %arg12[%c0_89, %c37_90] : memref<8x324xf32, #tpu.memory_space<vmem>>, vector<8x286xf32>
    %c0_91 = arith.constant 0 : index
    %c38_92 = arith.constant 38 : index
    %103 = vector.load %arg12[%c0_91, %c38_92] : memref<8x324xf32, #tpu.memory_space<vmem>>, vector<8x286xf32>
    %104 = tpu.concatenate %95, %96, %97, %98, %99, %100, %101, %102, %103 in 0 : vector<8x286xf32>, vector<8x286xf32>, vector<8x286xf32>, vector<8x286xf32>, vector<8x286xf32>, vector<8x286xf32>, vector<8x286xf32>, vector<8x286xf32>, vector<8x286xf32> -> vector<72x286xf32>
    %105 = arith.truncf %104 : vector<72x286xf32> to vector<72x286xbf16>
    %cst_93 = arith.constant dense<0.000000e+00> : vector<8x286xf32>
    %106 = tpu.matmul %94, %105, %cst_93 {dimension_numbers = #tpu.dot_dimension_numbers<[1], [0], [0], [1], [0, 0, 1, 1], [], []>} : vector<8x72xbf16>, vector<72x286xbf16>, vector<8x286xf32> -> vector<8x286xf32>
    %107 = vector.broadcast %8 : vector<1x286xf32> to vector<8x286xf32>
    %108 = arith.mulf %106, %107 : vector<8x286xf32>
    %c0_94 = arith.constant 0 : index
    %c19_95 = arith.constant 19 : index
    %109 = vector.load %arg12[%c0_94, %c19_95] : memref<8x324xf32, #tpu.memory_space<vmem>>, vector<8x286xf32>
    %cst_96 = arith.constant dense<0.000000e+00> : vector<286xf32>
    %110 = vector.multi_reduction <add>, %109, %cst_96 [0] : vector<8x286xf32> to vector<286xf32>
    %111 = vector.shape_cast %110 : vector<286xf32> to vector<1x286xf32>
    %cst_97 = arith.constant 5.000000e-01 : f32
    %112 = vector.broadcast %cst_97 : f32 to vector<1x286xf32>
    %113 = arith.mulf %112, %111 : vector<1x286xf32>
    %114 = arith.negf %113 : vector<1x286xf32>
    %115 = math.exp %114 : vector<1x286xf32>
    %cst_98 = arith.constant 1.000000e+00 : f32
    %116 = vector.broadcast %cst_98 : f32 to vector<1x286xf32>
    %117 = arith.addf %116, %115 : vector<1x286xf32>
    %118 = arith.divf %116, %117 : vector<1x286xf32>
    %119 = vector.broadcast %118 : vector<1x286xf32> to vector<8x286xf32>
    %120 = arith.mulf %108, %119 : vector<8x286xf32>
    %cst_99 = arith.constant 0.000000e+00 : f32
    %121 = vector.broadcast %cst_99 : f32 to vector<8x286xf32>
    %122 = arith.maximumf %120, %121 : vector<8x286xf32>
    %c0_100 = arith.constant 0 : index
    %c19_101 = arith.constant 19 : index
    %123 = vector.load %arg11[%c0_100, %c19_101] : memref<8x324xf32, #tpu.memory_space<vmem>>, vector<8x286xf32>
    tpu.vector_store %arg11[%c0_100, %c19_101], %122 {strides = array<i32>} : memref<8x324xf32, #tpu.memory_space<vmem>>, vector<8x286xf32>,
    %c0_102 = arith.constant 0 : index
    %c18_103 = arith.constant 18 : index
    %124 = vector.load %arg11[%c0_102, %c18_103] : memref<8x324xf32, #tpu.memory_space<vmem>>, vector<8x144xf32>
    %c0_104 = arith.constant 0 : index
    %c162_105 = arith.constant 162 : index
    %125 = vector.load %arg11[%c0_104, %c162_105] : memref<8x324xf32, #tpu.memory_space<vmem>>, vector<8x144xf32>
    %126 = tpu.concatenate %124, %125 in 0 : vector<8x144xf32>, vector<8x144xf32> -> vector<16x144xf32>
    %127 = arith.truncf %126 : vector<16x144xf32> to vector<16x144xbf16>
    %c2_106 = arith.constant 2 : index
    %c0_107 = arith.constant 0 : index
    %c0_108 = arith.constant 0 : index
    %128 = vector.load %arg6[%c2_106, %c0_107, %c0_108] : memref<4x144x144xbf16, #tpu.memory_space<vmem>>, vector<1x144x144xbf16>
    %129 = vector.shape_cast %128 : vector<1x144x144xbf16> to vector<144x144xbf16>
    %cst_109 = arith.constant dense<0.000000e+00> : vector<16x144xf32>
    %130 = tpu.matmul %127, %129, %cst_109 {dimension_numbers = #tpu.dot_dimension_numbers<[1], [0], [0], [1], [0, 0, 1, 1], [], []>} : vector<16x144xbf16>, vector<144x144xbf16>, vector<16x144xf32> -> vector<16x144xf32>
    %c2_110 = arith.constant 2 : index
    %c0_111 = arith.constant 0 : index
    %c0_112 = arith.constant 0 : index
    %131 = vector.load %arg7[%c2_110, %c0_111, %c0_112] : memref<4x1x144xf32, #tpu.memory_space<vmem>>, vector<1x1x144xf32>
    %132 = vector.shape_cast %131 : vector<1x1x144xf32> to vector<1x144xf32>
    %133 = vector.broadcast %132 : vector<1x144xf32> to vector<16x144xf32>
    %134 = arith.addf %130, %133 : vector<16x144xf32>
    %135 = arith.mulf %126, %134 : vector<16x144xf32>
    %136 = vector.extract_strided_slice %135 {offsets = [0, 0], sizes = [8, 144], strides = [1, 1]} : vector<16x144xf32> to vector<8x144xf32>
    %c16 = arith.constant 16 : index
    %c18_113 = arith.constant 18 : index
    %137 = vector.load %arg13[%c16, %c18_113] : memref<32x324xf32, #tpu.memory_space<vmem>>, vector<8x144xf32>
    tpu.vector_store %arg13[%c16, %c18_113], %136 {strides = array<i32>} : memref<32x324xf32, #tpu.memory_space<vmem>>, vector<8x144xf32>,
    %138 = vector.extract_strided_slice %135 {offsets = [8, 0], sizes = [8, 144], strides = [1, 1]} : vector<16x144xf32> to vector<8x144xf32>
    %c16_114 = arith.constant 16 : index
    %c162_115 = arith.constant 162 : index
    %139 = vector.load %arg13[%c16_114, %c162_115] : memref<32x324xf32, #tpu.memory_space<vmem>>, vector<8x144xf32>
    tpu.vector_store %arg13[%c16_114, %c162_115], %138 {strides = array<i32>} : memref<32x324xf32, #tpu.memory_space<vmem>>, vector<8x144xf32>,
    %c2_116 = arith.constant 2 : index
    %c0_117 = arith.constant 0 : index
    %c0_118 = arith.constant 0 : index
    %140 = vector.load %arg5[%c2_116, %c0_117, %c0_118] : memref<3x8x72xbf16, #tpu.memory_space<vmem>>, vector<1x8x72xbf16>
    %141 = vector.shape_cast %140 : vector<1x8x72xbf16> to vector<8x72xbf16>
    %c0_119 = arith.constant 0 : index
    %c0_120 = arith.constant 0 : index
    %142 = vector.load %arg11[%c0_119, %c0_120] : memref<8x324xf32, #tpu.memory_space<vmem>>, vector<8x286xf32>
    %c0_121 = arith.constant 0 : index
    %c1_122 = arith.constant 1 : index
    %143 = vector.load %arg11[%c0_121, %c1_122] : memref<8x324xf32, #tpu.memory_space<vmem>>, vector<8x286xf32>
    %c0_123 = arith.constant 0 : index
    %c2_124 = arith.constant 2 : index
    %144 = vector.load %arg11[%c0_123, %c2_124] : memref<8x324xf32, #tpu.memory_space<vmem>>, vector<8x286xf32>
    %c0_125 = arith.constant 0 : index
    %c18_126 = arith.constant 18 : index
    %145 = vector.load %arg11[%c0_125, %c18_126] : memref<8x324xf32, #tpu.memory_space<vmem>>, vector<8x286xf32>
    %c0_127 = arith.constant 0 : index
    %c19_128 = arith.constant 19 : index
    %146 = vector.load %arg11[%c0_127, %c19_128] : memref<8x324xf32, #tpu.memory_space<vmem>>, vector<8x286xf32>
    %c0_129 = arith.constant 0 : index
    %c20_130 = arith.constant 20 : index
    %147 = vector.load %arg11[%c0_129, %c20_130] : memref<8x324xf32, #tpu.memory_space<vmem>>, vector<8x286xf32>
    %c0_131 = arith.constant 0 : index
    %c36_132 = arith.constant 36 : index
    %148 = vector.load %arg11[%c0_131, %c36_132] : memref<8x324xf32, #tpu.memory_space<vmem>>, vector<8x286xf32>
    %c0_133 = arith.constant 0 : index
    %c37_134 = arith.constant 37 : index
    %149 = vector.load %arg11[%c0_133, %c37_134] : memref<8x324xf32, #tpu.memory_space<vmem>>, vector<8x286xf32>
    %c0_135 = arith.constant 0 : index
    %c38_136 = arith.constant 38 : index
    %150 = vector.load %arg11[%c0_135, %c38_136] : memref<8x324xf32, #tpu.memory_space<vmem>>, vector<8x286xf32>
    %151 = tpu.concatenate %142, %143, %144, %145, %146, %147, %148, %149, %150 in 0 : vector<8x286xf32>, vector<8x286xf32>, vector<8x286xf32>, vector<8x286xf32>, vector<8x286xf32>, vector<8x286xf32>, vector<8x286xf32>, vector<8x286xf32>, vector<8x286xf32> -> vector<72x286xf32>
    %152 = arith.truncf %151 : vector<72x286xf32> to vector<72x286xbf16>
    %cst_137 = arith.constant dense<0.000000e+00> : vector<8x286xf32>
    %153 = tpu.matmul %141, %152, %cst_137 {dimension_numbers = #tpu.dot_dimension_numbers<[1], [0], [0], [1], [0, 0, 1, 1], [], []>} : vector<8x72xbf16>, vector<72x286xbf16>, vector<8x286xf32> -> vector<8x286xf32>
    %154 = vector.broadcast %8 : vector<1x286xf32> to vector<8x286xf32>
    %155 = arith.mulf %153, %154 : vector<8x286xf32>
    %c0_138 = arith.constant 0 : index
    %c19_139 = arith.constant 19 : index
    %156 = vector.load %arg11[%c0_138, %c19_139] : memref<8x324xf32, #tpu.memory_space<vmem>>, vector<8x286xf32>
    %cst_140 = arith.constant dense<0.000000e+00> : vector<286xf32>
    %157 = vector.multi_reduction <add>, %156, %cst_140 [0] : vector<8x286xf32> to vector<286xf32>
    %158 = vector.shape_cast %157 : vector<286xf32> to vector<1x286xf32>
    %cst_141 = arith.constant 5.000000e-01 : f32
    %159 = vector.broadcast %cst_141 : f32 to vector<1x286xf32>
    %160 = arith.mulf %159, %158 : vector<1x286xf32>
    %161 = arith.negf %160 : vector<1x286xf32>
    %162 = math.exp %161 : vector<1x286xf32>
    %cst_142 = arith.constant 1.000000e+00 : f32
    %163 = vector.broadcast %cst_142 : f32 to vector<1x286xf32>
    %164 = arith.addf %163, %162 : vector<1x286xf32>
    %165 = arith.divf %163, %164 : vector<1x286xf32>
    %166 = vector.broadcast %165 : vector<1x286xf32> to vector<8x286xf32>
    %167 = arith.mulf %155, %166 : vector<8x286xf32>
    %cst_143 = arith.constant 0.000000e+00 : f32
    %168 = vector.broadcast %cst_143 : f32 to vector<8x286xf32>
    %169 = arith.maximumf %167, %168 : vector<8x286xf32>
    %c0_144 = arith.constant 0 : index
    %c19_145 = arith.constant 19 : index
    %170 = vector.load %arg12[%c0_144, %c19_145] : memref<8x324xf32, #tpu.memory_space<vmem>>, vector<8x286xf32>
    tpu.vector_store %arg12[%c0_144, %c19_145], %169 {strides = array<i32>} : memref<8x324xf32, #tpu.memory_space<vmem>>, vector<8x286xf32>,
    %c0_146 = arith.constant 0 : index
    %c18_147 = arith.constant 18 : index
    %171 = vector.load %arg12[%c0_146, %c18_147] : memref<8x324xf32, #tpu.memory_space<vmem>>, vector<8x144xf32>
    %c0_148 = arith.constant 0 : index
    %c162_149 = arith.constant 162 : index
    %172 = vector.load %arg12[%c0_148, %c162_149] : memref<8x324xf32, #tpu.memory_space<vmem>>, vector<8x144xf32>
    %173 = tpu.concatenate %171, %172 in 0 : vector<8x144xf32>, vector<8x144xf32> -> vector<16x144xf32>
    %174 = arith.truncf %173 : vector<16x144xf32> to vector<16x144xbf16>
    %c3 = arith.constant 3 : index
    %c0_150 = arith.constant 0 : index
    %c0_151 = arith.constant 0 : index
    %175 = vector.load %arg6[%c3, %c0_150, %c0_151] : memref<4x144x144xbf16, #tpu.memory_space<vmem>>, vector<1x144x144xbf16>
    %176 = vector.shape_cast %175 : vector<1x144x144xbf16> to vector<144x144xbf16>
    %cst_152 = arith.constant dense<0.000000e+00> : vector<16x144xf32>
    %177 = tpu.matmul %174, %176, %cst_152 {dimension_numbers = #tpu.dot_dimension_numbers<[1], [0], [0], [1], [0, 0, 1, 1], [], []>} : vector<16x144xbf16>, vector<144x144xbf16>, vector<16x144xf32> -> vector<16x144xf32>
    %c3_153 = arith.constant 3 : index
    %c0_154 = arith.constant 0 : index
    %c0_155 = arith.constant 0 : index
    %178 = vector.load %arg7[%c3_153, %c0_154, %c0_155] : memref<4x1x144xf32, #tpu.memory_space<vmem>>, vector<1x1x144xf32>
    %179 = vector.shape_cast %178 : vector<1x1x144xf32> to vector<1x144xf32>
    %180 = vector.broadcast %179 : vector<1x144xf32> to vector<16x144xf32>
    %181 = arith.addf %177, %180 : vector<16x144xf32>
    %182 = arith.mulf %173, %181 : vector<16x144xf32>
    %183 = vector.extract_strided_slice %182 {offsets = [0, 0], sizes = [8, 144], strides = [1, 1]} : vector<16x144xf32> to vector<8x144xf32>
    %c24 = arith.constant 24 : index
    %c18_156 = arith.constant 18 : index
    %184 = vector.load %arg13[%c24, %c18_156] : memref<32x324xf32, #tpu.memory_space<vmem>>, vector<8x144xf32>
    tpu.vector_store %arg13[%c24, %c18_156], %183 {strides = array<i32>} : memref<32x324xf32, #tpu.memory_space<vmem>>, vector<8x144xf32>,
    %185 = vector.extract_strided_slice %182 {offsets = [8, 0], sizes = [8, 144], strides = [1, 1]} : vector<16x144xf32> to vector<8x144xf32>
    %c24_157 = arith.constant 24 : index
    %c162_158 = arith.constant 162 : index
    %186 = vector.load %arg13[%c24_157, %c162_158] : memref<32x324xf32, #tpu.memory_space<vmem>>, vector<8x144xf32>
    tpu.vector_store %arg13[%c24_157, %c162_158], %185 {strides = array<i32>} : memref<32x324xf32, #tpu.memory_space<vmem>>, vector<8x144xf32>,
    %c0_159 = arith.constant 0 : index
    %c0_160 = arith.constant 0 : index
    %187 = vector.load %arg8[%c0_159, %c0_160] : memref<16x288xbf16, #tpu.memory_space<vmem>>, vector<16x288xbf16>
    %c0_161 = arith.constant 0 : index
    %c0_162 = arith.constant 0 : index
    %188 = vector.load %arg9[%c0_161, %c0_162] : memref<16x1xf32, #tpu.memory_space<vmem>>, vector<16x1xf32>
    %c0_163 = arith.constant 0 : index
    %c0_164 = arith.constant 0 : index
    %189 = vector.load %arg13[%c0_163, %c0_164] : memref<32x324xf32, #tpu.memory_space<vmem>>, vector<32x286xf32>
    %c0_165 = arith.constant 0 : index
    %c1_166 = arith.constant 1 : index
    %190 = vector.load %arg13[%c0_165, %c1_166] : memref<32x324xf32, #tpu.memory_space<vmem>>, vector<32x286xf32>
    %c0_167 = arith.constant 0 : index
    %c2_168 = arith.constant 2 : index
    %191 = vector.load %arg13[%c0_167, %c2_168] : memref<32x324xf32, #tpu.memory_space<vmem>>, vector<32x286xf32>
    %c0_169 = arith.constant 0 : index
    %c18_170 = arith.constant 18 : index
    %192 = vector.load %arg13[%c0_169, %c18_170] : memref<32x324xf32, #tpu.memory_space<vmem>>, vector<32x286xf32>
    %c0_171 = arith.constant 0 : index
    %c19_172 = arith.constant 19 : index
    %193 = vector.load %arg13[%c0_171, %c19_172] : memref<32x324xf32, #tpu.memory_space<vmem>>, vector<32x286xf32>
    %c0_173 = arith.constant 0 : index
    %c20_174 = arith.constant 20 : index
    %194 = vector.load %arg13[%c0_173, %c20_174] : memref<32x324xf32, #tpu.memory_space<vmem>>, vector<32x286xf32>
    %c0_175 = arith.constant 0 : index
    %c36_176 = arith.constant 36 : index
    %195 = vector.load %arg13[%c0_175, %c36_176] : memref<32x324xf32, #tpu.memory_space<vmem>>, vector<32x286xf32>
    %c0_177 = arith.constant 0 : index
    %c37_178 = arith.constant 37 : index
    %196 = vector.load %arg13[%c0_177, %c37_178] : memref<32x324xf32, #tpu.memory_space<vmem>>, vector<32x286xf32>
    %c0_179 = arith.constant 0 : index
    %c38_180 = arith.constant 38 : index
    %197 = vector.load %arg13[%c0_179, %c38_180] : memref<32x324xf32, #tpu.memory_space<vmem>>, vector<32x286xf32>
    %198 = tpu.concatenate %189, %190, %191, %192, %193, %194, %195, %196, %197 in 0 : vector<32x286xf32>, vector<32x286xf32>, vector<32x286xf32>, vector<32x286xf32>, vector<32x286xf32>, vector<32x286xf32>, vector<32x286xf32>, vector<32x286xf32>, vector<32x286xf32> -> vector<288x286xf32>
    %199 = arith.truncf %198 : vector<288x286xf32> to vector<288x286xbf16>
    %cst_181 = arith.constant dense<0.000000e+00> : vector<16x286xf32>
    %200 = tpu.matmul %187, %199, %cst_181 {dimension_numbers = #tpu.dot_dimension_numbers<[1], [0], [0], [1], [0, 0, 1, 1], [], []>} : vector<16x288xbf16>, vector<288x286xbf16>, vector<16x286xf32> -> vector<16x286xf32>
    %201 = vector.broadcast %188 : vector<16x1xf32> to vector<16x286xf32>
    %202 = arith.addf %200, %201 : vector<16x286xf32>
    %203 = vector.broadcast %8 : vector<1x286xf32> to vector<16x286xf32>
    %204 = arith.mulf %202, %203 : vector<16x286xf32>
    %c0_182 = arith.constant 0 : index
    %c0_183 = arith.constant 0 : index
    %c0_184 = arith.constant 0 : index
    %205 = vector.load %arg10[%c0_182, %c0_183, %c0_184] : memref<1x16x286xf32, #tpu.memory_space<vmem>>, vector<1x16x286xf32>
    %206 = vector.shape_cast %205 : vector<1x16x286xf32> to vector<16x286xf32>
    %207 = vector.shape_cast %204 : vector<16x286xf32> to vector<1x16x286xf32>
    tpu.vector_store %arg10[%c0_182, %c0_183, %c0_184], %207 {strides = array<i32>} : memref<1x16x286xf32, #tpu.memory_space<vmem>>, vector<1x16x286xf32>,
    return
  }
  func.func @transform_0(%arg0: i32) -> (i32, i32, i32) {
    %c0_i32 = arith.constant 0 : i32
    %c0_i32_0 = arith.constant 0 : i32
    %c0_i32_1 = arith.constant 0 : i32
    return %arg0, %c0_i32, %c0_i32_0 : i32, i32, i32
  }
  func.func @transform_1(%arg0: i32) -> (i32, i32) {
    %c0_i32 = arith.constant 0 : i32
    %c0_i32_0 = arith.constant 0 : i32
    %c0_i32_1 = arith.constant 0 : i32
    return %c0_i32, %c0_i32_0 : i32, i32
  }
  func.func @transform_2(%arg0: i32) -> (i32, i32) {
    %c0_i32 = arith.constant 0 : i32
    %c0_i32_0 = arith.constant 0 : i32
    %c0_i32_1 = arith.constant 0 : i32
    return %c0_i32, %c0_i32_0 : i32, i32
  }
  func.func @transform_3(%arg0: i32) -> (i32, i32) {
    %c0_i32 = arith.constant 0 : i32
    %c0_i32_0 = arith.constant 0 : i32
    %c0_i32_1 = arith.constant 0 : i32
    return %c0_i32, %c0_i32_0 : i32, i32
  }
  func.func @transform_4(%arg0: i32) -> (i32, i32, i32) {
    %c0_i32 = arith.constant 0 : i32
    %c0_i32_0 = arith.constant 0 : i32
    %c0_i32_1 = arith.constant 0 : i32
    %c0_i32_2 = arith.constant 0 : i32
    return %c0_i32, %c0_i32_0, %c0_i32_1 : i32, i32, i32
  }
  func.func @transform_5(%arg0: i32) -> (i32, i32, i32) {
    %c0_i32 = arith.constant 0 : i32
    %c0_i32_0 = arith.constant 0 : i32
    %c0_i32_1 = arith.constant 0 : i32
    %c0_i32_2 = arith.constant 0 : i32
    return %c0_i32, %c0_i32_0, %c0_i32_1 : i32, i32, i32
  }
  func.func @transform_6(%arg0: i32) -> (i32, i32, i32) {
    %c0_i32 = arith.constant 0 : i32
    %c0_i32_0 = arith.constant 0 : i32
    %c0_i32_1 = arith.constant 0 : i32
    %c0_i32_2 = arith.constant 0 : i32
    return %c0_i32, %c0_i32_0, %c0_i32_1 : i32, i32, i32
  }
  func.func @transform_7(%arg0: i32) -> (i32, i32) {
    %c0_i32 = arith.constant 0 : i32
    %c0_i32_0 = arith.constant 0 : i32
    %c0_i32_1 = arith.constant 0 : i32
    return %c0_i32, %c0_i32_0 : i32, i32
  }
  func.func @transform_8(%arg0: i32) -> (i32, i32) {
    %c0_i32 = arith.constant 0 : i32
    %c0_i32_0 = arith.constant 0 : i32
    %c0_i32_1 = arith.constant 0 : i32
    return %c0_i32, %c0_i32_0 : i32, i32
  }
  func.func @transform_9(%arg0: i32) -> (i32, i32, i32) {
    %c0_i32 = arith.constant 0 : i32
    %c0_i32_0 = arith.constant 0 : i32
    %c0_i32_1 = arith.constant 0 : i32
    return %arg0, %c0_i32, %c0_i32_0 : i32, i32, i32
  }
}

</mosaic_0001>

<llo_original>
// kernel: deform_sppf_block_gating_unit.1
$region0: #{deform_sppf_block_gating_unit.1}
  #allocation0 [shape = 'u32[]', space=smem, size = 0x4, offset = 0x4, fixed_abs, tag = 'smem constant byte address 0x4 - core index']
  #allocation1 [shape = 'u32[72,128]{1,0:T(1,128)}', space=vmem, size = 0x9000, scoped, tag = 'internal scratch']
  #allocation2 [shape = 'f32[8,324]{1,0:T(8,128)}', space=vmem, size = 0x3000, scoped, tag = 'scratch operand']
  #allocation3 [shape = 'f32[8,324]{1,0:T(8,128)}', space=vmem, size = 0x3000, scoped, tag = 'scratch operand']
  #allocation4 [shape = 'f32[32,324]{1,0:T(8,128)}', space=vmem, size = 0xc000, scoped, tag = 'scratch operand']
  %s0 = inlined_call_operand.vmem [shape: f32[2,16,324], index: 0, kind: input, shape index: {}]
  %s1 = inlined_call_operand.vmem [shape: f32[1,286], index: 1, kind: input, shape index: {}]
  %s2 = inlined_call_operand.vmem [shape: bf16[8,144], index: 2, kind: input, shape index: {}]
  %s3 = inlined_call_operand.vmem [shape: f32[8,1], index: 3, kind: input, shape index: {}]
  %s4 = inlined_call_operand.vmem [shape: bf16[3,8,72], index: 4, kind: input, shape index: {}]
  %s5 = inlined_call_operand.vmem [shape: bf16[4,144,144], index: 5, kind: input, shape index: {}]
  %s6 = inlined_call_operand.vmem [shape: f32[4,1,144], index: 6, kind: input, shape index: {}]
  %s7 = inlined_call_operand.vmem [shape: bf16[16,288], index: 7, kind: input, shape index: {}]
  %s8 = inlined_call_operand.vmem [shape: f32[16,1], index: 8, kind: input, shape index: {}]
  %s9 = inlined_call_operand.vmem [shape: f32[2,16,286], index: 9, kind: output, shape index: {}]
  %s10 = sld [smem:[#allocation0]]
  $region69: #{deform_sppf_block_gating_unit.1} parent=0
    _
  %s12 = ssub.s32 1, %s10
  %s13 = scalar_select 0, %s12, %s10
  loop: start=0, step=1, limit=4
  $region2: #{deform_sppf_block_gating_unit.1} parent=0 // loop_pre_header
    _
  $region3: #{deform_sppf_block_gating_unit.1} parent=0 // loop_header
    %s15 = sphi 0, %s19
    %p16 = scmp.ge.s32.totalorder %s15, 4
    %s25 = sphi 0, %s27
    %s28 = sphi 0, %s25
    %s29 = sphi 0, %s28
    %s45 = sphi 0, %s29
    %s49 = sphi 0, %s49
    %s51 = sphi 0, %s49
    %s52 = sphi 0, %s51
    %s66 = sphi 0, %s52
    %s70 = sphi 0, %s70
    %s72 = sphi 0, %s70
    %s73 = sphi 0, %s72
    %s87 = sphi 0, %s73
    %s91 = sphi 0, %s91
    %s93 = sphi 0, %s91
    %s94 = sphi 0, %s93
    %s108 = sphi 0, %s94
    %s112 = sphi 0, %s112
    %s114 = sphi 0, %s112
    %s115 = sphi 0, %s114
    %s129 = sphi 0, %s115
    %s133 = sphi 0, %s133
    %s135 = sphi 0, %s133
    %s136 = sphi 0, %s135
    %s150 = sphi 0, %s136
    %s154 = sphi 0, %s154
    %s156 = sphi 0, %s154
    %s157 = sphi 0, %s156
    %s171 = sphi 0, %s157
    %s175 = sphi 0, %s175
    %s177 = sphi 0, %s175
    %s178 = sphi 0, %s177
    %s192 = sphi 0, %s178
    %s196 = sphi 0, %s196
    %s198 = sphi 0, %s196
    %s199 = sphi 0, %s198
    %s213 = sphi 0, %s199
    %s219 = sphi 0, %s221
    %s222 = sphi 0, %s219
    %s223 = sphi 0, %s222
    %s239 = sphi 0, %s223
  $region4: #{deform_sppf_block_gating_unit.1} parent=0 // loop_header_branch
    %18 = sbr.rel (%p16) target = $region8
  $region5: #{deform_sppf_block_gating_unit.1} parent=0 // loop_body
    %s20 = ssub.s32 %s15, 1
    %s21 = ssub.s32 %s15, 2
    %s22 = sadd.s32 %s15, 1
    %s23 = ssub.s32 %s15, %s22
    %p24 = scmp.eq.s32.totalorder %s23, 0
    %s26 = sadd.s32 %s25, 1
    %s27 = scalar_select %p24, %s25, %s26
    %p30 = pneg %p24
    %p31 = scmp.eq.s32.totalorder %s15, 1
    %p32 = por %p30, %p31
    %p33 = scmp.ne.s32.totalorder %s25, %s28
    %p34 = scmp.eq.s32.totalorder %s15, 0
    %p35 = por %p33, %p34
    %p36 = scmp.ne.s32.totalorder %s25, %s28
    %p37 = scmp.eq.s32.totalorder %s20, 1
    %p38 = por %p36, %p37
    %p39 = scmp.ne.s32.totalorder %s28, %s29
    %p40 = scmp.eq.s32.totalorder %s20, 0
    %p41 = por %p39, %p40
    %p42 = scmp.ne.s32.totalorder %s28, %s29
    %p43 = scmp.eq.s32.totalorder %s21, 1
    %p44 = por %p42, %p43
    %p46 = scmp.ne.s32.totalorder %s29, %s45
    %p47 = scmp.eq.s32.totalorder %s21, 0
    %p48 = por %p46, %p47
    %s50 = sadd.s32 %s49, 1
    %p53 = scmp.eq.s32.totalorder %s15, 1
    %p54 = scmp.ne.s32.totalorder %s49, %s51
    %p55 = scmp.eq.s32.totalorder %s15, 0
    %p56 = por %p54, %p55
    %p57 = scmp.ne.s32.totalorder %s49, %s51
    %p58 = scmp.eq.s32.totalorder %s20, 1
    %p59 = por %p57, %p58
    %p60 = scmp.ne.s32.totalorder %s51, %s52
    %p61 = scmp.eq.s32.totalorder %s20, 0
    %p62 = por %p60, %p61
    %p63 = scmp.ne.s32.totalorder %s51, %s52
    %p64 = scmp.eq.s32.totalorder %s21, 1
    %p65 = por %p63, %p64
    %p67 = scmp.ne.s32.totalorder %s52, %s66
    %p68 = scmp.eq.s32.totalorder %s21, 0
    %p69 = por %p67, %p68
    %s71 = sadd.s32 %s70, 1
    %p74 = scmp.eq.s32.totalorder %s15, 1
    %p75 = scmp.ne.s32.totalorder %s70, %s72
    %p76 = scmp.eq.s32.totalorder %s15, 0
    %p77 = por %p75, %p76
    %p78 = scmp.ne.s32.totalorder %s70, %s72
    %p79 = scmp.eq.s32.totalorder %s20, 1
    %p80 = por %p78, %p79
    %p81 = scmp.ne.s32.totalorder %s72, %s73
    %p82 = scmp.eq.s32.totalorder %s20, 0
    %p83 = por %p81, %p82
    %p84 = scmp.ne.s32.totalorder %s72, %s73
    %p85 = scmp.eq.s32.totalorder %s21, 1
    %p86 = por %p84, %p85
    %p88 = scmp.ne.s32.totalorder %s73, %s87
    %p89 = scmp.eq.s32.totalorder %s21, 0
    %p90 = por %p88, %p89
    %s92 = sadd.s32 %s91, 1
    %p95 = scmp.eq.s32.totalorder %s15, 1
    %p96 = scmp.ne.s32.totalorder %s91, %s93
    %p97 = scmp.eq.s32.totalorder %s15, 0
    %p98 = por %p96, %p97
    %p99 = scmp.ne.s32.totalorder %s91, %s93
    %p100 = scmp.eq.s32.totalorder %s20, 1
    %p101 = por %p99, %p100
    %p102 = scmp.ne.s32.totalorder %s93, %s94
    %p103 = scmp.eq.s32.totalorder %s20, 0
    %p104 = por %p102, %p103
    %p105 = scmp.ne.s32.totalorder %s93, %s94
    %p106 = scmp.eq.s32.totalorder %s21, 1
    %p107 = por %p105, %p106
    %p109 = scmp.ne.s32.totalorder %s94, %s108
    %p110 = scmp.eq.s32.totalorder %s21, 0
    %p111 = por %p109, %p110
    %s113 = sadd.s32 %s112, 1
    %p116 = scmp.eq.s32.totalorder %s15, 1
    %p117 = scmp.ne.s32.totalorder %s112, %s114
    %p118 = scmp.eq.s32.totalorder %s15, 0
    %p119 = por %p117, %p118
    %p120 = scmp.ne.s32.totalorder %s112, %s114
    %p121 = scmp.eq.s32.totalorder %s20, 1
    %p122 = por %p120, %p121
    %p123 = scmp.ne.s32.totalorder %s114, %s115
    %p124 = scmp.eq.s32.totalorder %s20, 0
    %p125 = por %p123, %p124
    %p126 = scmp.ne.s32.totalorder %s114, %s115
    %p127 = scmp.eq.s32.totalorder %s21, 1
    %p128 = por %p126, %p127
    %p130 = scmp.ne.s32.totalorder %s115, %s129
    %p131 = scmp.eq.s32.totalorder %s21, 0
    %p132 = por %p130, %p131
    %s134 = sadd.s32 %s133, 1
    %p137 = scmp.eq.s32.totalorder %s15, 1
    %p138 = scmp.ne.s32.totalorder %s133, %s135
    %p139 = scmp.eq.s32.totalorder %s15, 0
    %p140 = por %p138, %p139
    %p141 = scmp.ne.s32.totalorder %s133, %s135
    %p142 = scmp.eq.s32.totalorder %s20, 1
    %p143 = por %p141, %p142
    %p144 = scmp.ne.s32.totalorder %s135, %s136
    %p145 = scmp.eq.s32.totalorder %s20, 0
    %p146 = por %p144, %p145
    %p147 = scmp.ne.s32.totalorder %s135, %s136
    %p148 = scmp.eq.s32.totalorder %s21, 1
    %p149 = por %p147, %p148
    %p151 = scmp.ne.s32.totalorder %s136, %s150
    %p152 = scmp.eq.s32.totalorder %s21, 0
    %p153 = por %p151, %p152
    %s155 = sadd.s32 %s154, 1
    %p158 = scmp.eq.s32.totalorder %s15, 1
    %p159 = scmp.ne.s32.totalorder %s154, %s156
    %p160 = scmp.eq.s32.totalorder %s15, 0
    %p161 = por %p159, %p160
    %p162 = scmp.ne.s32.totalorder %s154, %s156
    %p163 = scmp.eq.s32.totalorder %s20, 1
    %p164 = por %p162, %p163
    %p165 = scmp.ne.s32.totalorder %s156, %s157
    %p166 = scmp.eq.s32.totalorder %s20, 0
    %p167 = por %p165, %p166
    %p168 = scmp.ne.s32.totalorder %s156, %s157
    %p169 = scmp.eq.s32.totalorder %s21, 1
    %p170 = por %p168, %p169
    %p172 = scmp.ne.s32.totalorder %s157, %s171
    %p173 = scmp.eq.s32.totalorder %s21, 0
    %p174 = por %p172, %p173
    %s176 = sadd.s32 %s175, 1
    %p179 = scmp.eq.s32.totalorder %s15, 1
    %p180 = scmp.ne.s32.totalorder %s175, %s177
    %p181 = scmp.eq.s32.totalorder %s15, 0
    %p182 = por %p180, %p181
    %p183 = scmp.ne.s32.totalorder %s175, %s177
    %p184 = scmp.eq.s32.totalorder %s20, 1
    %p185 = por %p183, %p184
    %p186 = scmp.ne.s32.totalorder %s177, %s178
    %p187 = scmp.eq.s32.totalorder %s20, 0
    %p188 = por %p186, %p187
    %p189 = scmp.ne.s32.totalorder %s177, %s178
    %p190 = scmp.eq.s32.totalorder %s21, 1
    %p191 = por %p189, %p190
    %p193 = scmp.ne.s32.totalorder %s178, %s192
    %p194 = scmp.eq.s32.totalorder %s21, 0
    %p195 = por %p193, %p194
    %s197 = sadd.s32 %s196, 1
    %p200 = scmp.eq.s32.totalorder %s15, 1
    %p201 = scmp.ne.s32.totalorder %s196, %s198
    %p202 = scmp.eq.s32.totalorder %s15, 0
    %p203 = por %p201, %p202
    %p204 = scmp.ne.s32.totalorder %s196, %s198
    %p205 = scmp.eq.s32.totalorder %s20, 1
    %p206 = por %p204, %p205
    %p207 = scmp.ne.s32.totalorder %s198, %s199
    %p208 = scmp.eq.s32.totalorder %s20, 0
    %p209 = por %p207, %p208
    %p210 = scmp.ne.s32.totalorder %s198, %s199
    %p211 = scmp.eq.s32.totalorder %s21, 1
    %p212 = por %p210, %p211
    %p214 = scmp.ne.s32.totalorder %s199, %s213
    %p215 = scmp.eq.s32.totalorder %s21, 0
    %p216 = por %p214, %p215
    %s217 = ssub.s32 %s15, %s22
    %p218 = scmp.eq.s32.totalorder %s217, 0
    %s220 = sadd.s32 %s219, 1
    %s221 = scalar_select %p218, %s219, %s220
    %p224 = pneg %p218
    %p225 = scmp.eq.s32.totalorder %s15, 1
    %p226 = por %p224, %p225
    %p227 = scmp.ne.s32.totalorder %s219, %s222
    %p228 = scmp.eq.s32.totalorder %s15, 0
    %p229 = por %p227, %p228
    %p230 = scmp.ne.s32.totalorder %s219, %s222
    %p231 = scmp.eq.s32.totalorder %s20, 1
    %p232 = por %p230, %p231
    %p233 = scmp.ne.s32.totalorder %s222, %s223
    %p234 = scmp.eq.s32.totalorder %s20, 0
    %p235 = por %p233, %p234
    %p236 = scmp.ne.s32.totalorder %s222, %s223
    %p237 = scmp.eq.s32.totalorder %s21, 1
    %p238 = por %p236, %p237
    %p240 = scmp.ne.s32.totalorder %s223, %s239
    %p241 = scmp.eq.s32.totalorder %s21, 0
    %p242 = por %p240, %p241
    %p243 = scmp.le.s32.totalorder 1, %s15
    %p244 = scmp.lt.s32.totalorder %s15, 3
    %p245 = pnand %p243, %p244
    %p246 = pneg %p245
    // Predicated region
    $region9: #{deform_sppf_block_gating_unit.1} parent=5 // pred_check
      _
    $region10: #{deform_sppf_block_gating_unit.1} parent=5 // pred_check_branch
      %248 = sbr.rel (%p245) target = $region12
    $region11: #{deform_sppf_block_gating_unit.1} parent=5 // pred_region
      %s249 = ssub.s32 %s15, 1
      // Predicated region
      $region13: #{deform_sppf_block_gating_unit.1} parent=11 // pred_check
        %p250 = pneg %p62
      $region14: #{deform_sppf_block_gating_unit.1} parent=11 // pred_check_branch
        %252 = sbr.rel (%p250) target = $region16
      $region15: #{deform_sppf_block_gating_unit.1} parent=11 // pred_region
        _
      $region16: #{deform_sppf_block_gating_unit.1} parent=11 // pred_fallthru
        _
      // Predicated region
      $region17: #{deform_sppf_block_gating_unit.1} parent=11 // pred_check
        %p253 = pneg %p83
      $region18: #{deform_sppf_block_gating_unit.1} parent=11 // pred_check_branch
        %255 = sbr.rel (%p253) target = $region20
      $region19: #{deform_sppf_block_gating_unit.1} parent=11 // pred_region
        _
      $region20: #{deform_sppf_block_gating_unit.1} parent=11 // pred_fallthru
        _
      // Predicated region
      $region21: #{deform_sppf_block_gating_unit.1} parent=11 // pred_check
        %p256 = pneg %p104
      $region22: #{deform_sppf_block_gating_unit.1} parent=11 // pred_check_branch
        %258 = sbr.rel (%p256) target = $region24
      $region23: #{deform_sppf_block_gating_unit.1} parent=11 // pred_region
        _
      $region24: #{deform_sppf_block_gating_unit.1} parent=11 // pred_fallthru
        _
      // Predicated region
      $region25: #{deform_sppf_block_gating_unit.1} parent=11 // pred_check
        %p259 = pneg %p125
      $region26: #{deform_sppf_block_gating_unit.1} parent=11 // pred_check_branch
        %261 = sbr.rel (%p259) target = $region28
      $region27: #{deform_sppf_block_gating_unit.1} parent=11 // pred_region
        _
      $region28: #{deform_sppf_block_gating_unit.1} parent=11 // pred_fallthru
        _
      // Predicated region
      $region29: #{deform_sppf_block_gating_unit.1} parent=11 // pred_check
        %p262 = pneg %p146
      $region30: #{deform_sppf_block_gating_unit.1} parent=11 // pred_check_branch
        %264 = sbr.rel (%p262) target = $region32
      $region31: #{deform_sppf_block_gating_unit.1} parent=11 // pred_region
        _
      $region32: #{deform_sppf_block_gating_unit.1} parent=11 // pred_fallthru
        _
      // Predicated region
      $region33: #{deform_sppf_block_gating_unit.1} parent=11 // pred_check
        %p265 = pneg %p167
      $region34: #{deform_sppf_block_gating_unit.1} parent=11 // pred_check_branch
        %267 = sbr.rel (%p265) target = $region36
      $region35: #{deform_sppf_block_gating_unit.1} parent=11 // pred_region
        _
      $region36: #{deform_sppf_block_gating_unit.1} parent=11 // pred_fallthru
        _
      // Predicated region
      $region37: #{deform_sppf_block_gating_unit.1} parent=11 // pred_check
        %p268 = pneg %p188
      $region38: #{deform_sppf_block_gating_unit.1} parent=11 // pred_check_branch
        %270 = sbr.rel (%p268) target = $region40
      $region39: #{deform_sppf_block_gating_unit.1} parent=11 // pred_region
        _
      $region40: #{deform_sppf_block_gating_unit.1} parent=11 // pred_fallthru
        _
      // Predicated region
      $region41: #{deform_sppf_block_gating_unit.1} parent=11 // pred_check
        %p271 = pneg %p209
      $region42: #{deform_sppf_block_gating_unit.1} parent=11 // pred_check_branch
        %273 = sbr.rel (%p271) target = $region44
      $region43: #{deform_sppf_block_gating_unit.1} parent=11 // pred_region
        _
      $region44: #{deform_sppf_block_gating_unit.1} parent=11 // pred_fallthru
        _
    $region12: #{deform_sppf_block_gating_unit.1} parent=5 // pred_fallthru
      _
    %p274 = scmp.lt.s32.totalorder %s15, 2
    // Predicated region
    $region45: #{deform_sppf_block_gating_unit.1} parent=5 // pred_check
      %p275 = pneg %p274
    $region46: #{deform_sppf_block_gating_unit.1} parent=5 // pred_check_branch
      %277 = sbr.rel (%p275) target = $region48
    $region47: #{deform_sppf_block_gating_unit.1} parent=5 // pred_region
      // Predicated region
      $region49: #{deform_sppf_block_gating_unit.1} parent=47 // pred_check
        %p278 = pneg %p35
      $region50: #{deform_sppf_block_gating_unit.1} parent=47 // pred_check_branch
        %280 = sbr.rel (%p278) target = $region52
      $region51: #{deform_sppf_block_gating_unit.1} parent=47 // pred_region
        %p281 = scmp.lt.s32.totalorder %s15, 1
        %s282 = scalar_select %p281, %s15, 1
        %s283 = smul.addr %s282, 6
        %s284 = smul.addr %s283, 8
        %s285 = scalar_lea.vmem %s0, %s284
      $region52: #{deform_sppf_block_gating_unit.1} parent=47 // pred_fallthru
        _
    $region48: #{deform_sppf_block_gating_unit.1} parent=5 // pred_fallthru
      _
    %p286 = scmp.le.s32.totalorder 1, %s15
    %p287 = scmp.lt.s32.totalorder %s15, 3
    %p288 = pnand %p286, %p287
    %p289 = pneg %p288
    // Predicated region
    $region53: #{deform_sppf_block_gating_unit.1} parent=5 // pred_check
      _
    $region54: #{deform_sppf_block_gating_unit.1} parent=5 // pred_check_branch
      %291 = sbr.rel (%p288) target = $region56
    $region55: #{deform_sppf_block_gating_unit.1} parent=5 // pred_region
      %s292 = ssub.s32 %s15, 1
      %p293 = scmp.lt.s32.totalorder %s20, 1
      %s294 = scalar_select %p293, %s20, 1
      %s295 = smul.addr %s294, 6
      %s296 = smul.addr %s295, 8
      %s297 = scalar_lea.vmem %s0, %s296
      %p298 = pneg %p41
      %p299 = pneg %p38
      %p300 = pneg %p62
      %p301 = pneg %p59
      %p302 = pneg %p83
      %p303 = pneg %p80
      %p304 = pneg %p104
      %p305 = pneg %p101
      %p306 = pneg %p125
      %p307 = pneg %p122
      %p308 = pneg %p146
      %p309 = pneg %p143
      %p310 = pneg %p167
      %p311 = pneg %p164
      %p312 = pneg %p188
      %p313 = pneg %p185
      %p314 = pneg %p209
      %p315 = pneg %p206
      %p316 = pneg %p235
      %p317 = pneg %p232
      %p318 = scmp.lt.s32.totalorder %s20, 1
      %s319 = scalar_select %p318, %s20, 1
      %s320 = smul.addr %s319, 6
      %s321 = smul.addr %s320, 8
      %s322 = scalar_lea.vmem %s9, %s321
      %p323 = scmp.lt.s32.totalorder %s20, 1
      %s324 = scalar_select %p323, %s20, 1
      %s325 = smul.addr %s324, 6
      %s326 = smul.addr %s325, 8
      %s327 = scalar_lea.vmem %s0, %s326
      %p328 = scmp.lt.s32.totalorder %s20, 1
      %s329 = scalar_select %p328, %s20, 1
      %s330 = smul.addr %s329, 6
      %s331 = smul.addr %s330, 8
      %s332 = scalar_lea.vmem %s9, %s331
      %vm334 = vcmask 154624
      %335 = vst.msk [vmem:[#allocation2] sm:$0xff] %vm334, 0.0
      %vm336 = vcmask 556424
      %337 = vst.msk [vmem:[#allocation2 + $0x10] sm:$0xff] %vm336, 0.0
      %338 = vst.msk [vmem:[#allocation3] sm:$0xff] %vm334, 0.0
      %339 = vst.msk [vmem:[#allocation3 + $0x10] sm:$0xff] %vm336, 0.0
      %vm340 = vcmask 146432
      %341 = vst.msk [vmem:[#allocation4] sm:$0xff] %vm340, 0.0
      %342 = vst.msk [vmem:[#allocation4 + $0x18] sm:$0xff] %vm340, 0.0
      %343 = vst.msk [vmem:[#allocation4 + $0x30] sm:$0xff] %vm340, 0.0
      %344 = vst.msk [vmem:[#allocation4 + $0x48] sm:$0xff] %vm340, 0.0
      %vm345 = vcmask 556432
      %346 = vst.msk [vmem:[#allocation4 + $0x10] sm:$0xff] %vm345, 0.0
      %347 = vst.msk [vmem:[#allocation4 + $0x28] sm:$0xff] %vm345, 0.0
      %348 = vst.msk [vmem:[#allocation4 + $0x40] sm:$0xff] %vm345, 0.0
      %349 = vst.msk [vmem:[#allocation4 + $0x58] sm:$0xff] %vm345, 0.0
      %v350 = vld [vmem:[%s1] sm:$0x7]
      %v351 = vld [vmem:[%s327] sm:$0xff]
      %v352 = vld [vmem:[%s327 + $0x8] sm:$0xff]
      %v353 = vld [vmem:[%s327 + $0x10] sm:$0xff]
      %v354 = vld [vmem:[%s327 + $0x18] sm:$0xff]
      %v355 = vld [vmem:[%s327 + $0x20] sm:$0xff]
      %v356 = vld [vmem:[%s327 + $0x28] sm:$0xff]
      %v357 = vld [vmem:[%s2] sm:$0xff]
      %v358 = vld [vmem:[%s3] sm:$0xff]
      %365 = vrot.lane.b32.xlu0 %v351, 127
      %v366 = vpop.permute.xlu0 %365
      %367 = vrot.lane.b32.xlu0 %v352, 127
      %v368 = vpop.permute.xlu0 %367
      %369 = vrot.lane.b32.xlu0 %v353, 127
      %v370 = vpop.permute.xlu0 %369
      %371 = vrot.lane.b32.xlu0 %v354, 127
      %v372 = vpop.permute.xlu0 %371
      %373 = vrot.lane.b32.xlu0 %v355, 127
      %v374 = vpop.permute.xlu0 %373
      %375 = vrot.lane.b32.xlu0 %v356, 127
      %v376 = vpop.permute.xlu0 %375
      %vm377 = vcmask 1039360
      %v378 = vsel %vm377, %v366, %v368
      %v379 = vsel %vm377, %v368, %v370
      %v380 = vsel %vm377, %v372, %v374
      %v381 = vsel %vm377, %v374, %v376
      %388 = vrot.lane.b32.xlu0 %v351, 126
      %v389 = vpop.permute.xlu0 %388
      %390 = vrot.lane.b32.xlu0 %v352, 126
      %v391 = vpop.permute.xlu0 %390
      %392 = vrot.lane.b32.xlu0 %v353, 126
      %v393 = vpop.permute.xlu0 %392
      %394 = vrot.lane.b32.xlu0 %v354, 126
      %v395 = vpop.permute.xlu0 %394
      %396 = vrot.lane.b32.xlu0 %v355, 126
      %v397 = vpop.permute.xlu0 %396
      %398 = vrot.lane.b32.xlu0 %v356, 126
      %v399 = vpop.permute.xlu0 %398
      %vm400 = vcmask 1031168
      %v401 = vsel %vm400, %v389, %v391
      %v402 = vsel %vm400, %v391, %v393
      %v403 = vsel %vm400, %v395, %v397
      %v404 = vsel %vm400, %v397, %v399
      %411 = vrot.lane.b32.xlu0 %v351, 110
      %v412 = vpop.permute.xlu0 %411
      %413 = vrot.lane.b32.xlu0 %v352, 110
      %v414 = vpop.permute.xlu0 %413
      %415 = vrot.lane.b32.xlu0 %v353, 110
      %v416 = vpop.permute.xlu0 %415
      %417 = vrot.lane.b32.xlu0 %v354, 110
      %v418 = vpop.permute.xlu0 %417
      %419 = vrot.lane.b32.xlu0 %v355, 110
      %v420 = vpop.permute.xlu0 %419
      %421 = vrot.lane.b32.xlu0 %v356, 110
      %v422 = vpop.permute.xlu0 %421
      %vm423 = vcmask 900096
      %v424 = vsel %vm423, %v412, %v414
      %v425 = vsel %vm423, %v414, %v416
      %v426 = vsel %vm423, %v418, %v420
      %v427 = vsel %vm423, %v420, %v422
      %434 = vrot.lane.b32.xlu0 %v351, 109
      %v435 = vpop.permute.xlu0 %434
      %436 = vrot.lane.b32.xlu0 %v352, 109
      %v437 = vpop.permute.xlu0 %436
      %438 = vrot.lane.b32.xlu0 %v353, 109
      %v439 = vpop.permute.xlu0 %438
      %440 = vrot.lane.b32.xlu0 %v354, 109
      %v441 = vpop.permute.xlu0 %440
      %442 = vrot.lane.b32.xlu0 %v355, 109
      %v443 = vpop.permute.xlu0 %442
      %444 = vrot.lane.b32.xlu0 %v356, 109
      %v445 = vpop.permute.xlu0 %444
      %vm446 = vcmask 891904
      %v447 = vsel %vm446, %v435, %v437
      %v448 = vsel %vm446, %v437, %v439
      %v449 = vsel %vm446, %v441, %v443
      %v450 = vsel %vm446, %v443, %v445
      %457 = vrot.lane.b32.xlu0 %v351, 108
      %v458 = vpop.permute.xlu0 %457
      %459 = vrot.lane.b32.xlu0 %v352, 108
      %v460 = vpop.permute.xlu0 %459
      %461 = vrot.lane.b32.xlu0 %v353, 108
      %v462 = vpop.permute.xlu0 %461
      %463 = vrot.lane.b32.xlu0 %v354, 108
      %v464 = vpop.permute.xlu0 %463
      %465 = vrot.lane.b32.xlu0 %v355, 108
      %v466 = vpop.permute.xlu0 %465
      %467 = vrot.lane.b32.xlu0 %v356, 108
      %v468 = vpop.permute.xlu0 %467
      %vm469 = vcmask 883712
      %v470 = vsel %vm469, %v458, %v460
      %v471 = vsel %vm469, %v460, %v462
      %v472 = vsel %vm469, %v464, %v466
      %v473 = vsel %vm469, %v466, %v468
      %480 = vrot.lane.b32.xlu0 %v351, 92
      %v481 = vpop.permute.xlu0 %480
      %482 = vrot.lane.b32.xlu0 %v352, 92
      %v483 = vpop.permute.xlu0 %482
      %484 = vrot.lane.b32.xlu0 %v353, 92
      %v485 = vpop.permute.xlu0 %484
      %486 = vrot.lane.b32.xlu0 %v354, 92
      %v487 = vpop.permute.xlu0 %486
      %488 = vrot.lane.b32.xlu0 %v355, 92
      %v489 = vpop.permute.xlu0 %488
      %490 = vrot.lane.b32.xlu0 %v356, 92
      %v491 = vpop.permute.xlu0 %490
      %vm492 = vcmask 752640
      %v493 = vsel %vm492, %v481, %v483
      %v494 = vsel %vm492, %v483, %v485
      %v495 = vsel %vm492, %v487, %v489
      %v496 = vsel %vm492, %v489, %v491
      %503 = vrot.lane.b32.xlu0 %v351, 91
      %v504 = vpop.permute.xlu0 %503
      %505 = vrot.lane.b32.xlu0 %v352, 91
      %v506 = vpop.permute.xlu0 %505
      %507 = vrot.lane.b32.xlu0 %v353, 91
      %v508 = vpop.permute.xlu0 %507
      %509 = vrot.lane.b32.xlu0 %v354, 91
      %v510 = vpop.permute.xlu0 %509
      %511 = vrot.lane.b32.xlu0 %v355, 91
      %v512 = vpop.permute.xlu0 %511
      %513 = vrot.lane.b32.xlu0 %v356, 91
      %v514 = vpop.permute.xlu0 %513
      %vm515 = vcmask 744448
      %v516 = vsel %vm515, %v504, %v506
      %v517 = vsel %vm515, %v506, %v508
      %v518 = vsel %vm515, %v510, %v512
      %v519 = vsel %vm515, %v512, %v514
      %526 = vrot.lane.b32.xlu0 %v351, 90
      %v527 = vpop.permute.xlu0 %526
      %528 = vrot.lane.b32.xlu0 %v352, 90
      %v529 = vpop.permute.xlu0 %528
      %530 = vrot.lane.b32.xlu0 %v353, 90
      %v531 = vpop.permute.xlu0 %530
      %532 = vrot.lane.b32.xlu0 %v354, 90
      %v533 = vpop.permute.xlu0 %532
      %534 = vrot.lane.b32.xlu0 %v355, 90
      %v535 = vpop.permute.xlu0 %534
      %536 = vrot.lane.b32.xlu0 %v356, 90
      %v537 = vpop.permute.xlu0 %536
      %vm538 = vcmask 736256
      %v539 = vsel %vm538, %v527, %v529
      %v540 = vsel %vm538, %v529, %v531
      %v541 = vsel %vm538, %v533, %v535
      %v542 = vsel %vm538, %v535, %v537
      %v549 = vpack.c.bf16 %v354, %v351
      %v550 = vpack.c.bf16 %v355, %v352
      %v551 = vpack.c.bf16 %v356, %v353
      %v552 = vpack.c.bf16 %v380, %v378
      %v553 = vpack.c.bf16 %v381, %v379
      %v554 = vpack.c.bf16 %v376, %v370
      %v555 = vpack.c.bf16 %v403, %v401
      %v556 = vpack.c.bf16 %v404, %v402
      %v557 = vpack.c.bf16 %v399, %v393
      %v558 = vpack.c.bf16 %v426, %v424
      %v559 = vpack.c.bf16 %v427, %v425
      %v560 = vpack.c.bf16 %v422, %v416
      %v561 = vpack.c.bf16 %v449, %v447
      %v562 = vpack.c.bf16 %v450, %v448
      %v563 = vpack.c.bf16 %v445, %v439
      %v564 = vpack.c.bf16 %v472, %v470
      %v565 = vpack.c.bf16 %v473, %v471
      %v566 = vpack.c.bf16 %v468, %v462
      %v567 = vpack.c.bf16 %v495, %v493
      %v568 = vpack.c.bf16 %v496, %v494
      %v569 = vpack.c.bf16 %v491, %v485
      %v570 = vpack.c.bf16 %v518, %v516
      %v571 = vpack.c.bf16 %v519, %v517
      %v572 = vpack.c.bf16 %v514, %v508
      %v573 = vpack.c.bf16 %v541, %v539
      %v574 = vpack.c.bf16 %v542, %v540
      %v575 = vpack.c.bf16 %v537, %v531
      %577 = vset.pattern.permute.xlu0 0
      %578 = vperm.xlu0 %577, %v358
      %v579 = vpop.permute.xlu0 %578
      %v582 = vunpack.c.l.b16 %v357
      %v583 = vunpack.c.h.b16 %v357
      %v584 = vpack.c.b16 %v582, %v582
      %v585 = vpack.c.b16 %v583, %v583
      %vm587 = vcmask 130048
      %v589 = vsel %vm587, %v585, 0
      %591 = vmatpush.bf16.msra.mxu0 %v570
      %592 = vmatpush.bf16.msra.mxu0 %v567
      %593 = vmatpush.bf16.msra.mxu0 %v564
      %594 = vmatpush.bf16.msra.mxu0 %v561
      %595 = vmatpush.bf16.msra.mxu0 %v558
      %596 = vmatpush.bf16.msra.mxu0 %v555
      %597 = vmatpush.bf16.msra.mxu0 %v552
      %598 = vmatpush.bf16.msra.mxu0 %v549
      %599 = vmatmul.bf16.gmra.mxu0 %v584
      %v600 = vpop.f32.mrf.mxu0
      %v601 = vadd.f32 %v579, %v600
      %v602 = vpop.f32.mrf.mxu0
      %603 = vdwg.mxu0
      %604 = vmatpush.bf16.msra.mxu0 0
      %605 = vmatpush.bf16.msra.mxu0 0
      %606 = vmatpush.bf16.msra.mxu0 0
      %607 = vmatpush.bf16.msra.mxu0 0
      %608 = vmatpush.bf16.msra.mxu0 0
      %609 = vmatpush.bf16.msra.mxu0 0
      %610 = vmatpush.bf16.msra.mxu0 0
      %611 = vmatpush.bf16.msra.mxu0 %v573
      %612 = vmatmul.bf16.gmra.mxu0 %v589
      %v613 = vpop.f32.mrf.mxu0
      %v614 = vadd.f32 %v601, %v613
      %v615 = vpop.f32.mrf.mxu0
      %616 = vdwg.mxu0
      %617 = vmatpush.bf16.msra.mxu0 %v571
      %618 = vmatpush.bf16.msra.mxu0 %v568
      %619 = vmatpush.bf16.msra.mxu0 %v565
      %620 = vmatpush.bf16.msra.mxu0 %v562
      %621 = vmatpush.bf16.msra.mxu0 %v559
      %622 = vmatpush.bf16.msra.mxu0 %v556
      %623 = vmatpush.bf16.msra.mxu0 %v553
      %624 = vmatpush.bf16.msra.mxu0 %v550
      %625 = vmatmul.bf16.gmra.mxu0 %v584
      %v626 = vpop.f32.mrf.mxu0
      %v627 = vadd.f32 %v579, %v626
      %v628 = vpop.f32.mrf.mxu0
      %629 = vdwg.mxu0
      %630 = vmatpush.bf16.msra.mxu0 0
      %631 = vmatpush.bf16.msra.mxu0 0
      %632 = vmatpush.bf16.msra.mxu0 0
      %633 = vmatpush.bf16.msra.mxu0 0
      %634 = vmatpush.bf16.msra.mxu0 0
      %635 = vmatpush.bf16.msra.mxu0 0
      %636 = vmatpush.bf16.msra.mxu0 0
      %637 = vmatpush.bf16.msra.mxu0 %v574
      %638 = vmatmul.bf16.gmra.mxu0 %v589
      %v639 = vpop.f32.mrf.mxu0
      %v640 = vadd.f32 %v627, %v639
      %v641 = vpop.f32.mrf.mxu0
      %642 = vdwg.mxu0
      %643 = vmatpush.bf16.msra.mxu0 %v572
      %644 = vmatpush.bf16.msra.mxu0 %v569
      %645 = vmatpush.bf16.msra.mxu0 %v566
      %646 = vmatpush.bf16.msra.mxu0 %v563
      %647 = vmatpush.bf16.msra.mxu0 %v560
      %648 = vmatpush.bf16.msra.mxu0 %v557
      %649 = vmatpush.bf16.msra.mxu0 %v554
      %650 = vmatpush.bf16.msra.mxu0 %v551
      %651 = vmatmul.bf16.gmra.mxu0 %v584
      %v652 = vpop.f32.mrf.mxu0
      %v653 = vadd.f32 %v579, %v652
      %v654 = vpop.f32.mrf.mxu0
      %655 = vdwg.mxu0
      %656 = vmatpush.bf16.msra.mxu0 0
      %657 = vmatpush.bf16.msra.mxu0 0
      %658 = vmatpush.bf16.msra.mxu0 0
      %659 = vmatpush.bf16.msra.mxu0 0
      %660 = vmatpush.bf16.msra.mxu0 0
      %661 = vmatpush.bf16.msra.mxu0 0
      %662 = vmatpush.bf16.msra.mxu0 0
      %663 = vmatpush.bf16.msra.mxu0 %v575
      %664 = vmatmul.bf16.gmra.mxu0 %v589
      %v665 = vpop.f32.mrf.mxu0
      %v666 = vadd.f32 %v653, %v665
      %v667 = vpop.f32.mrf.mxu0
      %668 = vdwg.mxu0
      %v670 = vperm.slane %v350, 0
      %v671 = vperm.slane %v350, 1
      %v672 = vperm.slane %v350, 2
      %v676 = vmul.f32 %v614, %v670
      %v677 = vmul.f32 %v640, %v671
      %v678 = vmul.f32 %v666, %v672
      %682 = vrot.lane.b32.xlu0 %v676, 19
      %v683 = vpop.permute.xlu0 %682
      %684 = vrot.lane.b32.xlu0 %v677, 19
      %v685 = vpop.permute.xlu0 %684
      %686 = vrot.lane.b32.xlu0 %v678, 19
      %v687 = vpop.permute.xlu0 %686
      %v688 = vsel %vm334, %v683, %v685
      %v689 = vsel %vm334, %v685, %v687
      %vm693 = vcmask 1047704
      %694 = vst.msk [vmem:[#allocation2] sm:$0xff] %vm693, %v683
      %695 = vst [vmem:[#allocation2 + $0x8] sm:$0xff] %v688
      %vm696 = vcmask 400384
      %697 = vst.msk [vmem:[#allocation2 + $0x10] sm:$0xff] %vm696, %v689
      %v698 = vld [vmem:[#allocation2] sm:$0xff]
      %v699 = vld [vmem:[#allocation2 + $0x8] sm:$0xff]
      %v700 = vld [vmem:[#allocation2 + $0x10] sm:$0xff]
      %703 = vrot.lane.b32.xlu0 %v699, 112
      %v704 = vpop.permute.xlu0 %703
      %705 = vrot.lane.b32.xlu0 %v700, 112
      %v706 = vpop.permute.xlu0 %705
      %vm707 = vcmask 916480
      %v708 = vsel %vm707, %v704, %v706
      %v711 = vpack.c.bf16 %v708, %v698
      %v712 = vpack.c.bf16 %v706, %v699
      %v713 = vld [vmem:[%s5] sm:$0xff]
      %v714 = vld [vmem:[%s5 + $0x8] sm:$0xff]
      %v715 = vld [vmem:[%s5 + $0x10] sm:$0xff]
      %v716 = vld [vmem:[%s5 + $0x18] sm:$0xff]
      %v717 = vld [vmem:[%s5 + $0x20] sm:$0xff]
      %v718 = vld [vmem:[%s5 + $0x28] sm:$0xff]
      %v719 = vld [vmem:[%s5 + $0x30] sm:$0xff]
      %v720 = vld [vmem:[%s5 + $0x38] sm:$0xff]
      %v721 = vld [vmem:[%s5 + $0x40] sm:$0xff]
      %v722 = vld [vmem:[%s5 + $0x48] sm:$0xff]
      %v723 = vld [vmem:[%s5 + $0x50] sm:$0xff]
      %v724 = vld [vmem:[%s5 + $0x58] sm:$0xff]
      %v725 = vld [vmem:[%s5 + $0x60] sm:$0xff]
      %v726 = vld [vmem:[%s5 + $0x68] sm:$0xff]
      %v727 = vld [vmem:[%s5 + $0x70] sm:$0xff]
      %v728 = vld [vmem:[%s5 + $0x78] sm:$0xff]
      %v729 = vld [vmem:[%s5 + $0x80] sm:$0xff]
      %v730 = vld [vmem:[%s5 + $0x88] sm:$0xff]
      %v731 = vld [vmem:[%s6] sm:$0x3]
      %v733 = vperm.slane %v731, 0
      %v734 = vperm.slane %v731, 1
      %739 = vrot.lane.b32.xlu0 %v711, 110
      %v740 = vpop.permute.xlu0 %739
      %741 = vrot.lane.b32.xlu0 %v712, 110
      %v742 = vpop.permute.xlu0 %741
      %vm743 = vcmask 900096
      %v744 = vsel %vm743, %v740, %v742
      %v764 = vunpack.c.l.b16 %v713
      %v765 = vunpack.c.h.b16 %v713
      %v766 = vunpack.c.l.b16 %v714
      %v767 = vunpack.c.h.b16 %v714
      %v768 = vunpack.c.l.b16 %v715
      %v769 = vunpack.c.h.b16 %v715
      %v770 = vunpack.c.l.b16 %v716
      %v771 = vunpack.c.h.b16 %v716
      %v772 = vunpack.c.l.b16 %v717
      %v773 = vunpack.c.h.b16 %v717
      %v774 = vunpack.c.l.b16 %v718
      %v775 = vunpack.c.h.b16 %v718
      %v776 = vunpack.c.l.b16 %v719
      %v777 = vunpack.c.h.b16 %v719
      %v778 = vunpack.c.l.b16 %v720
      %v779 = vunpack.c.h.b16 %v720
      %v780 = vunpack.c.l.b16 %v721
      %v781 = vunpack.c.h.b16 %v721
      %v782 = vunpack.c.l.b16 %v722
      %v783 = vunpack.c.h.b16 %v722
      %v784 = vunpack.c.l.b16 %v723
      %v785 = vunpack.c.h.b16 %v723
      %v786 = vunpack.c.l.b16 %v724
      %v787 = vunpack.c.h.b16 %v724
      %v788 = vunpack.c.l.b16 %v725
      %v789 = vunpack.c.h.b16 %v725
      %v790 = vunpack.c.l.b16 %v726
      %v791 = vunpack.c.h.b16 %v726
      %v792 = vunpack.c.l.b16 %v727
      %v793 = vunpack.c.h.b16 %v727
      %v794 = vunpack.c.l.b16 %v728
      %v795 = vunpack.c.h.b16 %v728
      %v796 = vunpack.c.l.b16 %v729
      %v797 = vunpack.c.h.b16 %v729
      %v798 = vunpack.c.l.b16 %v730
      %v799 = vunpack.c.h.b16 %v730
      %v800 = vpack.c.b16 %v766, %v764
      %v801 = vpack.c.b16 %v767, %v765
      %v802 = vpack.c.b16 %v770, %v768
      %v803 = vpack.c.b16 %v771, %v769
      %v804 = vpack.c.b16 %v774, %v772
      %v805 = vpack.c.b16 %v775, %v773
      %v806 = vpack.c.b16 %v778, %v776
      %v807 = vpack.c.b16 %v779, %v777
      %v808 = vpack.c.b16 %v782, %v780
      %v809 = vpack.c.b16 %v783, %v781
      %v810 = vpack.c.b16 %v786, %v784
      %v811 = vpack.c.b16 %v787, %v785
      %v812 = vpack.c.b16 %v790, %v788
      %v813 = vpack.c.b16 %v791, %v789
      %v814 = vpack.c.b16 %v794, %v792
      %v815 = vpack.c.b16 %v795, %v793
      %v816 = vpack.c.b16 %v798, %v796
      %v817 = vpack.c.b16 %v799, %v797
      %v837 = vsel %vm587, %v742, 0
      %839 = vmatpush.bf16.msra.mxu0 %v814
      %840 = vmatpush.bf16.msra.mxu0 %v812
      %841 = vmatpush.bf16.msra.mxu0 %v810
      %842 = vmatpush.bf16.msra.mxu0 %v808
      %843 = vmatpush.bf16.msra.mxu0 %v806
      %844 = vmatpush.bf16.msra.mxu0 %v804
      %845 = vmatpush.bf16.msra.mxu0 %v802
      %846 = vmatpush.bf16.msra.mxu0 %v800
      %847 = vmatmul.bf16.gmra.mxu0 %v744
      %v848 = vpop.f32.mrf.mxu0
      %v849 = vadd.f32 %v733, %v848
      %v850 = vpop.f32.mrf.mxu0
      %v851 = vadd.f32 %v733, %v850
      %852 = vdwg.mxu0
      %853 = vmatpush.bf16.msra.mxu0 0
      %854 = vmatpush.bf16.msra.mxu0 0
      %855 = vmatpush.bf16.msra.mxu0 0
      %856 = vmatpush.bf16.msra.mxu0 0
      %857 = vmatpush.bf16.msra.mxu0 0
      %858 = vmatpush.bf16.msra.mxu0 0
      %859 = vmatpush.bf16.msra.mxu0 0
      %860 = vmatpush.bf16.msra.mxu0 %v816
      %861 = vmatmul.bf16.gmra.mxu0 %v837
      %v862 = vpop.f32.mrf.mxu0
      %v863 = vadd.f32 %v849, %v862
      %v864 = vpop.f32.mrf.mxu0
      %v865 = vadd.f32 %v851, %v864
      %866 = vdwg.mxu0
      %867 = vmatpush.bf16.msra.mxu0 %v815
      %868 = vmatpush.bf16.msra.mxu0 %v813
      %869 = vmatpush.bf16.msra.mxu0 %v811
      %870 = vmatpush.bf16.msra.mxu0 %v809
      %871 = vmatpush.bf16.msra.mxu0 %v807
      %872 = vmatpush.bf16.msra.mxu0 %v805
      %873 = vmatpush.bf16.msra.mxu0 %v803
      %874 = vmatpush.bf16.msra.mxu0 %v801
      %875 = vmatmul.bf16.gmra.mxu0 %v744
      %v876 = vpop.f32.mrf.mxu0
      %v877 = vadd.f32 %v734, %v876
      %v878 = vpop.f32.mrf.mxu0
      %v879 = vadd.f32 %v734, %v878
      %880 = vdwg.mxu0
      %881 = vmatpush.bf16.msra.mxu0 0
      %882 = vmatpush.bf16.msra.mxu0 0
      %883 = vmatpush.bf16.msra.mxu0 0
      %884 = vmatpush.bf16.msra.mxu0 0
      %885 = vmatpush.bf16.msra.mxu0 0
      %886 = vmatpush.bf16.msra.mxu0 0
      %887 = vmatpush.bf16.msra.mxu0 0
      %888 = vmatpush.bf16.msra.mxu0 %v817
      %889 = vmatmul.bf16.gmra.mxu0 %v837
      %v890 = vpop.f32.mrf.mxu0
      %v891 = vadd.f32 %v877, %v890
      %v892 = vpop.f32.mrf.mxu0
      %v893 = vadd.f32 %v879, %v892
      %894 = vdwg.mxu0
      %899 = vrot.lane.b32.xlu0 %v863, 18
      %v900 = vpop.permute.xlu0 %899
      %901 = vrot.lane.b32.xlu0 %v891, 18
      %v902 = vpop.permute.xlu0 %901
      %903 = vrot.lane.b32.xlu0 %v865, 18
      %v904 = vpop.permute.xlu0 %903
      %905 = vrot.lane.b32.xlu0 %v893, 18
      %v906 = vpop.permute.xlu0 %905
      %v907 = vsel %vm340, %v900, %v902
      %v908 = vsel %vm340, %v904, %v906
      %v913 = vmul.f32 %v698, %v900
      %v914 = vmul.f32 %v699, %v907
      %v915 = vmul.f32 %v708, %v904
      %v916 = vmul.f32 %v706, %v908
      %vm917 = vcmask 1047696
      %918 = vst.msk [vmem:[#allocation4] sm:$0xff] %vm917, %v913
      %vm919 = vcmask 277504
      %920 = vst.msk [vmem:[#allocation4 + $0x8] sm:$0xff] %vm919, %v914
      %923 = vrot.lane.b32.xlu0 %v915, 16
      %v924 = vpop.permute.xlu0 %923
      %925 = vrot.lane.b32.xlu0 %v916, 16
      %v926 = vpop.permute.xlu0 %925
      %v927 = vsel %vm587, %v924, %v926
      %vm930 = vcmask 1047824
      %931 = vst.msk [vmem:[#allocation4 + $0x8] sm:$0xff] %vm930, %v924
      %vm932 = vcmask 408576
      %933 = vst.msk [vmem:[#allocation4 + $0x10] sm:$0xff] %vm932, %v927
      %v934 = vld [vmem:[%s4] sm:$0xf]
      %v935 = vld [vmem:[#allocation2] sm:$0xff]
      %v936 = vld [vmem:[#allocation2 + $0x8] sm:$0xff]
      %v937 = vld [vmem:[#allocation2 + $0x10] sm:$0xff]
      %941 = vrot.lane.b32.xlu0 %v935, 127
      %v942 = vpop.permute.xlu0 %941
      %943 = vrot.lane.b32.xlu0 %v936, 127
      %v944 = vpop.permute.xlu0 %943
      %945 = vrot.lane.b32.xlu0 %v937, 127
      %v946 = vpop.permute.xlu0 %945
      %v947 = vsel %vm377, %v942, %v944
      %v948 = vsel %vm377, %v944, %v946
      %952 = vrot.lane.b32.xlu0 %v935, 126
      %v953 = vpop.permute.xlu0 %952
      %954 = vrot.lane.b32.xlu0 %v936, 126
      %v955 = vpop.permute.xlu0 %954
      %956 = vrot.lane.b32.xlu0 %v937, 126
      %v957 = vpop.permute.xlu0 %956
      %v958 = vsel %vm400, %v953, %v955
      %v959 = vsel %vm400, %v955, %v957
      %963 = vrot.lane.b32.xlu0 %v935, 110
      %v964 = vpop.permute.xlu0 %963
      %965 = vrot.lane.b32.xlu0 %v936, 110
      %v966 = vpop.permute.xlu0 %965
      %967 = vrot.lane.b32.xlu0 %v937, 110
      %v968 = vpop.permute.xlu0 %967
      %v969 = vsel %vm423, %v964, %v966
      %v970 = vsel %vm423, %v966, %v968
      %974 = vrot.lane.b32.xlu0 %v935, 109
      %v975 = vpop.permute.xlu0 %974
      %976 = vrot.lane.b32.xlu0 %v936, 109
      %v977 = vpop.permute.xlu0 %976
      %978 = vrot.lane.b32.xlu0 %v937, 109
      %v979 = vpop.permute.xlu0 %978
      %v980 = vsel %vm446, %v975, %v977
      %v981 = vsel %vm446, %v977, %v979
      %985 = vrot.lane.b32.xlu0 %v935, 108
      %v986 = vpop.permute.xlu0 %985
      %987 = vrot.lane.b32.xlu0 %v936, 108
      %v988 = vpop.permute.xlu0 %987
      %989 = vrot.lane.b32.xlu0 %v937, 108
      %v990 = vpop.permute.xlu0 %989
      %v991 = vsel %vm469, %v986, %v988
      %v992 = vsel %vm469, %v988, %v990
      %996 = vrot.lane.b32.xlu0 %v935, 92
      %v997 = vpop.permute.xlu0 %996
      %998 = vrot.lane.b32.xlu0 %v936, 92
      %v999 = vpop.permute.xlu0 %998
      %1000 = vrot.lane.b32.xlu0 %v937, 92
      %v1001 = vpop.permute.xlu0 %1000
      %v1002 = vsel %vm492, %v997, %v999
      %v1003 = vsel %vm492, %v999, %v1001
      %1007 = vrot.lane.b32.xlu0 %v935, 91
      %v1008 = vpop.permute.xlu0 %1007
      %1009 = vrot.lane.b32.xlu0 %v936, 91
      %v1010 = vpop.permute.xlu0 %1009
      %1011 = vrot.lane.b32.xlu0 %v937, 91
      %v1012 = vpop.permute.xlu0 %1011
      %v1013 = vsel %vm515, %v1008, %v1010
      %v1014 = vsel %vm515, %v1010, %v1012
      %1018 = vrot.lane.b32.xlu0 %v935, 90
      %v1019 = vpop.permute.xlu0 %1018
      %1020 = vrot.lane.b32.xlu0 %v936, 90
      %v1021 = vpop.permute.xlu0 %1020
      %1022 = vrot.lane.b32.xlu0 %v937, 90
      %v1023 = vpop.permute.xlu0 %1022
      %v1024 = vsel %vm538, %v1019, %v1021
      %v1025 = vsel %vm538, %v1021, %v1023
      %v1029 = vpack.c.bf16 %v947, %v935
      %v1030 = vpack.c.bf16 %v948, %v936
      %v1031 = vpack.c.bf16 %v946, %v937
      %v1032 = vpack.c.bf16 %v969, %v958
      %v1033 = vpack.c.bf16 %v970, %v959
      %v1034 = vpack.c.bf16 %v968, %v957
      %v1035 = vpack.c.bf16 %v991, %v980
      %v1036 = vpack.c.bf16 %v992, %v981
      %v1037 = vpack.c.bf16 %v990, %v979
      %v1038 = vpack.c.bf16 %v1013, %v1002
      %v1039 = vpack.c.bf16 %v1014, %v1003
      %v1040 = vpack.c.bf16 %v1012, %v1001
      %v1041 = vpack.c.bf16 %v1024, %v1024
      %v1042 = vpack.c.bf16 %v1025, %v1025
      %v1043 = vpack.c.bf16 %v1023, %v1023
      %vm1044 = vcmask 588800
      %v1046 = vsel %vm1044, %v934, 0
      %vm1048 = vcmask 1043456
      %v1050 = vsel %vm1048, %v1041, 0
      %v1053 = vsel %vm1048, %v1042, 0
      %v1056 = vsel %vm1048, %v1043, 0
      %1058 = vmatpush.bf16.msra.mxu0 0
      %1059 = vmatpush.bf16.msra.mxu0 0
      %1060 = vmatpush.bf16.msra.mxu0 0
      %1061 = vmatpush.bf16.msra.mxu0 %v1050
      %1062 = vmatpush.bf16.msra.mxu0 %v1038
      %1063 = vmatpush.bf16.msra.mxu0 %v1035
      %1064 = vmatpush.bf16.msra.mxu0 %v1032
      %1065 = vmatpush.bf16.msra.mxu0 %v1029
      %1066 = vmatmul.bf16.gmra.mxu0 %v1046
      %v1067 = vpop.f32.mrf.mxu0
      %v1068 = vadd.f32 0.0, %v1067
      %v1069 = vpop.f32.mrf.mxu0
      %1070 = vdwg.mxu0
      %1071 = vmatpush.bf16.msra.mxu0 0
      %1072 = vmatpush.bf16.msra.mxu0 0
      %1073 = vmatpush.bf16.msra.mxu0 0
      %1074 = vmatpush.bf16.msra.mxu0 %v1053
      %1075 = vmatpush.bf16.msra.mxu0 %v1039
      %1076 = vmatpush.bf16.msra.mxu0 %v1036
      %1077 = vmatpush.bf16.msra.mxu0 %v1033
      %1078 = vmatpush.bf16.msra.mxu0 %v1030
      %1079 = vmatmul.bf16.gmra.mxu0 %v1046
      %v1080 = vpop.f32.mrf.mxu0
      %v1081 = vadd.f32 0.0, %v1080
      %v1082 = vpop.f32.mrf.mxu0
      %1083 = vdwg.mxu0
      %1084 = vmatpush.bf16.msra.mxu0 0
      %1085 = vmatpush.bf16.msra.mxu0 0
      %1086 = vmatpush.bf16.msra.mxu0 0
      %1087 = vmatpush.bf16.msra.mxu0 %v1056
      %1088 = vmatpush.bf16.msra.mxu0 %v1040
      %1089 = vmatpush.bf16.msra.mxu0 %v1037
      %1090 = vmatpush.bf16.msra.mxu0 %v1034
      %1091 = vmatpush.bf16.msra.mxu0 %v1031
      %1092 = vmatmul.bf16.gmra.mxu0 %v1046
      %v1093 = vpop.f32.mrf.mxu0
      %v1094 = vadd.f32 0.0, %v1093
      %v1095 = vpop.f32.mrf.mxu0
      %1096 = vdwg.mxu0
      %v1097 = vmul.f32 %v1068, %v670
      %v1098 = vmul.f32 %v1081, %v671
      %v1099 = vmul.f32 %v1094, %v672
      %v1100 = vsel %vm693, %v935, 0.0
      %v1101 = vrot.slane %v1100, 4
      %v1102 = vadd.f32 %v1100, %v1101
      %v1103 = vrot.slane %v1102, 2
      %v1104 = vadd.f32 %v1102, %v1103
      %v1105 = vrot.slane %v1104, 1
      %v1106 = vadd.f32 %v1104, %v1105
      %v1107 = vrot.slane %v936, 4
      %v1108 = vadd.f32 %v936, %v1107
      %v1109 = vrot.slane %v1108, 2
      %v1110 = vadd.f32 %v1108, %v1109
      %v1111 = vrot.slane %v1110, 1
      %v1112 = vadd.f32 %v1110, %v1111
      %v1113 = vsel %vm696, %v937, 0.0
      %v1114 = vrot.slane %v1113, 4
      %v1115 = vadd.f32 %v1113, %v1114
      %v1116 = vrot.slane %v1115, 2
      %v1117 = vadd.f32 %v1115, %v1116
      %v1118 = vrot.slane %v1117, 1
      %v1119 = vadd.f32 %v1117, %v1118
      %v1120 = vmul.f32 %v1106, 0.5
      %v1121 = vmul.f32 %v1112, 0.5
      %v1122 = vmul.f32 %v1119, 0.5
      %v1123 = vxor.u32 %v1120, 2147483648
      %v1124 = vxor.u32 %v1121, 2147483648
      %v1125 = vxor.u32 %v1122, 2147483648
      %v1126 = vmul.f32 %v1123, 1.442695
      %v1127 = vpow.pop %v1126
      %v1128 = vmul.f32 %v1124, 1.442695
      %v1129 = vpow.pop %v1128
      %v1130 = vmul.f32 %v1125, 1.442695
      %v1131 = vpow.pop %v1130
      %v1132 = vadd.f32 %v1127, 1.0
      %v1133 = vadd.f32 %v1129, 1.0
      %v1134 = vadd.f32 %v1131, 1.0
      %v1135 = vrcp.pop %v1132
      %v1136 = vmul.f32 %v1132, %v1135
      %v1137 = vsub.f32 1.0, %v1136
      %v1138 = vmul.f32 %v1135, %v1137
      %v1139 = vadd.f32 %v1135, %v1138
      %vm1140 = vweird.f32 %v1132
      %vm1141 = vweird.f32 %v1135
      %vm1142 = vmor %vm1140, %vm1141
      %v1143 = vsel %vm1142, %v1135, %v1139
      %v1144 = vand.u32 2147483647, %v1132
      %vm1145 = vcmp.eq.f32.partialorder %v1144, 8.507059e+37
      %v1146 = vand.u32 %v1132, 2147483648
      %v1147 = vor.u32 1.1754944e-38, %v1146
      %v1148 = vsel %vm1145, %v1147, %v1143
      %v1149 = vmul.f32 1.0, %v1148
      %v1150 = vrcp.pop %v1133
      %v1151 = vmul.f32 %v1133, %v1150
      %v1152 = vsub.f32 1.0, %v1151
      %v1153 = vmul.f32 %v1150, %v1152
      %v1154 = vadd.f32 %v1150, %v1153
      %vm1155 = vweird.f32 %v1133
      %vm1156 = vweird.f32 %v1150
      %vm1157 = vmor %vm1155, %vm1156
      %v1158 = vsel %vm1157, %v1150, %v1154
      %v1159 = vand.u32 2147483647, %v1133
      %vm1160 = vcmp.eq.f32.partialorder %v1159, 8.507059e+37
      %v1161 = vand.u32 %v1133, 2147483648
      %v1162 = vor.u32 1.1754944e-38, %v1161
      %v1163 = vsel %vm1160, %v1162, %v1158
      %v1164 = vmul.f32 1.0, %v1163
      %v1165 = vrcp.pop %v1134
      %v1166 = vmul.f32 %v1134, %v1165
      %v1167 = vsub.f32 1.0, %v1166
      %v1168 = vmul.f32 %v1165, %v1167
      %v1169 = vadd.f32 %v1165, %v1168
      %vm1170 = vweird.f32 %v1134
      %vm1171 = vweird.f32 %v1165
      %vm1172 = vmor %vm1170, %vm1171
      %v1173 = vsel %vm1172, %v1165, %v1169
      %v1174 = vand.u32 2147483647, %v1134
      %vm1175 = vcmp.eq.f32.partialorder %v1174, 8.507059e+37
      %v1176 = vand.u32 %v1134, 2147483648
      %v1177 = vor.u32 1.1754944e-38, %v1176
      %v1178 = vsel %vm1175, %v1177, %v1173
      %v1179 = vmul.f32 1.0, %v1178
      %1183 = vrot.lane.b32.xlu0 %v1149, 109
      %v1184 = vpop.permute.xlu0 %1183
      %1185 = vrot.lane.b32.xlu0 %v1164, 109
      %v1186 = vpop.permute.xlu0 %1185
      %1187 = vrot.lane.b32.xlu0 %v1179, 109
      %v1188 = vpop.permute.xlu0 %1187
      %v1189 = vsel %vm446, %v1184, %v1186
      %v1190 = vsel %vm446, %v1186, %v1188
      %v1194 = vmul.f32 %v1097, %v1189
      %v1195 = vmul.f32 %v1098, %v1190
      %v1196 = vmul.f32 %v1099, %v1188
      %v1197 = vmax.f32 %v1194, 0.0
      %v1198 = vmax.f32 %v1195, 0.0
      %v1199 = vmax.f32 %v1196, 0.0
      %1203 = vrot.lane.b32.xlu0 %v1197, 19
      %v1204 = vpop.permute.xlu0 %1203
      %1205 = vrot.lane.b32.xlu0 %v1198, 19
      %v1206 = vpop.permute.xlu0 %1205
      %1207 = vrot.lane.b32.xlu0 %v1199, 19
      %v1208 = vpop.permute.xlu0 %1207
      %v1209 = vsel %vm334, %v1204, %v1206
      %v1210 = vsel %vm334, %v1206, %v1208
      %1214 = vst.msk [vmem:[#allocation3] sm:$0xff] %vm693, %v1204
      %1215 = vst [vmem:[#allocation3 + $0x8] sm:$0xff] %v1209
      %1216 = vst.msk [vmem:[#allocation3 + $0x10] sm:$0xff] %vm696, %v1210
      %v1217 = vld [vmem:[#allocation3] sm:$0xff]
      %v1218 = vld [vmem:[#allocation3 + $0x8] sm:$0xff]
      %v1219 = vld [vmem:[#allocation3 + $0x10] sm:$0xff]
      %1222 = vrot.lane.b32.xlu0 %v1218, 112
      %v1223 = vpop.permute.xlu0 %1222
      %1224 = vrot.lane.b32.xlu0 %v1219, 112
      %v1225 = vpop.permute.xlu0 %1224
      %v1226 = vsel %vm707, %v1223, %v1225
      %v1229 = vpack.c.bf16 %v1226, %v1217
      %v1230 = vpack.c.bf16 %v1225, %v1218
      %s1231 = scalar_lea.vmem %s5, 144
      %v1232 = vld [vmem:[%s1231] sm:$0xff]
      %v1233 = vld [vmem:[%s1231 + $0x8] sm:$0xff]
      %v1234 = vld [vmem:[%s1231 + $0x10] sm:$0xff]
      %v1235 = vld [vmem:[%s1231 + $0x18] sm:$0xff]
      %v1236 = vld [vmem:[%s1231 + $0x20] sm:$0xff]
      %v1237 = vld [vmem:[%s1231 + $0x28] sm:$0xff]
      %v1238 = vld [vmem:[%s1231 + $0x30] sm:$0xff]
      %v1239 = vld [vmem:[%s1231 + $0x38] sm:$0xff]
      %v1240 = vld [vmem:[%s1231 + $0x40] sm:$0xff]
      %v1241 = vld [vmem:[%s1231 + $0x48] sm:$0xff]
      %v1242 = vld [vmem:[%s1231 + $0x50] sm:$0xff]
      %v1243 = vld [vmem:[%s1231 + $0x58] sm:$0xff]
      %v1244 = vld [vmem:[%s1231 + $0x60] sm:$0xff]
      %v1245 = vld [vmem:[%s1231 + $0x68] sm:$0xff]
      %v1246 = vld [vmem:[%s1231 + $0x70] sm:$0xff]
      %v1247 = vld [vmem:[%s1231 + $0x78] sm:$0xff]
      %v1248 = vld [vmem:[%s1231 + $0x80] sm:$0xff]
      %v1249 = vld [vmem:[%s1231 + $0x88] sm:$0xff]
      %s1250 = scalar_lea.vmem %s6, 2
      %v1251 = vld [vmem:[%s1250] sm:$0x3]
      %v1253 = vperm.slane %v1251, 0
      %v1254 = vperm.slane %v1251, 1
      %1259 = vrot.lane.b32.xlu0 %v1229, 110
      %v1260 = vpop.permute.xlu0 %1259
      %1261 = vrot.lane.b32.xlu0 %v1230, 110
      %v1262 = vpop.permute.xlu0 %1261
      %v1263 = vsel %vm743, %v1260, %v1262
      %v1283 = vunpack.c.l.b16 %v1232
      %v1284 = vunpack.c.h.b16 %v1232
      %v1285 = vunpack.c.l.b16 %v1233
      %v1286 = vunpack.c.h.b16 %v1233
      %v1287 = vunpack.c.l.b16 %v1234
      %v1288 = vunpack.c.h.b16 %v1234
      %v1289 = vunpack.c.l.b16 %v1235
      %v1290 = vunpack.c.h.b16 %v1235
      %v1291 = vunpack.c.l.b16 %v1236
      %v1292 = vunpack.c.h.b16 %v1236
      %v1293 = vunpack.c.l.b16 %v1237
      %v1294 = vunpack.c.h.b16 %v1237
      %v1295 = vunpack.c.l.b16 %v1238
      %v1296 = vunpack.c.h.b16 %v1238
      %v1297 = vunpack.c.l.b16 %v1239
      %v1298 = vunpack.c.h.b16 %v1239
      %v1299 = vunpack.c.l.b16 %v1240
      %v1300 = vunpack.c.h.b16 %v1240
      %v1301 = vunpack.c.l.b16 %v1241
      %v1302 = vunpack.c.h.b16 %v1241
      %v1303 = vunpack.c.l.b16 %v1242
      %v1304 = vunpack.c.h.b16 %v1242
      %v1305 = vunpack.c.l.b16 %v1243
      %v1306 = vunpack.c.h.b16 %v1243
      %v1307 = vunpack.c.l.b16 %v1244
      %v1308 = vunpack.c.h.b16 %v1244
      %v1309 = vunpack.c.l.b16 %v1245
      %v1310 = vunpack.c.h.b16 %v1245
      %v1311 = vunpack.c.l.b16 %v1246
      %v1312 = vunpack.c.h.b16 %v1246
      %v1313 = vunpack.c.l.b16 %v1247
      %v1314 = vunpack.c.h.b16 %v1247
      %v1315 = vunpack.c.l.b16 %v1248
      %v1316 = vunpack.c.h.b16 %v1248
      %v1317 = vunpack.c.l.b16 %v1249
      %v1318 = vunpack.c.h.b16 %v1249
      %v1319 = vpack.c.b16 %v1285, %v1283
      %v1320 = vpack.c.b16 %v1286, %v1284
      %v1321 = vpack.c.b16 %v1289, %v1287
      %v1322 = vpack.c.b16 %v1290, %v1288
      %v1323 = vpack.c.b16 %v1293, %v1291
      %v1324 = vpack.c.b16 %v1294, %v1292
      %v1325 = vpack.c.b16 %v1297, %v1295
      %v1326 = vpack.c.b16 %v1298, %v1296
      %v1327 = vpack.c.b16 %v1301, %v1299
      %v1328 = vpack.c.b16 %v1302, %v1300
      %v1329 = vpack.c.b16 %v1305, %v1303
      %v1330 = vpack.c.b16 %v1306, %v1304
      %v1331 = vpack.c.b16 %v1309, %v1307
      %v1332 = vpack.c.b16 %v1310, %v1308
      %v1333 = vpack.c.b16 %v1313, %v1311
      %v1334 = vpack.c.b16 %v1314, %v1312
      %v1335 = vpack.c.b16 %v1317, %v1315
      %v1336 = vpack.c.b16 %v1318, %v1316
      %v1356 = vsel %vm587, %v1262, 0
      %1358 = vmatpush.bf16.msra.mxu0 %v1333
      %1359 = vmatpush.bf16.msra.mxu0 %v1331
      %1360 = vmatpush.bf16.msra.mxu0 %v1329
      %1361 = vmatpush.bf16.msra.mxu0 %v1327
      %1362 = vmatpush.bf16.msra.mxu0 %v1325
      %1363 = vmatpush.bf16.msra.mxu0 %v1323
      %1364 = vmatpush.bf16.msra.mxu0 %v1321
      %1365 = vmatpush.bf16.msra.mxu0 %v1319
      %1366 = vmatmul.bf16.gmra.mxu0 %v1263
      %v1367 = vpop.f32.mrf.mxu0
      %v1368 = vadd.f32 %v1253, %v1367
      %v1369 = vpop.f32.mrf.mxu0
      %v1370 = vadd.f32 %v1253, %v1369
      %1371 = vdwg.mxu0
      %1372 = vmatpush.bf16.msra.mxu0 0
      %1373 = vmatpush.bf16.msra.mxu0 0
      %1374 = vmatpush.bf16.msra.mxu0 0
      %1375 = vmatpush.bf16.msra.mxu0 0
      %1376 = vmatpush.bf16.msra.mxu0 0
      %1377 = vmatpush.bf16.msra.mxu0 0
      %1378 = vmatpush.bf16.msra.mxu0 0
      %1379 = vmatpush.bf16.msra.mxu0 %v1335
      %1380 = vmatmul.bf16.gmra.mxu0 %v1356
      %v1381 = vpop.f32.mrf.mxu0
      %v1382 = vadd.f32 %v1368, %v1381
      %v1383 = vpop.f32.mrf.mxu0
      %v1384 = vadd.f32 %v1370, %v1383
      %1385 = vdwg.mxu0
      %1386 = vmatpush.bf16.msra.mxu0 %v1334
      %1387 = vmatpush.bf16.msra.mxu0 %v1332
      %1388 = vmatpush.bf16.msra.mxu0 %v1330
      %1389 = vmatpush.bf16.msra.mxu0 %v1328
      %1390 = vmatpush.bf16.msra.mxu0 %v1326
      %1391 = vmatpush.bf16.msra.mxu0 %v1324
      %1392 = vmatpush.bf16.msra.mxu0 %v1322
      %1393 = vmatpush.bf16.msra.mxu0 %v1320
      %1394 = vmatmul.bf16.gmra.mxu0 %v1263
      %v1395 = vpop.f32.mrf.mxu0
      %v1396 = vadd.f32 %v1254, %v1395
      %v1397 = vpop.f32.mrf.mxu0
      %v1398 = vadd.f32 %v1254, %v1397
      %1399 = vdwg.mxu0
      %1400 = vmatpush.bf16.msra.mxu0 0
      %1401 = vmatpush.bf16.msra.mxu0 0
      %1402 = vmatpush.bf16.msra.mxu0 0
      %1403 = vmatpush.bf16.msra.mxu0 0
      %1404 = vmatpush.bf16.msra.mxu0 0
      %1405 = vmatpush.bf16.msra.mxu0 0
      %1406 = vmatpush.bf16.msra.mxu0 0
      %1407 = vmatpush.bf16.msra.mxu0 %v1336
      %1408 = vmatmul.bf16.gmra.mxu0 %v1356
      %v1409 = vpop.f32.mrf.mxu0
      %v1410 = vadd.f32 %v1396, %v1409
      %v1411 = vpop.f32.mrf.mxu0
      %v1412 = vadd.f32 %v1398, %v1411
      %1413 = vdwg.mxu0
      %1418 = vrot.lane.b32.xlu0 %v1382, 18
      %v1419 = vpop.permute.xlu0 %1418
      %1420 = vrot.lane.b32.xlu0 %v1410, 18
      %v1421 = vpop.permute.xlu0 %1420
      %1422 = vrot.lane.b32.xlu0 %v1384, 18
      %v1423 = vpop.permute.xlu0 %1422
      %1424 = vrot.lane.b32.xlu0 %v1412, 18
      %v1425 = vpop.permute.xlu0 %1424
      %v1426 = vsel %vm340, %v1419, %v1421
      %v1427 = vsel %vm340, %v1423, %v1425
      %v1432 = vmul.f32 %v1217, %v1419
      %v1433 = vmul.f32 %v1218, %v1426
      %v1434 = vmul.f32 %v1226, %v1423
      %v1435 = vmul.f32 %v1225, %v1427
      %1436 = vst.msk [vmem:[#allocation4 + $0x18] sm:$0xff] %vm917, %v1432
      %1437 = vst.msk [vmem:[#allocation4 + $0x20] sm:$0xff] %vm919, %v1433
      %1440 = vrot.lane.b32.xlu0 %v1434, 16
      %v1441 = vpop.permute.xlu0 %1440
      %1442 = vrot.lane.b32.xlu0 %v1435, 16
      %v1443 = vpop.permute.xlu0 %1442
      %v1444 = vsel %vm587, %v1441, %v1443
      %1447 = vst.msk [vmem:[#allocation4 + $0x20] sm:$0xff] %vm930, %v1441
      %1448 = vst.msk [vmem:[#allocation4 + $0x28] sm:$0xff] %vm932, %v1444
      %s1449 = scalar_lea.vmem %s4, 4
      %v1450 = vld [vmem:[%s1449] sm:$0xf]
      %v1451 = vld [vmem:[#allocation3] sm:$0xff]
      %v1452 = vld [vmem:[#allocation3 + $0x8] sm:$0xff]
      %v1453 = vld [vmem:[#allocation3 + $0x10] sm:$0xff]
      %1457 = vrot.lane.b32.xlu0 %v1451, 127
      %v1458 = vpop.permute.xlu0 %1457
      %1459 = vrot.lane.b32.xlu0 %v1452, 127
      %v1460 = vpop.permute.xlu0 %1459
      %1461 = vrot.lane.b32.xlu0 %v1453, 127
      %v1462 = vpop.permute.xlu0 %1461
      %v1463 = vsel %vm377, %v1458, %v1460
      %v1464 = vsel %vm377, %v1460, %v1462
      %1468 = vrot.lane.b32.xlu0 %v1451, 126
      %v1469 = vpop.permute.xlu0 %1468
      %1470 = vrot.lane.b32.xlu0 %v1452, 126
      %v1471 = vpop.permute.xlu0 %1470
      %1472 = vrot.lane.b32.xlu0 %v1453, 126
      %v1473 = vpop.permute.xlu0 %1472
      %v1474 = vsel %vm400, %v1469, %v1471
      %v1475 = vsel %vm400, %v1471, %v1473
      %1479 = vrot.lane.b32.xlu0 %v1451, 110
      %v1480 = vpop.permute.xlu0 %1479
      %1481 = vrot.lane.b32.xlu0 %v1452, 110
      %v1482 = vpop.permute.xlu0 %1481
      %1483 = vrot.lane.b32.xlu0 %v1453, 110
      %v1484 = vpop.permute.xlu0 %1483
      %v1485 = vsel %vm423, %v1480, %v1482
      %v1486 = vsel %vm423, %v1482, %v1484
      %1490 = vrot.lane.b32.xlu0 %v1451, 109
      %v1491 = vpop.permute.xlu0 %1490
      %1492 = vrot.lane.b32.xlu0 %v1452, 109
      %v1493 = vpop.permute.xlu0 %1492
      %1494 = vrot.lane.b32.xlu0 %v1453, 109
      %v1495 = vpop.permute.xlu0 %1494
      %v1496 = vsel %vm446, %v1491, %v1493
      %v1497 = vsel %vm446, %v1493, %v1495
      %1501 = vrot.lane.b32.xlu0 %v1451, 108
      %v1502 = vpop.permute.xlu0 %1501
      %1503 = vrot.lane.b32.xlu0 %v1452, 108
      %v1504 = vpop.permute.xlu0 %1503
      %1505 = vrot.lane.b32.xlu0 %v1453, 108
      %v1506 = vpop.permute.xlu0 %1505
      %v1507 = vsel %vm469, %v1502, %v1504
      %v1508 = vsel %vm469, %v1504, %v1506
      %1512 = vrot.lane.b32.xlu0 %v1451, 92
      %v1513 = vpop.permute.xlu0 %1512
      %1514 = vrot.lane.b32.xlu0 %v1452, 92
      %v1515 = vpop.permute.xlu0 %1514
      %1516 = vrot.lane.b32.xlu0 %v1453, 92
      %v1517 = vpop.permute.xlu0 %1516
      %v1518 = vsel %vm492, %v1513, %v1515
      %v1519 = vsel %vm492, %v1515, %v1517
      %1523 = vrot.lane.b32.xlu0 %v1451, 91
      %v1524 = vpop.permute.xlu0 %1523
      %1525 = vrot.lane.b32.xlu0 %v1452, 91
      %v1526 = vpop.permute.xlu0 %1525
      %1527 = vrot.lane.b32.xlu0 %v1453, 91
      %v1528 = vpop.permute.xlu0 %1527
      %v1529 = vsel %vm515, %v1524, %v1526
      %v1530 = vsel %vm515, %v1526, %v1528
      %1534 = vrot.lane.b32.xlu0 %v1451, 90
      %v1535 = vpop.permute.xlu0 %1534
      %1536 = vrot.lane.b32.xlu0 %v1452, 90
      %v1537 = vpop.permute.xlu0 %1536
      %1538 = vrot.lane.b32.xlu0 %v1453, 90
      %v1539 = vpop.permute.xlu0 %1538
      %v1540 = vsel %vm538, %v1535, %v1537
      %v1541 = vsel %vm538, %v1537, %v1539
      %v1545 = vpack.c.bf16 %v1463, %v1451
      %v1546 = vpack.c.bf16 %v1464, %v1452
      %v1547 = vpack.c.bf16 %v1462, %v1453
      %v1548 = vpack.c.bf16 %v1485, %v1474
      %v1549 = vpack.c.bf16 %v1486, %v1475
      %v1550 = vpack.c.bf16 %v1484, %v1473
      %v1551 = vpack.c.bf16 %v1507, %v1496
      %v1552 = vpack.c.bf16 %v1508, %v1497
      %v1553 = vpack.c.bf16 %v1506, %v1495
      %v1554 = vpack.c.bf16 %v1529, %v1518
      %v1555 = vpack.c.bf16 %v1530, %v1519
      %v1556 = vpack.c.bf16 %v1528, %v1517
      %v1557 = vpack.c.bf16 %v1540, %v1540
      %v1558 = vpack.c.bf16 %v1541, %v1541
      %v1559 = vpack.c.bf16 %v1539, %v1539
      %v1561 = vsel %vm1044, %v1450, 0
      %v1564 = vsel %vm1048, %v1557, 0
      %v1567 = vsel %vm1048, %v1558, 0
      %v1570 = vsel %vm1048, %v1559, 0
      %1572 = vmatpush.bf16.msra.mxu0 0
      %1573 = vmatpush.bf16.msra.mxu0 0
      %1574 = vmatpush.bf16.msra.mxu0 0
      %1575 = vmatpush.bf16.msra.mxu0 %v1564
      %1576 = vmatpush.bf16.msra.mxu0 %v1554
      %1577 = vmatpush.bf16.msra.mxu0 %v1551
      %1578 = vmatpush.bf16.msra.mxu0 %v1548
      %1579 = vmatpush.bf16.msra.mxu0 %v1545
      %1580 = vmatmul.bf16.gmra.mxu0 %v1561
      %v1581 = vpop.f32.mrf.mxu0
      %v1582 = vadd.f32 0.0, %v1581
      %v1583 = vpop.f32.mrf.mxu0
      %1584 = vdwg.mxu0
      %1585 = vmatpush.bf16.msra.mxu0 0
      %1586 = vmatpush.bf16.msra.mxu0 0
      %1587 = vmatpush.bf16.msra.mxu0 0
      %1588 = vmatpush.bf16.msra.mxu0 %v1567
      %1589 = vmatpush.bf16.msra.mxu0 %v1555
      %1590 = vmatpush.bf16.msra.mxu0 %v1552
      %1591 = vmatpush.bf16.msra.mxu0 %v1549
      %1592 = vmatpush.bf16.msra.mxu0 %v1546
      %1593 = vmatmul.bf16.gmra.mxu0 %v1561
      %v1594 = vpop.f32.mrf.mxu0
      %v1595 = vadd.f32 0.0, %v1594
      %v1596 = vpop.f32.mrf.mxu0
      %1597 = vdwg.mxu0
      %1598 = vmatpush.bf16.msra.mxu0 0
      %1599 = vmatpush.bf16.msra.mxu0 0
      %1600 = vmatpush.bf16.msra.mxu0 0
      %1601 = vmatpush.bf16.msra.mxu0 %v1570
      %1602 = vmatpush.bf16.msra.mxu0 %v1556
      %1603 = vmatpush.bf16.msra.mxu0 %v1553
      %1604 = vmatpush.bf16.msra.mxu0 %v1550
      %1605 = vmatpush.bf16.msra.mxu0 %v1547
      %1606 = vmatmul.bf16.gmra.mxu0 %v1561
      %v1607 = vpop.f32.mrf.mxu0
      %v1608 = vadd.f32 0.0, %v1607
      %v1609 = vpop.f32.mrf.mxu0
      %1610 = vdwg.mxu0
      %v1611 = vmul.f32 %v1582, %v670
      %v1612 = vmul.f32 %v1595, %v671
      %v1613 = vmul.f32 %v1608, %v672
      %v1614 = vsel %vm693, %v1451, 0.0
      %v1615 = vrot.slane %v1614, 4
      %v1616 = vadd.f32 %v1614, %v1615
      %v1617 = vrot.slane %v1616, 2
      %v1618 = vadd.f32 %v1616, %v1617
      %v1619 = vrot.slane %v1618, 1
      %v1620 = vadd.f32 %v1618, %v1619
      %v1621 = vrot.slane %v1452, 4
      %v1622 = vadd.f32 %v1452, %v1621
      %v1623 = vrot.slane %v1622, 2
      %v1624 = vadd.f32 %v1622, %v1623
      %v1625 = vrot.slane %v1624, 1
      %v1626 = vadd.f32 %v1624, %v1625
      %v1627 = vsel %vm696, %v1453, 0.0
      %v1628 = vrot.slane %v1627, 4
      %v1629 = vadd.f32 %v1627, %v1628
      %v1630 = vrot.slane %v1629, 2
      %v1631 = vadd.f32 %v1629, %v1630
      %v1632 = vrot.slane %v1631, 1
      %v1633 = vadd.f32 %v1631, %v1632
      %v1634 = vmul.f32 %v1620, 0.5
      %v1635 = vmul.f32 %v1626, 0.5
      %v1636 = vmul.f32 %v1633, 0.5
      %v1637 = vxor.u32 %v1634, 2147483648
      %v1638 = vxor.u32 %v1635, 2147483648
      %v1639 = vxor.u32 %v1636, 2147483648
      %v1640 = vmul.f32 %v1637, 1.442695
      %v1641 = vpow.pop %v1640
      %v1642 = vmul.f32 %v1638, 1.442695
      %v1643 = vpow.pop %v1642
      %v1644 = vmul.f32 %v1639, 1.442695
      %v1645 = vpow.pop %v1644
      %v1646 = vadd.f32 %v1641, 1.0
      %v1647 = vadd.f32 %v1643, 1.0
      %v1648 = vadd.f32 %v1645, 1.0
      %v1649 = vrcp.pop %v1646
      %v1650 = vmul.f32 %v1646, %v1649
      %v1651 = vsub.f32 1.0, %v1650
      %v1652 = vmul.f32 %v1649, %v1651
      %v1653 = vadd.f32 %v1649, %v1652
      %vm1654 = vweird.f32 %v1646
      %vm1655 = vweird.f32 %v1649
      %vm1656 = vmor %vm1654, %vm1655
      %v1657 = vsel %vm1656, %v1649, %v1653
      %v1658 = vand.u32 2147483647, %v1646
      %vm1659 = vcmp.eq.f32.partialorder %v1658, 8.507059e+37
      %v1660 = vand.u32 %v1646, 2147483648
      %v1661 = vor.u32 1.1754944e-38, %v1660
      %v1662 = vsel %vm1659, %v1661, %v1657
      %v1663 = vmul.f32 1.0, %v1662
      %v1664 = vrcp.pop %v1647
      %v1665 = vmul.f32 %v1647, %v1664
      %v1666 = vsub.f32 1.0, %v1665
      %v1667 = vmul.f32 %v1664, %v1666
      %v1668 = vadd.f32 %v1664, %v1667
      %vm1669 = vweird.f32 %v1647
      %vm1670 = vweird.f32 %v1664
      %vm1671 = vmor %vm1669, %vm1670
      %v1672 = vsel %vm1671, %v1664, %v1668
      %v1673 = vand.u32 2147483647, %v1647
      %vm1674 = vcmp.eq.f32.partialorder %v1673, 8.507059e+37
      %v1675 = vand.u32 %v1647, 2147483648
      %v1676 = vor.u32 1.1754944e-38, %v1675
      %v1677 = vsel %vm1674, %v1676, %v1672
      %v1678 = vmul.f32 1.0, %v1677
      %v1679 = vrcp.pop %v1648
      %v1680 = vmul.f32 %v1648, %v1679
      %v1681 = vsub.f32 1.0, %v1680
      %v1682 = vmul.f32 %v1679, %v1681
      %v1683 = vadd.f32 %v1679, %v1682
      %vm1684 = vweird.f32 %v1648
      %vm1685 = vweird.f32 %v1679
      %vm1686 = vmor %vm1684, %vm1685
      %v1687 = vsel %vm1686, %v1679, %v1683
      %v1688 = vand.u32 2147483647, %v1648
      %vm1689 = vcmp.eq.f32.partialorder %v1688, 8.507059e+37
      %v1690 = vand.u32 %v1648, 2147483648
      %v1691 = vor.u32 1.1754944e-38, %v1690
      %v1692 = vsel %vm1689, %v1691, %v1687
      %v1693 = vmul.f32 1.0, %v1692
      %1697 = vrot.lane.b32.xlu0 %v1663, 109
      %v1698 = vpop.permute.xlu0 %1697
      %1699 = vrot.lane.b32.xlu0 %v1678, 109
      %v1700 = vpop.permute.xlu0 %1699
      %1701 = vrot.lane.b32.xlu0 %v1693, 109
      %v1702 = vpop.permute.xlu0 %1701
      %v1703 = vsel %vm446, %v1698, %v1700
      %v1704 = vsel %vm446, %v1700, %v1702
      %v1708 = vmul.f32 %v1611, %v1703
      %v1709 = vmul.f32 %v1612, %v1704
      %v1710 = vmul.f32 %v1613, %v1702
      %v1711 = vmax.f32 %v1708, 0.0
      %v1712 = vmax.f32 %v1709, 0.0
      %v1713 = vmax.f32 %v1710, 0.0
      %1717 = vrot.lane.b32.xlu0 %v1711, 19
      %v1718 = vpop.permute.xlu0 %1717
      %1719 = vrot.lane.b32.xlu0 %v1712, 19
      %v1720 = vpop.permute.xlu0 %1719
      %1721 = vrot.lane.b32.xlu0 %v1713, 19
      %v1722 = vpop.permute.xlu0 %1721
      %v1723 = vsel %vm334, %v1718, %v1720
      %v1724 = vsel %vm334, %v1720, %v1722
      %1728 = vst.msk [vmem:[#allocation2] sm:$0xff] %vm693, %v1718
      %1729 = vst [vmem:[#allocation2 + $0x8] sm:$0xff] %v1723
      %1730 = vst.msk [vmem:[#allocation2 + $0x10] sm:$0xff] %vm696, %v1724
      %v1731 = vld [vmem:[#allocation2] sm:$0xff]
      %v1732 = vld [vmem:[#allocation2 + $0x8] sm:$0xff]
      %v1733 = vld [vmem:[#allocation2 + $0x10] sm:$0xff]
      %1736 = vrot.lane.b32.xlu0 %v1732, 112
      %v1737 = vpop.permute.xlu0 %1736
      %1738 = vrot.lane.b32.xlu0 %v1733, 112
      %v1739 = vpop.permute.xlu0 %1738
      %v1740 = vsel %vm707, %v1737, %v1739
      %v1743 = vpack.c.bf16 %v1740, %v1731
      %v1744 = vpack.c.bf16 %v1739, %v1732
      %s1745 = scalar_lea.vmem %s5, 288
      %v1746 = vld [vmem:[%s1745] sm:$0xff]
      %v1747 = vld [vmem:[%s1745 + $0x8] sm:$0xff]
      %v1748 = vld [vmem:[%s1745 + $0x10] sm:$0xff]
      %v1749 = vld [vmem:[%s1745 + $0x18] sm:$0xff]
      %v1750 = vld [vmem:[%s1745 + $0x20] sm:$0xff]
      %v1751 = vld [vmem:[%s1745 + $0x28] sm:$0xff]
      %v1752 = vld [vmem:[%s1745 + $0x30] sm:$0xff]
      %v1753 = vld [vmem:[%s1745 + $0x38] sm:$0xff]
      %v1754 = vld [vmem:[%s1745 + $0x40] sm:$0xff]
      %v1755 = vld [vmem:[%s1745 + $0x48] sm:$0xff]
      %v1756 = vld [vmem:[%s1745 + $0x50] sm:$0xff]
      %v1757 = vld [vmem:[%s1745 + $0x58] sm:$0xff]
      %v1758 = vld [vmem:[%s1745 + $0x60] sm:$0xff]
      %v1759 = vld [vmem:[%s1745 + $0x68] sm:$0xff]
      %v1760 = vld [vmem:[%s1745 + $0x70] sm:$0xff]
      %v1761 = vld [vmem:[%s1745 + $0x78] sm:$0xff]
      %v1762 = vld [vmem:[%s1745 + $0x80] sm:$0xff]
      %v1763 = vld [vmem:[%s1745 + $0x88] sm:$0xff]
      %s1764 = scalar_lea.vmem %s6, 4
      %v1765 = vld [vmem:[%s1764] sm:$0x3]
      %v1767 = vperm.slane %v1765, 0
      %v1768 = vperm.slane %v1765, 1
      %1773 = vrot.lane.b32.xlu0 %v1743, 110
      %v1774 = vpop.permute.xlu0 %1773
      %1775 = vrot.lane.b32.xlu0 %v1744, 110
      %v1776 = vpop.permute.xlu0 %1775
      %v1777 = vsel %vm743, %v1774, %v1776
      %v1797 = vunpack.c.l.b16 %v1746
      %v1798 = vunpack.c.h.b16 %v1746
      %v1799 = vunpack.c.l.b16 %v1747
      %v1800 = vunpack.c.h.b16 %v1747
      %v1801 = vunpack.c.l.b16 %v1748
      %v1802 = vunpack.c.h.b16 %v1748
      %v1803 = vunpack.c.l.b16 %v1749
      %v1804 = vunpack.c.h.b16 %v1749
      %v1805 = vunpack.c.l.b16 %v1750
      %v1806 = vunpack.c.h.b16 %v1750
      %v1807 = vunpack.c.l.b16 %v1751
      %v1808 = vunpack.c.h.b16 %v1751
      %v1809 = vunpack.c.l.b16 %v1752
      %v1810 = vunpack.c.h.b16 %v1752
      %v1811 = vunpack.c.l.b16 %v1753
      %v1812 = vunpack.c.h.b16 %v1753
      %v1813 = vunpack.c.l.b16 %v1754
      %v1814 = vunpack.c.h.b16 %v1754
      %v1815 = vunpack.c.l.b16 %v1755
      %v1816 = vunpack.c.h.b16 %v1755
      %v1817 = vunpack.c.l.b16 %v1756
      %v1818 = vunpack.c.h.b16 %v1756
      %v1819 = vunpack.c.l.b16 %v1757
      %v1820 = vunpack.c.h.b16 %v1757
      %v1821 = vunpack.c.l.b16 %v1758
      %v1822 = vunpack.c.h.b16 %v1758
      %v1823 = vunpack.c.l.b16 %v1759
      %v1824 = vunpack.c.h.b16 %v1759
      %v1825 = vunpack.c.l.b16 %v1760
      %v1826 = vunpack.c.h.b16 %v1760
      %v1827 = vunpack.c.l.b16 %v1761
      %v1828 = vunpack.c.h.b16 %v1761
      %v1829 = vunpack.c.l.b16 %v1762
      %v1830 = vunpack.c.h.b16 %v1762
      %v1831 = vunpack.c.l.b16 %v1763
      %v1832 = vunpack.c.h.b16 %v1763
      %v1833 = vpack.c.b16 %v1799, %v1797
      %v1834 = vpack.c.b16 %v1800, %v1798
      %v1835 = vpack.c.b16 %v1803, %v1801
      %v1836 = vpack.c.b16 %v1804, %v1802
      %v1837 = vpack.c.b16 %v1807, %v1805
      %v1838 = vpack.c.b16 %v1808, %v1806
      %v1839 = vpack.c.b16 %v1811, %v1809
      %v1840 = vpack.c.b16 %v1812, %v1810
      %v1841 = vpack.c.b16 %v1815, %v1813
      %v1842 = vpack.c.b16 %v1816, %v1814
      %v1843 = vpack.c.b16 %v1819, %v1817
      %v1844 = vpack.c.b16 %v1820, %v1818
      %v1845 = vpack.c.b16 %v1823, %v1821
      %v1846 = vpack.c.b16 %v1824, %v1822
      %v1847 = vpack.c.b16 %v1827, %v1825
      %v1848 = vpack.c.b16 %v1828, %v1826
      %v1849 = vpack.c.b16 %v1831, %v1829
      %v1850 = vpack.c.b16 %v1832, %v1830
      %v1870 = vsel %vm587, %v1776, 0
      %1872 = vmatpush.bf16.msra.mxu0 %v1847
      %1873 = vmatpush.bf16.msra.mxu0 %v1845
      %1874 = vmatpush.bf16.msra.mxu0 %v1843
      %1875 = vmatpush.bf16.msra.mxu0 %v1841
      %1876 = vmatpush.bf16.msra.mxu0 %v1839
      %1877 = vmatpush.bf16.msra.mxu0 %v1837
      %1878 = vmatpush.bf16.msra.mxu0 %v1835
      %1879 = vmatpush.bf16.msra.mxu0 %v1833
      %1880 = vmatmul.bf16.gmra.mxu0 %v1777
      %v1881 = vpop.f32.mrf.mxu0
      %v1882 = vadd.f32 %v1767, %v1881
      %v1883 = vpop.f32.mrf.mxu0
      %v1884 = vadd.f32 %v1767, %v1883
      %1885 = vdwg.mxu0
      %1886 = vmatpush.bf16.msra.mxu0 0
      %1887 = vmatpush.bf16.msra.mxu0 0
      %1888 = vmatpush.bf16.msra.mxu0 0
      %1889 = vmatpush.bf16.msra.mxu0 0
      %1890 = vmatpush.bf16.msra.mxu0 0
      %1891 = vmatpush.bf16.msra.mxu0 0
      %1892 = vmatpush.bf16.msra.mxu0 0
      %1893 = vmatpush.bf16.msra.mxu0 %v1849
      %1894 = vmatmul.bf16.gmra.mxu0 %v1870
      %v1895 = vpop.f32.mrf.mxu0
      %v1896 = vadd.f32 %v1882, %v1895
      %v1897 = vpop.f32.mrf.mxu0
      %v1898 = vadd.f32 %v1884, %v1897
      %1899 = vdwg.mxu0
      %1900 = vmatpush.bf16.msra.mxu0 %v1848
      %1901 = vmatpush.bf16.msra.mxu0 %v1846
      %1902 = vmatpush.bf16.msra.mxu0 %v1844
      %1903 = vmatpush.bf16.msra.mxu0 %v1842
      %1904 = vmatpush.bf16.msra.mxu0 %v1840
      %1905 = vmatpush.bf16.msra.mxu0 %v1838
      %1906 = vmatpush.bf16.msra.mxu0 %v1836
      %1907 = vmatpush.bf16.msra.mxu0 %v1834
      %1908 = vmatmul.bf16.gmra.mxu0 %v1777
      %v1909 = vpop.f32.mrf.mxu0
      %v1910 = vadd.f32 %v1768, %v1909
      %v1911 = vpop.f32.mrf.mxu0
      %v1912 = vadd.f32 %v1768, %v1911
      %1913 = vdwg.mxu0
      %1914 = vmatpush.bf16.msra.mxu0 0
      %1915 = vmatpush.bf16.msra.mxu0 0
      %1916 = vmatpush.bf16.msra.mxu0 0
      %1917 = vmatpush.bf16.msra.mxu0 0
      %1918 = vmatpush.bf16.msra.mxu0 0
      %1919 = vmatpush.bf16.msra.mxu0 0
      %1920 = vmatpush.bf16.msra.mxu0 0
      %1921 = vmatpush.bf16.msra.mxu0 %v1850
      %1922 = vmatmul.bf16.gmra.mxu0 %v1870
      %v1923 = vpop.f32.mrf.mxu0
      %v1924 = vadd.f32 %v1910, %v1923
      %v1925 = vpop.f32.mrf.mxu0
      %v1926 = vadd.f32 %v1912, %v1925
      %1927 = vdwg.mxu0
      %1932 = vrot.lane.b32.xlu0 %v1896, 18
      %v1933 = vpop.permute.xlu0 %1932
      %1934 = vrot.lane.b32.xlu0 %v1924, 18
      %v1935 = vpop.permute.xlu0 %1934
      %1936 = vrot.lane.b32.xlu0 %v1898, 18
      %v1937 = vpop.permute.xlu0 %1936
      %1938 = vrot.lane.b32.xlu0 %v1926, 18
      %v1939 = vpop.permute.xlu0 %1938
      %v1940 = vsel %vm340, %v1933, %v1935
      %v1941 = vsel %vm340, %v1937, %v1939
      %v1946 = vmul.f32 %v1731, %v1933
      %v1947 = vmul.f32 %v1732, %v1940
      %v1948 = vmul.f32 %v1740, %v1937
      %v1949 = vmul.f32 %v1739, %v1941
      %1950 = vst.msk [vmem:[#allocation4 + $0x30] sm:$0xff] %vm917, %v1946
      %1951 = vst.msk [vmem:[#allocation4 + $0x38] sm:$0xff] %vm919, %v1947
      %1954 = vrot.lane.b32.xlu0 %v1948, 16
      %v1955 = vpop.permute.xlu0 %1954
      %1956 = vrot.lane.b32.xlu0 %v1949, 16
      %v1957 = vpop.permute.xlu0 %1956
      %v1958 = vsel %vm587, %v1955, %v1957
      %1961 = vst.msk [vmem:[#allocation4 + $0x38] sm:$0xff] %vm930, %v1955
      %1962 = vst.msk [vmem:[#allocation4 + $0x40] sm:$0xff] %vm932, %v1958
      %s1963 = scalar_lea.vmem %s4, 8
      %v1964 = vld [vmem:[%s1963] sm:$0xf]
      %v1965 = vld [vmem:[#allocation2] sm:$0xff]
      %v1966 = vld [vmem:[#allocation2 + $0x8] sm:$0xff]
      %v1967 = vld [vmem:[#allocation2 + $0x10] sm:$0xff]
      %1971 = vrot.lane.b32.xlu0 %v1965, 127
      %v1972 = vpop.permute.xlu0 %1971
      %1973 = vrot.lane.b32.xlu0 %v1966, 127
      %v1974 = vpop.permute.xlu0 %1973
      %1975 = vrot.lane.b32.xlu0 %v1967, 127
      %v1976 = vpop.permute.xlu0 %1975
      %v1977 = vsel %vm377, %v1972, %v1974
      %v1978 = vsel %vm377, %v1974, %v1976
      %1982 = vrot.lane.b32.xlu0 %v1965, 126
      %v1983 = vpop.permute.xlu0 %1982
      %1984 = vrot.lane.b32.xlu0 %v1966, 126
      %v1985 = vpop.permute.xlu0 %1984
      %1986 = vrot.lane.b32.xlu0 %v1967, 126
      %v1987 = vpop.permute.xlu0 %1986
      %v1988 = vsel %vm400, %v1983, %v1985
      %v1989 = vsel %vm400, %v1985, %v1987
      %1993 = vrot.lane.b32.xlu0 %v1965, 110
      %v1994 = vpop.permute.xlu0 %1993
      %1995 = vrot.lane.b32.xlu0 %v1966, 110
      %v1996 = vpop.permute.xlu0 %1995
      %1997 = vrot.lane.b32.xlu0 %v1967, 110
      %v1998 = vpop.permute.xlu0 %1997
      %v1999 = vsel %vm423, %v1994, %v1996
      %v2000 = vsel %vm423, %v1996, %v1998
      %2004 = vrot.lane.b32.xlu0 %v1965, 109
      %v2005 = vpop.permute.xlu0 %2004
      %2006 = vrot.lane.b32.xlu0 %v1966, 109
      %v2007 = vpop.permute.xlu0 %2006
      %2008 = vrot.lane.b32.xlu0 %v1967, 109
      %v2009 = vpop.permute.xlu0 %2008
      %v2010 = vsel %vm446, %v2005, %v2007
      %v2011 = vsel %vm446, %v2007, %v2009
      %2015 = vrot.lane.b32.xlu0 %v1965, 108
      %v2016 = vpop.permute.xlu0 %2015
      %2017 = vrot.lane.b32.xlu0 %v1966, 108
      %v2018 = vpop.permute.xlu0 %2017
      %2019 = vrot.lane.b32.xlu0 %v1967, 108
      %v2020 = vpop.permute.xlu0 %2019
      %v2021 = vsel %vm469, %v2016, %v2018
      %v2022 = vsel %vm469, %v2018, %v2020
      %2026 = vrot.lane.b32.xlu0 %v1965, 92
      %v2027 = vpop.permute.xlu0 %2026
      %2028 = vrot.lane.b32.xlu0 %v1966, 92
      %v2029 = vpop.permute.xlu0 %2028
      %2030 = vrot.lane.b32.xlu0 %v1967, 92
      %v2031 = vpop.permute.xlu0 %2030
      %v2032 = vsel %vm492, %v2027, %v2029
      %v2033 = vsel %vm492, %v2029, %v2031
      %2037 = vrot.lane.b32.xlu0 %v1965, 91
      %v2038 = vpop.permute.xlu0 %2037
      %2039 = vrot.lane.b32.xlu0 %v1966, 91
      %v2040 = vpop.permute.xlu0 %2039
      %2041 = vrot.lane.b32.xlu0 %v1967, 91
      %v2042 = vpop.permute.xlu0 %2041
      %v2043 = vsel %vm515, %v2038, %v2040
      %v2044 = vsel %vm515, %v2040, %v2042
      %2048 = vrot.lane.b32.xlu0 %v1965, 90
      %v2049 = vpop.permute.xlu0 %2048
      %2050 = vrot.lane.b32.xlu0 %v1966, 90
      %v2051 = vpop.permute.xlu0 %2050
      %2052 = vrot.lane.b32.xlu0 %v1967, 90
      %v2053 = vpop.permute.xlu0 %2052
      %v2054 = vsel %vm538, %v2049, %v2051
      %v2055 = vsel %vm538, %v2051, %v2053
      %v2059 = vpack.c.bf16 %v1977, %v1965
      %v2060 = vpack.c.bf16 %v1978, %v1966
      %v2061 = vpack.c.bf16 %v1976, %v1967
      %v2062 = vpack.c.bf16 %v1999, %v1988
      %v2063 = vpack.c.bf16 %v2000, %v1989
      %v2064 = vpack.c.bf16 %v1998, %v1987
      %v2065 = vpack.c.bf16 %v2021, %v2010
      %v2066 = vpack.c.bf16 %v2022, %v2011
      %v2067 = vpack.c.bf16 %v2020, %v2009
      %v2068 = vpack.c.bf16 %v2043, %v2032
      %v2069 = vpack.c.bf16 %v2044, %v2033
      %v2070 = vpack.c.bf16 %v2042, %v2031
      %v2071 = vpack.c.bf16 %v2054, %v2054
      %v2072 = vpack.c.bf16 %v2055, %v2055
      %v2073 = vpack.c.bf16 %v2053, %v2053
      %v2075 = vsel %vm1044, %v1964, 0
      %v2078 = vsel %vm1048, %v2071, 0
      %v2081 = vsel %vm1048, %v2072, 0
      %v2084 = vsel %vm1048, %v2073, 0
      %2086 = vmatpush.bf16.msra.mxu0 0
      %2087 = vmatpush.bf16.msra.mxu0 0
      %2088 = vmatpush.bf16.msra.mxu0 0
      %2089 = vmatpush.bf16.msra.mxu0 %v2078
      %2090 = vmatpush.bf16.msra.mxu0 %v2068
      %2091 = vmatpush.bf16.msra.mxu0 %v2065
      %2092 = vmatpush.bf16.msra.mxu0 %v2062
      %2093 = vmatpush.bf16.msra.mxu0 %v2059
      %2094 = vmatmul.bf16.gmra.mxu0 %v2075
      %v2095 = vpop.f32.mrf.mxu0
      %v2096 = vadd.f32 0.0, %v2095
      %v2097 = vpop.f32.mrf.mxu0
      %2098 = vdwg.mxu0
      %2099 = vmatpush.bf16.msra.mxu0 0
      %2100 = vmatpush.bf16.msra.mxu0 0
      %2101 = vmatpush.bf16.msra.mxu0 0
      %2102 = vmatpush.bf16.msra.mxu0 %v2081
      %2103 = vmatpush.bf16.msra.mxu0 %v2069
      %2104 = vmatpush.bf16.msra.mxu0 %v2066
      %2105 = vmatpush.bf16.msra.mxu0 %v2063
      %2106 = vmatpush.bf16.msra.mxu0 %v2060
      %2107 = vmatmul.bf16.gmra.mxu0 %v2075
      %v2108 = vpop.f32.mrf.mxu0
      %v2109 = vadd.f32 0.0, %v2108
      %v2110 = vpop.f32.mrf.mxu0
      %2111 = vdwg.mxu0
      %2112 = vmatpush.bf16.msra.mxu0 0
      %2113 = vmatpush.bf16.msra.mxu0 0
      %2114 = vmatpush.bf16.msra.mxu0 0
      %2115 = vmatpush.bf16.msra.mxu0 %v2084
      %2116 = vmatpush.bf16.msra.mxu0 %v2070
      %2117 = vmatpush.bf16.msra.mxu0 %v2067
      %2118 = vmatpush.bf16.msra.mxu0 %v2064
      %2119 = vmatpush.bf16.msra.mxu0 %v2061
      %2120 = vmatmul.bf16.gmra.mxu0 %v2075
      %v2121 = vpop.f32.mrf.mxu0
      %v2122 = vadd.f32 0.0, %v2121
      %v2123 = vpop.f32.mrf.mxu0
      %2124 = vdwg.mxu0
      %v2125 = vmul.f32 %v2096, %v670
      %v2126 = vmul.f32 %v2109, %v671
      %v2127 = vmul.f32 %v2122, %v672
      %v2128 = vsel %vm693, %v1965, 0.0
      %v2129 = vrot.slane %v2128, 4
      %v2130 = vadd.f32 %v2128, %v2129
      %v2131 = vrot.slane %v2130, 2
      %v2132 = vadd.f32 %v2130, %v2131
      %v2133 = vrot.slane %v2132, 1
      %v2134 = vadd.f32 %v2132, %v2133
      %v2135 = vrot.slane %v1966, 4
      %v2136 = vadd.f32 %v1966, %v2135
      %v2137 = vrot.slane %v2136, 2
      %v2138 = vadd.f32 %v2136, %v2137
      %v2139 = vrot.slane %v2138, 1
      %v2140 = vadd.f32 %v2138, %v2139
      %v2141 = vsel %vm696, %v1967, 0.0
      %v2142 = vrot.slane %v2141, 4
      %v2143 = vadd.f32 %v2141, %v2142
      %v2144 = vrot.slane %v2143, 2
      %v2145 = vadd.f32 %v2143, %v2144
      %v2146 = vrot.slane %v2145, 1
      %v2147 = vadd.f32 %v2145, %v2146
      %v2148 = vmul.f32 %v2134, 0.5
      %v2149 = vmul.f32 %v2140, 0.5
      %v2150 = vmul.f32 %v2147, 0.5
      %v2151 = vxor.u32 %v2148, 2147483648
      %v2152 = vxor.u32 %v2149, 2147483648
      %v2153 = vxor.u32 %v2150, 2147483648
      %v2154 = vmul.f32 %v2151, 1.442695
      %v2155 = vpow.pop %v2154
      %v2156 = vmul.f32 %v2152, 1.442695
      %v2157 = vpow.pop %v2156
      %v2158 = vmul.f32 %v2153, 1.442695
      %v2159 = vpow.pop %v2158
      %v2160 = vadd.f32 %v2155, 1.0
      %v2161 = vadd.f32 %v2157, 1.0
      %v2162 = vadd.f32 %v2159, 1.0
      %v2163 = vrcp.pop %v2160
      %v2164 = vmul.f32 %v2160, %v2163
      %v2165 = vsub.f32 1.0, %v2164
      %v2166 = vmul.f32 %v2163, %v2165
      %v2167 = vadd.f32 %v2163, %v2166
      %vm2168 = vweird.f32 %v2160
      %vm2169 = vweird.f32 %v2163
      %vm2170 = vmor %vm2168, %vm2169
      %v2171 = vsel %vm2170, %v2163, %v2167
      %v2172 = vand.u32 2147483647, %v2160
      %vm2173 = vcmp.eq.f32.partialorder %v2172, 8.507059e+37
      %v2174 = vand.u32 %v2160, 2147483648
      %v2175 = vor.u32 1.1754944e-38, %v2174
      %v2176 = vsel %vm2173, %v2175, %v2171
      %v2177 = vmul.f32 1.0, %v2176
      %v2178 = vrcp.pop %v2161
      %v2179 = vmul.f32 %v2161, %v2178
      %v2180 = vsub.f32 1.0, %v2179
      %v2181 = vmul.f32 %v2178, %v2180
      %v2182 = vadd.f32 %v2178, %v2181
      %vm2183 = vweird.f32 %v2161
      %vm2184 = vweird.f32 %v2178
      %vm2185 = vmor %vm2183, %vm2184
      %v2186 = vsel %vm2185, %v2178, %v2182
      %v2187 = vand.u32 2147483647, %v2161
      %vm2188 = vcmp.eq.f32.partialorder %v2187, 8.507059e+37
      %v2189 = vand.u32 %v2161, 2147483648
      %v2190 = vor.u32 1.1754944e-38, %v2189
      %v2191 = vsel %vm2188, %v2190, %v2186
      %v2192 = vmul.f32 1.0, %v2191
      %v2193 = vrcp.pop %v2162
      %v2194 = vmul.f32 %v2162, %v2193
      %v2195 = vsub.f32 1.0, %v2194
      %v2196 = vmul.f32 %v2193, %v2195
      %v2197 = vadd.f32 %v2193, %v2196
      %vm2198 = vweird.f32 %v2162
      %vm2199 = vweird.f32 %v2193
      %vm2200 = vmor %vm2198, %vm2199
      %v2201 = vsel %vm2200, %v2193, %v2197
      %v2202 = vand.u32 2147483647, %v2162
      %vm2203 = vcmp.eq.f32.partialorder %v2202, 8.507059e+37
      %v2204 = vand.u32 %v2162, 2147483648
      %v2205 = vor.u32 1.1754944e-38, %v2204
      %v2206 = vsel %vm2203, %v2205, %v2201
      %v2207 = vmul.f32 1.0, %v2206
      %2211 = vrot.lane.b32.xlu0 %v2177, 109
      %v2212 = vpop.permute.xlu0 %2211
      %2213 = vrot.lane.b32.xlu0 %v2192, 109
      %v2214 = vpop.permute.xlu0 %2213
      %2215 = vrot.lane.b32.xlu0 %v2207, 109
      %v2216 = vpop.permute.xlu0 %2215
      %v2217 = vsel %vm446, %v2212, %v2214
      %v2218 = vsel %vm446, %v2214, %v2216
      %v2222 = vmul.f32 %v2125, %v2217
      %v2223 = vmul.f32 %v2126, %v2218
      %v2224 = vmul.f32 %v2127, %v2216
      %v2225 = vmax.f32 %v2222, 0.0
      %v2226 = vmax.f32 %v2223, 0.0
      %v2227 = vmax.f32 %v2224, 0.0
      %2231 = vrot.lane.b32.xlu0 %v2225, 19
      %v2232 = vpop.permute.xlu0 %2231
      %2233 = vrot.lane.b32.xlu0 %v2226, 19
      %v2234 = vpop.permute.xlu0 %2233
      %2235 = vrot.lane.b32.xlu0 %v2227, 19
      %v2236 = vpop.permute.xlu0 %2235
      %v2237 = vsel %vm334, %v2232, %v2234
      %v2238 = vsel %vm334, %v2234, %v2236
      %2242 = vst.msk [vmem:[#allocation3] sm:$0xff] %vm693, %v2232
      %2243 = vst [vmem:[#allocation3 + $0x8] sm:$0xff] %v2237
      %2244 = vst.msk [vmem:[#allocation3 + $0x10] sm:$0xff] %vm696, %v2238
      %v2245 = vld [vmem:[#allocation3] sm:$0xff]
      %v2246 = vld [vmem:[#allocation3 + $0x8] sm:$0xff]
      %v2247 = vld [vmem:[#allocation3 + $0x10] sm:$0xff]
      %2250 = vrot.lane.b32.xlu0 %v2246, 112
      %v2251 = vpop.permute.xlu0 %2250
      %2252 = vrot.lane.b32.xlu0 %v2247, 112
      %v2253 = vpop.permute.xlu0 %2252
      %v2254 = vsel %vm707, %v2251, %v2253
      %v2257 = vpack.c.bf16 %v2254, %v2245
      %v2258 = vpack.c.bf16 %v2253, %v2246
      %s2259 = scalar_lea.vmem %s5, 432
      %v2260 = vld [vmem:[%s2259] sm:$0xff]
      %v2261 = vld [vmem:[%s2259 + $0x8] sm:$0xff]
      %v2262 = vld [vmem:[%s2259 + $0x10] sm:$0xff]
      %v2263 = vld [vmem:[%s2259 + $0x18] sm:$0xff]
      %v2264 = vld [vmem:[%s2259 + $0x20] sm:$0xff]
      %v2265 = vld [vmem:[%s2259 + $0x28] sm:$0xff]
      %v2266 = vld [vmem:[%s2259 + $0x30] sm:$0xff]
      %v2267 = vld [vmem:[%s2259 + $0x38] sm:$0xff]
      %v2268 = vld [vmem:[%s2259 + $0x40] sm:$0xff]
      %v2269 = vld [vmem:[%s2259 + $0x48] sm:$0xff]
      %v2270 = vld [vmem:[%s2259 + $0x50] sm:$0xff]
      %v2271 = vld [vmem:[%s2259 + $0x58] sm:$0xff]
      %v2272 = vld [vmem:[%s2259 + $0x60] sm:$0xff]
      %v2273 = vld [vmem:[%s2259 + $0x68] sm:$0xff]
      %v2274 = vld [vmem:[%s2259 + $0x70] sm:$0xff]
      %v2275 = vld [vmem:[%s2259 + $0x78] sm:$0xff]
      %v2276 = vld [vmem:[%s2259 + $0x80] sm:$0xff]
      %v2277 = vld [vmem:[%s2259 + $0x88] sm:$0xff]
      %s2278 = scalar_lea.vmem %s6, 6
      %v2279 = vld [vmem:[%s2278] sm:$0x3]
      %v2281 = vperm.slane %v2279, 0
      %v2282 = vperm.slane %v2279, 1
      %2287 = vrot.lane.b32.xlu0 %v2257, 110
      %v2288 = vpop.permute.xlu0 %2287
      %2289 = vrot.lane.b32.xlu0 %v2258, 110
      %v2290 = vpop.permute.xlu0 %2289
      %v2291 = vsel %vm743, %v2288, %v2290
      %v2311 = vunpack.c.l.b16 %v2260
      %v2312 = vunpack.c.h.b16 %v2260
      %v2313 = vunpack.c.l.b16 %v2261
      %v2314 = vunpack.c.h.b16 %v2261
      %v2315 = vunpack.c.l.b16 %v2262
      %v2316 = vunpack.c.h.b16 %v2262
      %v2317 = vunpack.c.l.b16 %v2263
      %v2318 = vunpack.c.h.b16 %v2263
      %v2319 = vunpack.c.l.b16 %v2264
      %v2320 = vunpack.c.h.b16 %v2264
      %v2321 = vunpack.c.l.b16 %v2265
      %v2322 = vunpack.c.h.b16 %v2265
      %v2323 = vunpack.c.l.b16 %v2266
      %v2324 = vunpack.c.h.b16 %v2266
      %v2325 = vunpack.c.l.b16 %v2267
      %v2326 = vunpack.c.h.b16 %v2267
      %v2327 = vunpack.c.l.b16 %v2268
      %v2328 = vunpack.c.h.b16 %v2268
      %v2329 = vunpack.c.l.b16 %v2269
      %v2330 = vunpack.c.h.b16 %v2269
      %v2331 = vunpack.c.l.b16 %v2270
      %v2332 = vunpack.c.h.b16 %v2270
      %v2333 = vunpack.c.l.b16 %v2271
      %v2334 = vunpack.c.h.b16 %v2271
      %v2335 = vunpack.c.l.b16 %v2272
      %v2336 = vunpack.c.h.b16 %v2272
      %v2337 = vunpack.c.l.b16 %v2273
      %v2338 = vunpack.c.h.b16 %v2273
      %v2339 = vunpack.c.l.b16 %v2274
      %v2340 = vunpack.c.h.b16 %v2274
      %v2341 = vunpack.c.l.b16 %v2275
      %v2342 = vunpack.c.h.b16 %v2275
      %v2343 = vunpack.c.l.b16 %v2276
      %v2344 = vunpack.c.h.b16 %v2276
      %v2345 = vunpack.c.l.b16 %v2277
      %v2346 = vunpack.c.h.b16 %v2277
      %v2347 = vpack.c.b16 %v2313, %v2311
      %v2348 = vpack.c.b16 %v2314, %v2312
      %v2349 = vpack.c.b16 %v2317, %v2315
      %v2350 = vpack.c.b16 %v2318, %v2316
      %v2351 = vpack.c.b16 %v2321, %v2319
      %v2352 = vpack.c.b16 %v2322, %v2320
      %v2353 = vpack.c.b16 %v2325, %v2323
      %v2354 = vpack.c.b16 %v2326, %v2324
      %v2355 = vpack.c.b16 %v2329, %v2327
      %v2356 = vpack.c.b16 %v2330, %v2328
      %v2357 = vpack.c.b16 %v2333, %v2331
      %v2358 = vpack.c.b16 %v2334, %v2332
      %v2359 = vpack.c.b16 %v2337, %v2335
      %v2360 = vpack.c.b16 %v2338, %v2336
      %v2361 = vpack.c.b16 %v2341, %v2339
      %v2362 = vpack.c.b16 %v2342, %v2340
      %v2363 = vpack.c.b16 %v2345, %v2343
      %v2364 = vpack.c.b16 %v2346, %v2344
      %v2384 = vsel %vm587, %v2290, 0
      %2386 = vmatpush.bf16.msra.mxu0 %v2361
      %2387 = vmatpush.bf16.msra.mxu0 %v2359
      %2388 = vmatpush.bf16.msra.mxu0 %v2357
      %2389 = vmatpush.bf16.msra.mxu0 %v2355
      %2390 = vmatpush.bf16.msra.mxu0 %v2353
      %2391 = vmatpush.bf16.msra.mxu0 %v2351
      %2392 = vmatpush.bf16.msra.mxu0 %v2349
      %2393 = vmatpush.bf16.msra.mxu0 %v2347
      %2394 = vmatmul.bf16.gmra.mxu0 %v2291
      %v2395 = vpop.f32.mrf.mxu0
      %v2396 = vadd.f32 %v2281, %v2395
      %v2397 = vpop.f32.mrf.mxu0
      %v2398 = vadd.f32 %v2281, %v2397
      %2399 = vdwg.mxu0
      %2400 = vmatpush.bf16.msra.mxu0 0
      %2401 = vmatpush.bf16.msra.mxu0 0
      %2402 = vmatpush.bf16.msra.mxu0 0
      %2403 = vmatpush.bf16.msra.mxu0 0
      %2404 = vmatpush.bf16.msra.mxu0 0
      %2405 = vmatpush.bf16.msra.mxu0 0
      %2406 = vmatpush.bf16.msra.mxu0 0
      %2407 = vmatpush.bf16.msra.mxu0 %v2363
      %2408 = vmatmul.bf16.gmra.mxu0 %v2384
      %v2409 = vpop.f32.mrf.mxu0
      %v2410 = vadd.f32 %v2396, %v2409
      %v2411 = vpop.f32.mrf.mxu0
      %v2412 = vadd.f32 %v2398, %v2411
      %2413 = vdwg.mxu0
      %2414 = vmatpush.bf16.msra.mxu0 %v2362
      %2415 = vmatpush.bf16.msra.mxu0 %v2360
      %2416 = vmatpush.bf16.msra.mxu0 %v2358
      %2417 = vmatpush.bf16.msra.mxu0 %v2356
      %2418 = vmatpush.bf16.msra.mxu0 %v2354
      %2419 = vmatpush.bf16.msra.mxu0 %v2352
      %2420 = vmatpush.bf16.msra.mxu0 %v2350
      %2421 = vmatpush.bf16.msra.mxu0 %v2348
      %2422 = vmatmul.bf16.gmra.mxu0 %v2291
      %v2423 = vpop.f32.mrf.mxu0
      %v2424 = vadd.f32 %v2282, %v2423
      %v2425 = vpop.f32.mrf.mxu0
      %v2426 = vadd.f32 %v2282, %v2425
      %2427 = vdwg.mxu0
      %2428 = vmatpush.bf16.msra.mxu0 0
      %2429 = vmatpush.bf16.msra.mxu0 0
      %2430 = vmatpush.bf16.msra.mxu0 0
      %2431 = vmatpush.bf16.msra.mxu0 0
      %2432 = vmatpush.bf16.msra.mxu0 0
      %2433 = vmatpush.bf16.msra.mxu0 0
      %2434 = vmatpush.bf16.msra.mxu0 0
      %2435 = vmatpush.bf16.msra.mxu0 %v2364
      %2436 = vmatmul.bf16.gmra.mxu0 %v2384
      %v2437 = vpop.f32.mrf.mxu0
      %v2438 = vadd.f32 %v2424, %v2437
      %v2439 = vpop.f32.mrf.mxu0
      %v2440 = vadd.f32 %v2426, %v2439
      %2441 = vdwg.mxu0
      %2446 = vrot.lane.b32.xlu0 %v2410, 18
      %v2447 = vpop.permute.xlu0 %2446
      %2448 = vrot.lane.b32.xlu0 %v2438, 18
      %v2449 = vpop.permute.xlu0 %2448
      %2450 = vrot.lane.b32.xlu0 %v2412, 18
      %v2451 = vpop.permute.xlu0 %2450
      %2452 = vrot.lane.b32.xlu0 %v2440, 18
      %v2453 = vpop.permute.xlu0 %2452
      %v2454 = vsel %vm340, %v2447, %v2449
      %v2455 = vsel %vm340, %v2451, %v2453
      %v2460 = vmul.f32 %v2245, %v2447
      %v2461 = vmul.f32 %v2246, %v2454
      %v2462 = vmul.f32 %v2254, %v2451
      %v2463 = vmul.f32 %v2253, %v2455
      %2464 = vst.msk [vmem:[#allocation4 + $0x48] sm:$0xff] %vm917, %v2460
      %2465 = vst.msk [vmem:[#allocation4 + $0x50] sm:$0xff] %vm919, %v2461
      %2468 = vrot.lane.b32.xlu0 %v2462, 16
      %v2469 = vpop.permute.xlu0 %2468
      %2470 = vrot.lane.b32.xlu0 %v2463, 16
      %v2471 = vpop.permute.xlu0 %2470
      %v2472 = vsel %vm587, %v2469, %v2471
      %2475 = vst.msk [vmem:[#allocation4 + $0x50] sm:$0xff] %vm930, %v2469
      %2476 = vst.msk [vmem:[#allocation4 + $0x58] sm:$0xff] %vm932, %v2472
      %v2477 = vld [vmem:[%s7] sm:$0xff]
      %v2478 = vld [vmem:[%s7 + $0x8] sm:$0xf]
      %v2479 = vld [vmem:[%s7 + $0xc] sm:$0xff]
      %v2480 = vld [vmem:[%s7 + $0x14] sm:$0xf]
      %v2481 = vld [vmem:[%s8] sm:$0xff]
      %v2482 = vld [vmem:[%s8 + $0x8] sm:$0xff]
      %v2483 = vld [vmem:[#allocation4] sm:$0xff]
      %v2484 = vld [vmem:[#allocation4 + $0x8] sm:$0xff]
      %v2485 = vld [vmem:[#allocation4 + $0x10] sm:$0xff]
      %v2486 = vld [vmem:[#allocation4 + $0x18] sm:$0xff]
      %v2487 = vld [vmem:[#allocation4 + $0x20] sm:$0xff]
      %v2488 = vld [vmem:[#allocation4 + $0x28] sm:$0xff]
      %v2489 = vld [vmem:[#allocation4 + $0x30] sm:$0xff]
      %v2490 = vld [vmem:[#allocation4 + $0x38] sm:$0xff]
      %v2491 = vld [vmem:[#allocation4 + $0x40] sm:$0xff]
      %v2492 = vld [vmem:[#allocation4 + $0x48] sm:$0xff]
      %v2493 = vld [vmem:[#allocation4 + $0x50] sm:$0xff]
      %v2494 = vld [vmem:[#allocation4 + $0x58] sm:$0xff]
      %2507 = vrot.lane.b32.xlu0 %v2483, 127
      %v2508 = vpop.permute.xlu0 %2507
      %2509 = vrot.lane.b32.xlu0 %v2484, 127
      %v2510 = vpop.permute.xlu0 %2509
      %2511 = vrot.lane.b32.xlu0 %v2485, 127
      %v2512 = vpop.permute.xlu0 %2511
      %2513 = vrot.lane.b32.xlu0 %v2486, 127
      %v2514 = vpop.permute.xlu0 %2513
      %2515 = vrot.lane.b32.xlu0 %v2487, 127
      %v2516 = vpop.permute.xlu0 %2515
      %2517 = vrot.lane.b32.xlu0 %v2488, 127
      %v2518 = vpop.permute.xlu0 %2517
      %2519 = vrot.lane.b32.xlu0 %v2489, 127
      %v2520 = vpop.permute.xlu0 %2519
      %2521 = vrot.lane.b32.xlu0 %v2490, 127
      %v2522 = vpop.permute.xlu0 %2521
      %2523 = vrot.lane.b32.xlu0 %v2491, 127
      %v2524 = vpop.permute.xlu0 %2523
      %2525 = vrot.lane.b32.xlu0 %v2492, 127
      %v2526 = vpop.permute.xlu0 %2525
      %2527 = vrot.lane.b32.xlu0 %v2493, 127
      %v2528 = vpop.permute.xlu0 %2527
      %2529 = vrot.lane.b32.xlu0 %v2494, 127
      %v2530 = vpop.permute.xlu0 %2529
      %v2531 = vsel %vm377, %v2508, %v2510
      %v2532 = vsel %vm377, %v2510, %v2512
      %v2533 = vsel %vm377, %v2514, %v2516
      %v2534 = vsel %vm377, %v2516, %v2518
      %v2535 = vsel %vm377, %v2520, %v2522
      %v2536 = vsel %vm377, %v2522, %v2524
      %v2537 = vsel %vm377, %v2526, %v2528
      %v2538 = vsel %vm377, %v2528, %v2530
      %2551 = vrot.lane.b32.xlu0 %v2483, 126
      %v2552 = vpop.permute.xlu0 %2551
      %2553 = vrot.lane.b32.xlu0 %v2484, 126
      %v2554 = vpop.permute.xlu0 %2553
      %2555 = vrot.lane.b32.xlu0 %v2485, 126
      %v2556 = vpop.permute.xlu0 %2555
      %2557 = vrot.lane.b32.xlu0 %v2486, 126
      %v2558 = vpop.permute.xlu0 %2557
      %2559 = vrot.lane.b32.xlu0 %v2487, 126
      %v2560 = vpop.permute.xlu0 %2559
      %2561 = vrot.lane.b32.xlu0 %v2488, 126
      %v2562 = vpop.permute.xlu0 %2561
      %2563 = vrot.lane.b32.xlu0 %v2489, 126
      %v2564 = vpop.permute.xlu0 %2563
      %2565 = vrot.lane.b32.xlu0 %v2490, 126
      %v2566 = vpop.permute.xlu0 %2565
      %2567 = vrot.lane.b32.xlu0 %v2491, 126
      %v2568 = vpop.permute.xlu0 %2567
      %2569 = vrot.lane.b32.xlu0 %v2492, 126
      %v2570 = vpop.permute.xlu0 %2569
      %2571 = vrot.lane.b32.xlu0 %v2493, 126
      %v2572 = vpop.permute.xlu0 %2571
      %2573 = vrot.lane.b32.xlu0 %v2494, 126
      %v2574 = vpop.permute.xlu0 %2573
      %v2575 = vsel %vm400, %v2552, %v2554
      %v2576 = vsel %vm400, %v2554, %v2556
      %v2577 = vsel %vm400, %v2558, %v2560
      %v2578 = vsel %vm400, %v2560, %v2562
      %v2579 = vsel %vm400, %v2564, %v2566
      %v2580 = vsel %vm400, %v2566, %v2568
      %v2581 = vsel %vm400, %v2570, %v2572
      %v2582 = vsel %vm400, %v2572, %v2574
      %2595 = vrot.lane.b32.xlu0 %v2483, 110
      %v2596 = vpop.permute.xlu0 %2595
      %2597 = vrot.lane.b32.xlu0 %v2484, 110
      %v2598 = vpop.permute.xlu0 %2597
      %2599 = vrot.lane.b32.xlu0 %v2485, 110
      %v2600 = vpop.permute.xlu0 %2599
      %2601 = vrot.lane.b32.xlu0 %v2486, 110
      %v2602 = vpop.permute.xlu0 %2601
      %2603 = vrot.lane.b32.xlu0 %v2487, 110
      %v2604 = vpop.permute.xlu0 %2603
      %2605 = vrot.lane.b32.xlu0 %v2488, 110
      %v2606 = vpop.permute.xlu0 %2605
      %2607 = vrot.lane.b32.xlu0 %v2489, 110
      %v2608 = vpop.permute.xlu0 %2607
      %2609 = vrot.lane.b32.xlu0 %v2490, 110
      %v2610 = vpop.permute.xlu0 %2609
      %2611 = vrot.lane.b32.xlu0 %v2491, 110
      %v2612 = vpop.permute.xlu0 %2611
      %2613 = vrot.lane.b32.xlu0 %v2492, 110
      %v2614 = vpop.permute.xlu0 %2613
      %2615 = vrot.lane.b32.xlu0 %v2493, 110
      %v2616 = vpop.permute.xlu0 %2615
      %2617 = vrot.lane.b32.xlu0 %v2494, 110
      %v2618 = vpop.permute.xlu0 %2617
      %v2619 = vsel %vm423, %v2596, %v2598
      %v2620 = vsel %vm423, %v2598, %v2600
      %v2621 = vsel %vm423, %v2602, %v2604
      %v2622 = vsel %vm423, %v2604, %v2606
      %v2623 = vsel %vm423, %v2608, %v2610
      %v2624 = vsel %vm423, %v2610, %v2612
      %v2625 = vsel %vm423, %v2614, %v2616
      %v2626 = vsel %vm423, %v2616, %v2618
      %2639 = vrot.lane.b32.xlu0 %v2483, 109
      %v2640 = vpop.permute.xlu0 %2639
      %2641 = vrot.lane.b32.xlu0 %v2484, 109
      %v2642 = vpop.permute.xlu0 %2641
      %2643 = vrot.lane.b32.xlu0 %v2485, 109
      %v2644 = vpop.permute.xlu0 %2643
      %2645 = vrot.lane.b32.xlu0 %v2486, 109
      %v2646 = vpop.permute.xlu0 %2645
      %2647 = vrot.lane.b32.xlu0 %v2487, 109
      %v2648 = vpop.permute.xlu0 %2647
      %2649 = vrot.lane.b32.xlu0 %v2488, 109
      %v2650 = vpop.permute.xlu0 %2649
      %2651 = vrot.lane.b32.xlu0 %v2489, 109
      %v2652 = vpop.permute.xlu0 %2651
      %2653 = vrot.lane.b32.xlu0 %v2490, 109
      %v2654 = vpop.permute.xlu0 %2653
      %2655 = vrot.lane.b32.xlu0 %v2491, 109
      %v2656 = vpop.permute.xlu0 %2655
      %2657 = vrot.lane.b32.xlu0 %v2492, 109
      %v2658 = vpop.permute.xlu0 %2657
      %2659 = vrot.lane.b32.xlu0 %v2493, 109
      %v2660 = vpop.permute.xlu0 %2659
      %2661 = vrot.lane.b32.xlu0 %v2494, 109
      %v2662 = vpop.permute.xlu0 %2661
      %v2663 = vsel %vm446, %v2640, %v2642
      %v2664 = vsel %vm446, %v2642, %v2644
      %v2665 = vsel %vm446, %v2646, %v2648
      %v2666 = vsel %vm446, %v2648, %v2650
      %v2667 = vsel %vm446, %v2652, %v2654
      %v2668 = vsel %vm446, %v2654, %v2656
      %v2669 = vsel %vm446, %v2658, %v2660
      %v2670 = vsel %vm446, %v2660, %v2662
      %2683 = vrot.lane.b32.xlu0 %v2483, 108
      %v2684 = vpop.permute.xlu0 %2683
      %2685 = vrot.lane.b32.xlu0 %v2484, 108
      %v2686 = vpop.permute.xlu0 %2685
      %2687 = vrot.lane.b32.xlu0 %v2485, 108
      %v2688 = vpop.permute.xlu0 %2687
      %2689 = vrot.lane.b32.xlu0 %v2486, 108
      %v2690 = vpop.permute.xlu0 %2689
      %2691 = vrot.lane.b32.xlu0 %v2487, 108
      %v2692 = vpop.permute.xlu0 %2691
      %2693 = vrot.lane.b32.xlu0 %v2488, 108
      %v2694 = vpop.permute.xlu0 %2693
      %2695 = vrot.lane.b32.xlu0 %v2489, 108
      %v2696 = vpop.permute.xlu0 %2695
      %2697 = vrot.lane.b32.xlu0 %v2490, 108
      %v2698 = vpop.permute.xlu0 %2697
      %2699 = vrot.lane.b32.xlu0 %v2491, 108
      %v2700 = vpop.permute.xlu0 %2699
      %2701 = vrot.lane.b32.xlu0 %v2492, 108
      %v2702 = vpop.permute.xlu0 %2701
      %2703 = vrot.lane.b32.xlu0 %v2493, 108
      %v2704 = vpop.permute.xlu0 %2703
      %2705 = vrot.lane.b32.xlu0 %v2494, 108
      %v2706 = vpop.permute.xlu0 %2705
      %v2707 = vsel %vm469, %v2684, %v2686
      %v2708 = vsel %vm469, %v2686, %v2688
      %v2709 = vsel %vm469, %v2690, %v2692
      %v2710 = vsel %vm469, %v2692, %v2694
      %v2711 = vsel %vm469, %v2696, %v2698
      %v2712 = vsel %vm469, %v2698, %v2700
      %v2713 = vsel %vm469, %v2702, %v2704
      %v2714 = vsel %vm469, %v2704, %v2706
      %2727 = vrot.lane.b32.xlu0 %v2483, 92
      %v2728 = vpop.permute.xlu0 %2727
      %2729 = vrot.lane.b32.xlu0 %v2484, 92
      %v2730 = vpop.permute.xlu0 %2729
      %2731 = vrot.lane.b32.xlu0 %v2485, 92
      %v2732 = vpop.permute.xlu0 %2731
      %2733 = vrot.lane.b32.xlu0 %v2486, 92
      %v2734 = vpop.permute.xlu0 %2733
      %2735 = vrot.lane.b32.xlu0 %v2487, 92
      %v2736 = vpop.permute.xlu0 %2735
      %2737 = vrot.lane.b32.xlu0 %v2488, 92
      %v2738 = vpop.permute.xlu0 %2737
      %2739 = vrot.lane.b32.xlu0 %v2489, 92
      %v2740 = vpop.permute.xlu0 %2739
      %2741 = vrot.lane.b32.xlu0 %v2490, 92
      %v2742 = vpop.permute.xlu0 %2741
      %2743 = vrot.lane.b32.xlu0 %v2491, 92
      %v2744 = vpop.permute.xlu0 %2743
      %2745 = vrot.lane.b32.xlu0 %v2492, 92
      %v2746 = vpop.permute.xlu0 %2745
      %2747 = vrot.lane.b32.xlu0 %v2493, 92
      %v2748 = vpop.permute.xlu0 %2747
      %2749 = vrot.lane.b32.xlu0 %v2494, 92
      %v2750 = vpop.permute.xlu0 %2749
      %v2751 = vsel %vm492, %v2728, %v2730
      %v2752 = vsel %vm492, %v2730, %v2732
      %v2753 = vsel %vm492, %v2734, %v2736
      %v2754 = vsel %vm492, %v2736, %v2738
      %v2755 = vsel %vm492, %v2740, %v2742
      %v2756 = vsel %vm492, %v2742, %v2744
      %v2757 = vsel %vm492, %v2746, %v2748
      %v2758 = vsel %vm492, %v2748, %v2750
      %2771 = vrot.lane.b32.xlu0 %v2483, 91
      %v2772 = vpop.permute.xlu0 %2771
      %2773 = vrot.lane.b32.xlu0 %v2484, 91
      %v2774 = vpop.permute.xlu0 %2773
      %2775 = vrot.lane.b32.xlu0 %v2485, 91
      %v2776 = vpop.permute.xlu0 %2775
      %2777 = vrot.lane.b32.xlu0 %v2486, 91
      %v2778 = vpop.permute.xlu0 %2777
      %2779 = vrot.lane.b32.xlu0 %v2487, 91
      %v2780 = vpop.permute.xlu0 %2779
      %2781 = vrot.lane.b32.xlu0 %v2488, 91
      %v2782 = vpop.permute.xlu0 %2781
      %2783 = vrot.lane.b32.xlu0 %v2489, 91
      %v2784 = vpop.permute.xlu0 %2783
      %2785 = vrot.lane.b32.xlu0 %v2490, 91
      %v2786 = vpop.permute.xlu0 %2785
      %2787 = vrot.lane.b32.xlu0 %v2491, 91
      %v2788 = vpop.permute.xlu0 %2787
      %2789 = vrot.lane.b32.xlu0 %v2492, 91
      %v2790 = vpop.permute.xlu0 %2789
      %2791 = vrot.lane.b32.xlu0 %v2493, 91
      %v2792 = vpop.permute.xlu0 %2791
      %2793 = vrot.lane.b32.xlu0 %v2494, 91
      %v2794 = vpop.permute.xlu0 %2793
      %v2795 = vsel %vm515, %v2772, %v2774
      %v2796 = vsel %vm515, %v2774, %v2776
      %v2797 = vsel %vm515, %v2778, %v2780
      %v2798 = vsel %vm515, %v2780, %v2782
      %v2799 = vsel %vm515, %v2784, %v2786
      %v2800 = vsel %vm515, %v2786, %v2788
      %v2801 = vsel %vm515, %v2790, %v2792
      %v2802 = vsel %vm515, %v2792, %v2794
      %2815 = vrot.lane.b32.xlu0 %v2483, 90
      %v2816 = vpop.permute.xlu0 %2815
      %2817 = vrot.lane.b32.xlu0 %v2484, 90
      %v2818 = vpop.permute.xlu0 %2817
      %2819 = vrot.lane.b32.xlu0 %v2485, 90
      %v2820 = vpop.permute.xlu0 %2819
      %2821 = vrot.lane.b32.xlu0 %v2486, 90
      %v2822 = vpop.permute.xlu0 %2821
      %2823 = vrot.lane.b32.xlu0 %v2487, 90
      %v2824 = vpop.permute.xlu0 %2823
      %2825 = vrot.lane.b32.xlu0 %v2488, 90
      %v2826 = vpop.permute.xlu0 %2825
      %2827 = vrot.lane.b32.xlu0 %v2489, 90
      %v2828 = vpop.permute.xlu0 %2827
      %2829 = vrot.lane.b32.xlu0 %v2490, 90
      %v2830 = vpop.permute.xlu0 %2829
      %2831 = vrot.lane.b32.xlu0 %v2491, 90
      %v2832 = vpop.permute.xlu0 %2831
      %2833 = vrot.lane.b32.xlu0 %v2492, 90
      %v2834 = vpop.permute.xlu0 %2833
      %2835 = vrot.lane.b32.xlu0 %v2493, 90
      %v2836 = vpop.permute.xlu0 %2835
      %2837 = vrot.lane.b32.xlu0 %v2494, 90
      %v2838 = vpop.permute.xlu0 %2837
      %v2839 = vsel %vm538, %v2816, %v2818
      %v2840 = vsel %vm538, %v2818, %v2820
      %v2841 = vsel %vm538, %v2822, %v2824
      %v2842 = vsel %vm538, %v2824, %v2826
      %v2843 = vsel %vm538, %v2828, %v2830
      %v2844 = vsel %vm538, %v2830, %v2832
      %v2845 = vsel %vm538, %v2834, %v2836
      %v2846 = vsel %vm538, %v2836, %v2838
      %v2859 = vpack.c.bf16 %v2486, %v2483
      %v2860 = vpack.c.bf16 %v2487, %v2484
      %v2861 = vpack.c.bf16 %v2488, %v2485
      %v2862 = vpack.c.bf16 %v2492, %v2489
      %v2863 = vpack.c.bf16 %v2493, %v2490
      %v2864 = vpack.c.bf16 %v2494, %v2491
      %v2865 = vpack.c.bf16 %v2533, %v2531
      %v2866 = vpack.c.bf16 %v2534, %v2532
      %v2867 = vpack.c.bf16 %v2518, %v2512
      %v2868 = vpack.c.bf16 %v2537, %v2535
      %v2869 = vpack.c.bf16 %v2538, %v2536
      %v2870 = vpack.c.bf16 %v2530, %v2524
      %v2871 = vpack.c.bf16 %v2577, %v2575
      %v2872 = vpack.c.bf16 %v2578, %v2576
      %v2873 = vpack.c.bf16 %v2562, %v2556
      %v2874 = vpack.c.bf16 %v2581, %v2579
      %v2875 = vpack.c.bf16 %v2582, %v2580
      %v2876 = vpack.c.bf16 %v2574, %v2568
      %v2877 = vpack.c.bf16 %v2621, %v2619
      %v2878 = vpack.c.bf16 %v2622, %v2620
      %v2879 = vpack.c.bf16 %v2606, %v2600
      %v2880 = vpack.c.bf16 %v2625, %v2623
      %v2881 = vpack.c.bf16 %v2626, %v2624
      %v2882 = vpack.c.bf16 %v2618, %v2612
      %v2883 = vpack.c.bf16 %v2665, %v2663
      %v2884 = vpack.c.bf16 %v2666, %v2664
      %v2885 = vpack.c.bf16 %v2650, %v2644
      %v2886 = vpack.c.bf16 %v2669, %v2667
      %v2887 = vpack.c.bf16 %v2670, %v2668
      %v2888 = vpack.c.bf16 %v2662, %v2656
      %v2889 = vpack.c.bf16 %v2709, %v2707
      %v2890 = vpack.c.bf16 %v2710, %v2708
      %v2891 = vpack.c.bf16 %v2694, %v2688
      %v2892 = vpack.c.bf16 %v2713, %v2711
      %v2893 = vpack.c.bf16 %v2714, %v2712
      %v2894 = vpack.c.bf16 %v2706, %v2700
      %v2895 = vpack.c.bf16 %v2753, %v2751
      %v2896 = vpack.c.bf16 %v2754, %v2752
      %v2897 = vpack.c.bf16 %v2738, %v2732
      %v2898 = vpack.c.bf16 %v2757, %v2755
      %v2899 = vpack.c.bf16 %v2758, %v2756
      %v2900 = vpack.c.bf16 %v2750, %v2744
      %v2901 = vpack.c.bf16 %v2797, %v2795
      %v2902 = vpack.c.bf16 %v2798, %v2796
      %v2903 = vpack.c.bf16 %v2782, %v2776
      %v2904 = vpack.c.bf16 %v2801, %v2799
      %v2905 = vpack.c.bf16 %v2802, %v2800
      %v2906 = vpack.c.bf16 %v2794, %v2788
      %v2907 = vpack.c.bf16 %v2841, %v2839
      %v2908 = vpack.c.bf16 %v2842, %v2840
      %v2909 = vpack.c.bf16 %v2826, %v2820
      %v2910 = vpack.c.bf16 %v2845, %v2843
      %v2911 = vpack.c.bf16 %v2846, %v2844
      %v2912 = vpack.c.bf16 %v2838, %v2832
      %2914 = vset.pattern.permute.xlu0 0
      %2915 = vperm.xlu0 %2914, %v2481
      %v2916 = vpop.permute.xlu0 %2915
      %2919 = vset.pattern.permute.xlu0 0
      %2920 = vperm.xlu0 %2919, %v2482
      %v2921 = vpop.permute.xlu0 %2920
      %v2927 = vunpack.c.l.b16 %v2477
      %v2928 = vunpack.c.h.b16 %v2477
      %v2929 = vunpack.c.l.b16 %v2478
      %v2930 = vunpack.c.l.b16 %v2479
      %v2931 = vunpack.c.h.b16 %v2479
      %v2932 = vunpack.c.l.b16 %v2480
      %v2933 = vpack.c.b16 %v2930, %v2927
      %v2934 = vpack.c.b16 %v2931, %v2928
      %v2935 = vpack.c.b16 %v2932, %v2929
      %vm2938 = vcmask 261120
      %v2940 = vsel %vm2938, %v2935, 0
      %2942 = vmatpush.bf16.msra.mxu0 %v2880
      %2943 = vmatpush.bf16.msra.mxu0 %v2877
      %2944 = vmatpush.bf16.msra.mxu0 %v2874
      %2945 = vmatpush.bf16.msra.mxu0 %v2871
      %2946 = vmatpush.bf16.msra.mxu0 %v2868
      %2947 = vmatpush.bf16.msra.mxu0 %v2865
      %2948 = vmatpush.bf16.msra.mxu0 %v2862
      %2949 = vmatpush.bf16.msra.mxu0 %v2859
      %2950 = vmatmul.bf16.gmra.mxu0 %v2933
      %v2951 = vpop.f32.mrf.mxu0
      %v2952 = vadd.f32 %v2916, %v2951
      %v2953 = vpop.f32.mrf.mxu0
      %v2954 = vadd.f32 %v2921, %v2953
      %2955 = vdwg.mxu0
      %2956 = vmatpush.bf16.msra.mxu0 %v2904
      %2957 = vmatpush.bf16.msra.mxu0 %v2901
      %2958 = vmatpush.bf16.msra.mxu0 %v2898
      %2959 = vmatpush.bf16.msra.mxu0 %v2895
      %2960 = vmatpush.bf16.msra.mxu0 %v2892
      %2961 = vmatpush.bf16.msra.mxu0 %v2889
      %2962 = vmatpush.bf16.msra.mxu0 %v2886
      %2963 = vmatpush.bf16.msra.mxu0 %v2883
      %2964 = vmatmul.bf16.gmra.mxu0 %v2934
      %v2965 = vpop.f32.mrf.mxu0
      %v2966 = vadd.f32 %v2952, %v2965
      %v2967 = vpop.f32.mrf.mxu0
      %v2968 = vadd.f32 %v2954, %v2967
      %2969 = vdwg.mxu0
      %2970 = vmatpush.bf16.msra.mxu0 0
      %2971 = vmatpush.bf16.msra.mxu0 0
      %2972 = vmatpush.bf16.msra.mxu0 0
      %2973 = vmatpush.bf16.msra.mxu0 0
      %2974 = vmatpush.bf16.msra.mxu0 0
      %2975 = vmatpush.bf16.msra.mxu0 0
      %2976 = vmatpush.bf16.msra.mxu0 %v2910
      %2977 = vmatpush.bf16.msra.mxu0 %v2907
      %2978 = vmatmul.bf16.gmra.mxu0 %v2940
      %v2979 = vpop.f32.mrf.mxu0
      %v2980 = vadd.f32 %v2966, %v2979
      %v2981 = vpop.f32.mrf.mxu0
      %v2982 = vadd.f32 %v2968, %v2981
      %2983 = vdwg.mxu0
      %2984 = vmatpush.bf16.msra.mxu0 %v2881
      %2985 = vmatpush.bf16.msra.mxu0 %v2878
      %2986 = vmatpush.bf16.msra.mxu0 %v2875
      %2987 = vmatpush.bf16.msra.mxu0 %v2872
      %2988 = vmatpush.bf16.msra.mxu0 %v2869
      %2989 = vmatpush.bf16.msra.mxu0 %v2866
      %2990 = vmatpush.bf16.msra.mxu0 %v2863
      %2991 = vmatpush.bf16.msra.mxu0 %v2860
      %2992 = vmatmul.bf16.gmra.mxu0 %v2933
      %v2993 = vpop.f32.mrf.mxu0
      %v2994 = vadd.f32 %v2916, %v2993
      %v2995 = vpop.f32.mrf.mxu0
      %v2996 = vadd.f32 %v2921, %v2995
      %2997 = vdwg.mxu0
      %2998 = vmatpush.bf16.msra.mxu0 %v2905
      %2999 = vmatpush.bf16.msra.mxu0 %v2902
      %3000 = vmatpush.bf16.msra.mxu0 %v2899
      %3001 = vmatpush.bf16.msra.mxu0 %v2896
      %3002 = vmatpush.bf16.msra.mxu0 %v2893
      %3003 = vmatpush.bf16.msra.mxu0 %v2890
      %3004 = vmatpush.bf16.msra.mxu0 %v2887
      %3005 = vmatpush.bf16.msra.mxu0 %v2884
      %3006 = vmatmul.bf16.gmra.mxu0 %v2934
      %v3007 = vpop.f32.mrf.mxu0
      %v3008 = vadd.f32 %v2994, %v3007
      %v3009 = vpop.f32.mrf.mxu0
      %v3010 = vadd.f32 %v2996, %v3009
      %3011 = vdwg.mxu0
      %3012 = vmatpush.bf16.msra.mxu0 0
      %3013 = vmatpush.bf16.msra.mxu0 0
      %3014 = vmatpush.bf16.msra.mxu0 0
      %3015 = vmatpush.bf16.msra.mxu0 0
      %3016 = vmatpush.bf16.msra.mxu0 0
      %3017 = vmatpush.bf16.msra.mxu0 0
      %3018 = vmatpush.bf16.msra.mxu0 %v2911
      %3019 = vmatpush.bf16.msra.mxu0 %v2908
      %3020 = vmatmul.bf16.gmra.mxu0 %v2940
      %v3021 = vpop.f32.mrf.mxu0
      %v3022 = vadd.f32 %v3008, %v3021
      %v3023 = vpop.f32.mrf.mxu0
      %v3024 = vadd.f32 %v3010, %v3023
      %3025 = vdwg.mxu0
      %3026 = vmatpush.bf16.msra.mxu0 %v2882
      %3027 = vmatpush.bf16.msra.mxu0 %v2879
      %3028 = vmatpush.bf16.msra.mxu0 %v2876
      %3029 = vmatpush.bf16.msra.mxu0 %v2873
      %3030 = vmatpush.bf16.msra.mxu0 %v2870
      %3031 = vmatpush.bf16.msra.mxu0 %v2867
      %3032 = vmatpush.bf16.msra.mxu0 %v2864
      %3033 = vmatpush.bf16.msra.mxu0 %v2861
      %3034 = vmatmul.bf16.gmra.mxu0 %v2933
      %v3035 = vpop.f32.mrf.mxu0
      %v3036 = vadd.f32 %v2916, %v3035
      %v3037 = vpop.f32.mrf.mxu0
      %v3038 = vadd.f32 %v2921, %v3037
      %3039 = vdwg.mxu0
      %3040 = vmatpush.bf16.msra.mxu0 %v2906
      %3041 = vmatpush.bf16.msra.mxu0 %v2903
      %3042 = vmatpush.bf16.msra.mxu0 %v2900
      %3043 = vmatpush.bf16.msra.mxu0 %v2897
      %3044 = vmatpush.bf16.msra.mxu0 %v2894
      %3045 = vmatpush.bf16.msra.mxu0 %v2891
      %3046 = vmatpush.bf16.msra.mxu0 %v2888
      %3047 = vmatpush.bf16.msra.mxu0 %v2885
      %3048 = vmatmul.bf16.gmra.mxu0 %v2934
      %v3049 = vpop.f32.mrf.mxu0
      %v3050 = vadd.f32 %v3036, %v3049
      %v3051 = vpop.f32.mrf.mxu0
      %v3052 = vadd.f32 %v3038, %v3051
      %3053 = vdwg.mxu0
      %3054 = vmatpush.bf16.msra.mxu0 0
      %3055 = vmatpush.bf16.msra.mxu0 0
      %3056 = vmatpush.bf16.msra.mxu0 0
      %3057 = vmatpush.bf16.msra.mxu0 0
      %3058 = vmatpush.bf16.msra.mxu0 0
      %3059 = vmatpush.bf16.msra.mxu0 0
      %3060 = vmatpush.bf16.msra.mxu0 %v2912
      %3061 = vmatpush.bf16.msra.mxu0 %v2909
      %3062 = vmatmul.bf16.gmra.mxu0 %v2940
      %v3063 = vpop.f32.mrf.mxu0
      %v3064 = vadd.f32 %v3050, %v3063
      %v3065 = vpop.f32.mrf.mxu0
      %v3066 = vadd.f32 %v3052, %v3065
      %3067 = vdwg.mxu0
      %v3068 = vmul.f32 %v2980, %v670
      %v3069 = vmul.f32 %v3022, %v671
      %v3070 = vmul.f32 %v3064, %v672
      %v3071 = vmul.f32 %v2982, %v670
      %v3072 = vmul.f32 %v3024, %v671
      %v3073 = vmul.f32 %v3066, %v672
      %3074 = vst [vmem:[%s332] sm:$0xff] %v3068
      %3075 = vst [vmem:[%s332 + $0x8] sm:$0xff] %v3069
      %vm3076 = vcmask 244736
      %3077 = vst.msk [vmem:[%s332 + $0x10] sm:$0xff] %vm3076, %v3070
      %3078 = vst [vmem:[%s332 + $0x18] sm:$0xff] %v3071
      %3079 = vst [vmem:[%s332 + $0x20] sm:$0xff] %v3072
      %3080 = vst.msk [vmem:[%s332 + $0x28] sm:$0xff] %vm3076, %v3073
      %p3081 = scmp.lt.s32.totalorder %s20, 1
      %s3082 = scalar_select %p3081, %s20, 1
      %s3083 = smul.addr %s3082, 6
      %s3084 = smul.addr %s3083, 8
      %s3085 = scalar_lea.vmem %s9, %s3084
      // Predicated region
      $region57: #{deform_sppf_block_gating_unit.1} parent=55 // pred_check
        %p3086 = pneg %p232
      $region58: #{deform_sppf_block_gating_unit.1} parent=55 // pred_check_branch
        %3088 = sbr.rel (%p3086) target = $region60
      $region59: #{deform_sppf_block_gating_unit.1} parent=55 // pred_region
        _
      $region60: #{deform_sppf_block_gating_unit.1} parent=55 // pred_fallthru
        _
    $region56: #{deform_sppf_block_gating_unit.1} parent=5 // pred_fallthru
      _
    %p3089 = scmp.le.s32.totalorder 2, %s15
    // Predicated region
    $region61: #{deform_sppf_block_gating_unit.1} parent=5 // pred_check
      %p3090 = pneg %p3089
    $region62: #{deform_sppf_block_gating_unit.1} parent=5 // pred_check_branch
      %3092 = sbr.rel (%p3090) target = $region64
    $region63: #{deform_sppf_block_gating_unit.1} parent=5 // pred_region
      %s3093 = ssub.s32 %s15, 2
      // Predicated region
      $region65: #{deform_sppf_block_gating_unit.1} parent=63 // pred_check
        %p3094 = pneg %p238
      $region66: #{deform_sppf_block_gating_unit.1} parent=63 // pred_check_branch
        %3096 = sbr.rel (%p3094) target = $region68
      $region67: #{deform_sppf_block_gating_unit.1} parent=63 // pred_region
        %p3097 = scmp.lt.s32.totalorder %s21, 1
        %s3098 = scalar_select %p3097, %s21, 1
        %s3099 = smul.addr %s3098, 6
        %s3100 = smul.addr %s3099, 8
        %s3101 = scalar_lea.vmem %s9, %s3100
      $region68: #{deform_sppf_block_gating_unit.1} parent=63 // pred_fallthru
        _
    $region64: #{deform_sppf_block_gating_unit.1} parent=5 // pred_fallthru
      _
  $region6: #{deform_sppf_block_gating_unit.1} parent=0 // loop_footer
    %s19 = sadd.s32 1, %s15
  $region7: #{deform_sppf_block_gating_unit.1} parent=0 // loop_footer_branch
    %14 = sbr.rel target = $region3
  $region8: #{deform_sppf_block_gating_unit.1} parent=0 // loop_exit
    _

</llo_original>
